<compile_context>
chip_gen: v5e
topology: v5e:2x2
jax: 0.10.0
libtpu: 0.0.40
codegen_flags: <defaults>
</compile_context>

<pallas_src>
import numpy as np

import jax
import jax.numpy as jnp
from jax.experimental import pallas as pl
from jax.experimental.pallas import tpu as pltpu

# ----------------------------- configuration --------------------------------
HB = WB = 16          # base feature spatial size
C_BASE = 32           # base feature channels           (analog of 1024)
C_PLANES = 16         # bottleneck mid channels         (analog of 512)
C_RES = 64            # res5 output channels            (analog of 2048)
D_FC = 16             # fc / head_phi / head_g channels (analog of 512)
C_CTX = 32            # conv_f output channels          (analog of 1024)
OUT_SIZE = 7          # RoIAlign output size
SPATIAL_SCALE = 1.0 / 16.0
N_ROIS = 3


# ------------------------- host-side index bookkeeping ----------------------
def _conv3x3_taps(h_in, w_in, stride):
    """0/1 selection matrices T[k] ([P_out, P_in]) so that for tap k=di*3+dj,
    (T[k] @ x2d) picks the (pad=1) shifted input rows feeding each output
    position of a 3x3 conv.  Zero rows encode zero-padding."""
    h_out = (h_in + 2 - 3) // stride + 1
    w_out = (w_in + 2 - 3) // stride + 1
    t = np.zeros((9, h_out * w_out, h_in * w_in), np.float32)
    for di in range(3):
        for dj in range(3):
            k = di * 3 + dj
            for oi in range(h_out):
                for oj in range(w_out):
                    ii = oi * stride - 1 + di
                    jj = oj * stride - 1 + dj
                    if 0 <= ii < h_in and 0 <= jj < w_in:
                        t[k, oi * w_out + oj, ii * w_in + jj] = 1.0
    return jnp.asarray(t)


def _stride2_select(h_in, w_in):
    """Selection matrix for the stride-2 1x1 downsample path (x[:, ::2, ::2])."""
    h_out = (h_in + 1) // 2
    w_out = (w_in + 1) // 2
    t = np.zeros((h_out * w_out, h_in * w_in), np.float32)
    for oi in range(h_out):
        for oj in range(w_out):
            t[oi * w_out + oj, (2 * oi) * w_in + 2 * oj] = 1.0
    return jnp.asarray(t)


def roi_align_weights(rois, hb, wb, out_size, spatial_scale):
    """Bilinear sampling weights; sampling itself is a matmul inside the kernel.

    Returns W: [R, P*P, hb*wb] such that crop_r = W[r] @ feat2d.
    # TODO(synk): torchvision sampling_ratio=-1 adapts samples-per-bin to the
    # ROI size (dynamic shape); fixed to sampling_ratio=1 (bin-center sample).
    """
    p = out_size
    x1 = rois[:, 1] * spatial_scale
    y1 = rois[:, 2] * spatial_scale
    x2 = rois[:, 3] * spatial_scale
    y2 = rois[:, 4] * spatial_scale
    roi_w = jnp.maximum(x2 - x1, 1.0)
    roi_h = jnp.maximum(y2 - y1, 1.0)
    bins = jnp.arange(p, dtype=jnp.float32) + 0.5
    ys = y1[:, None] + bins[None, :] * (roi_h / p)[:, None]   # [R, P]
    xs = x1[:, None] + bins[None, :] * (roi_w / p)[:, None]   # [R, P]

    def axis_weights(coord, size):
        valid = ((coord >= -1.0) & (coord <= size)).astype(jnp.float32)
        c = jnp.maximum(coord, 0.0)
        low = jnp.minimum(jnp.floor(c).astype(jnp.int32), size - 1)
        high = jnp.minimum(low + 1, size - 1)
        c = jnp.where(low >= size - 1, low.astype(jnp.float32), c)
        l = c - low.astype(jnp.float32)
        return low, high, 1.0 - l, l, valid

    y_lo, y_hi, wy_lo, wy_hi, vy = axis_weights(ys, hb)
    x_lo, x_hi, wx_lo, wx_hi, vx = axis_weights(xs, wb)

    oh_y = (jax.nn.one_hot(y_lo, hb) * wy_lo[..., None] +
            jax.nn.one_hot(y_hi, hb) * wy_hi[..., None]) * vy[..., None]
    oh_x = (jax.nn.one_hot(x_lo, wb) * wx_lo[..., None] +
            jax.nn.one_hot(x_hi, wb) * wx_hi[..., None]) * vx[..., None]
    w = oh_y[:, :, None, :, None] * oh_x[:, None, :, None, :]  # [R,P,P,H,W]
    return w.reshape(rois.shape[0], p * p, hb * wb)


# ------------------------------ the fused kernel -----------------------------
def _ican_fused_kernel(
        # per-ROI input
        wmat_ref,                                     # [1, P*P, HW]
        # shared data
        feat_ref, taps1_ref, tds_ref, taps2_ref,
        # res5 params (BatchNorm folded into conv biases; synthetic weights)
        w1a_ref, w1b_ref, b1_ref, w2_ref, b2_ref, w3_ref, b3_ref, wd_ref, bd_ref,
        # fc
        fcw_ref, fcb_ref,
        # attention heads (+ identity blocks) and conv_f
        phiw_ref, phib_ref, idphiw_ref, idphib_ref,
        gw_ref, gb_ref, idgw_ref, idgb_ref,
        convfw_ref, convfb_ref,
        # outputs
        fc_inst_ref, attn_ref, stream_ref):
    f32 = jnp.float32

    def mm(a, b):
        return jnp.dot(a, b, preferred_element_type=f32)

    feat = feat_ref[...]                                 # [HW, C_BASE]

    # ---- ROI-Align: bilinear sampling as one matmul -------------------------
    crop = mm(wmat_ref[0], feat)                         # [P*P, C_BASE]

    # ---- res5: three bottleneck blocks (bias/ReLU/residual fused) -----------
    def bottleneck(x, w1, b1, w2_taps, b2, w3, b3, taps, identity):
        h = jnp.maximum(mm(x, w1) + b1, 0.0)             # 1x1 conv + relu
        acc = b2                                         # 3x3 conv = 9 tap matmuls
        for k in range(9):                               # static unroll (MXU)
            acc = acc + mm(mm(taps[k], h), w2_taps[k])
        h = jnp.maximum(acc, 0.0)
        h = mm(h, w3) + b3                               # 1x1 conv
        return jnp.maximum(h + identity, 0.0)            # residual add + relu

    taps1 = taps1_ref[...]                               # [9, P2*P2, P*P]
    taps2 = taps2_ref[...]                               # [9, P2*P2, P2*P2]

    # block 1 (stride 2) with 1x1-stride-2 downsample on the identity path
    ident = mm(mm(tds_ref[...], crop), wd_ref[...]) + bd_ref[...]
    x = bottleneck(crop, w1a_ref[...], b1_ref[0], w2_ref[0], b2_ref[0],
                   w3_ref[0], b3_ref[0], taps1, ident)
    # blocks 2, 3 (stride 1, identity = x)
    x = bottleneck(x, w1b_ref[0], b1_ref[1], w2_ref[1], b2_ref[1],
                   w3_ref[1], b3_ref[1], taps2, x)
    x = bottleneck(x, w1b_ref[1], b1_ref[2], w2_ref[2], b2_ref[2],
                   w3_ref[2], b3_ref[2], taps2, x)       # [P2*P2, C_RES]

    # ---- adaptive_avg_pool2d -> (1,1) as a ones-matmul, then fc (+ReLU) -----
    n_sp = x.shape[0]
    ones_row = jnp.ones((1, n_sp), f32)
    fci = mm(ones_row, x) * (1.0 / n_sp)                 # [1, C_RES]
    # TODO(synk): Dropout(p=0.2) after fc is identity (eval mode only).
    fc1 = jnp.maximum(mm(fci, fcw_ref[...]) + fcb_ref[...], 0.0)   # [1, D_FC]

    # ---- head_phi / head_g: 1x1 conv + identity block -----------------------
    phi = mm(feat, phiw_ref[...]) + phib_ref[...]
    phi = jnp.maximum(phi + mm(phi, idphiw_ref[...]) + idphib_ref[...], 0.0)
    g = mm(feat, gw_ref[...]) + gb_ref[...]
    g = jnp.maximum(g + mm(g, idgw_ref[...]) + idgb_ref[...], 0.0)
    g_proj = mm(g, convfw_ref[...])                      # head_g @ W_convf [HW, C_CTX]

    # ---- attention = softmax_HW( mean_C(head_phi * fc_1) ) -------------------
    scores = jax.lax.dot_general(
        fc1, phi, (((1,), (1,)), ((), ())),
        preferred_element_type=f32) * (1.0 / phi.shape[1])          # [1, HW]
    m = jnp.max(scores, axis=-1, keepdims=True)
    e = jnp.exp(scores - m)
    attn = e / jnp.sum(e, axis=-1, keepdims=True)

    # ---- fc_context = mean_HW(conv_f(attn * head_g))  (algebraically fused) --
    fcc = mm(attn, g_proj) * (1.0 / phi.shape[0]) + convfb_ref[...]  # [1, C_CTX]

    # ---- outputs -------------------------------------------------------------
    fc_inst_ref[...] = fci.reshape(1, 1, -1)
    attn_ref[...] = attn.reshape(1, 1, -1)
    stream_ref[...] = jnp.concatenate([fci, fcc], axis=-1).reshape(1, 1, -1)


# ------------------------------ parameters -----------------------------------
def init_params(key):
    ks = iter(jax.random.split(key, 64))
    nrm = lambda s: 0.1 * jax.random.normal(next(ks), s, jnp.float32)
    zr = lambda n: jnp.zeros((n,), jnp.float32)

    def block(cin, mid, cout, downsample):
        p = dict(w1=nrm((1, 1, cin, mid)), b1=zr(mid),
                 w2=nrm((3, 3, mid, mid)), b2=zr(mid),
                 w3=nrm((1, 1, mid, cout)), b3=zr(cout))
        if downsample:
            p['wd'] = nrm((1, 1, cin, cout))
            p['bd'] = zr(cout)
        return p

    return dict(
        res5=[block(C_BASE, C_PLANES, C_RES, True),
              block(C_RES, C_PLANES, C_RES, False),
              block(C_RES, C_PLANES, C_RES, False)],
        fc_w=nrm((C_RES, D_FC)), fc_b=zr(D_FC),
        phi_w=nrm((1, 1, C_BASE, D_FC)), phi_b=zr(D_FC),
        id_phi_w=nrm((D_FC, D_FC)), id_phi_b=zr(D_FC),
        g_w=nrm((1, 1, C_BASE, D_FC)), g_b=zr(D_FC),
        id_g_w=nrm((D_FC, D_FC)), id_g_b=zr(D_FC),
        convf_w=nrm((D_FC, C_CTX)), convf_b=zr(C_CTX),
    )


# ------------------------------ forward --------------------------------------
def ican_forward(base_feature, rois, params,
                 output_size=(OUT_SIZE, OUT_SIZE), spatial_scale=SPATIAL_SCALE):
    """base_feature: [1, H, W, C_BASE] (NHWC), rois: [R, 5]."""
    r = rois.shape[0]
    hb, wb, cb = base_feature.shape[1:]
    hw = hb * wb
    p = output_size[0]
    p2 = (p + 2 - 3) // 2 + 1          # res5 spatial size after stride-2 block

    # TODO(synk): cfg.RESNET.MAX_POOL branch assumed False (no 2x pool path).

    # --- plain-JAX / host glue: pure index bookkeeping -----------------------
    wmat = roi_align_weights(rois, hb, wb, p, spatial_scale)   # [R, P*P, HW]
    feat2d = base_feature[0].reshape(hw, cb)
    taps1 = _conv3x3_taps(p, p, 2)          # [9, p2*p2, p*p]
    tds = _stride2_select(p, p)             # [p2*p2, p*p]
    taps2 = _conv3x3_taps(p2, p2, 1)        # [9, p2*p2, p2*p2]

    r5 = params['res5']
    w1a = r5[0]['w1'].reshape(cb, C_PLANES)
    w1b = jnp.stack([r5[1]['w1'].reshape(C_RES, C_PLANES),
                     r5[2]['w1'].reshape(C_RES, C_PLANES)])
    b1 = jnp.stack([blk['b1'].reshape(1, C_PLANES) for blk in r5])
    w2 = jnp.stack([blk['w2'].reshape(9, C_PLANES, C_PLANES) for blk in r5])
    b2 = jnp.stack([blk['b2'].reshape(1, C_PLANES) for blk in r5])
    w3 = jnp.stack([blk['w3'].reshape(C_PLANES, C_RES) for blk in r5])
    b3 = jnp.stack([blk['b3'].reshape(1, C_RES) for blk in r5])
    wd = r5[0]['wd'].reshape(cb, C_RES)
    bd = r5[0]['bd'].reshape(1, C_RES)

    fcw = params['fc_w']
    fcb = params['fc_b'].reshape(1, D_FC)
    phiw = params['phi_w'].reshape(cb, D_FC)
    phib = params['phi_b'].reshape(1, D_FC)
    idphiw = params['id_phi_w']
    idphib = params['id_phi_b'].reshape(1, D_FC)
    gw = params['g_w'].reshape(cb, D_FC)
    gb = params['g_b'].reshape(1, D_FC)
    idgw = params['id_g_w']
    idgb = params['id_g_b'].reshape(1, D_FC)
    convfw = params['convf_w']
    convfb = params['convf_b'].reshape(1, C_CTX)

    shared_inputs = (feat2d, taps1, tds, taps2,
                     w1a, w1b, b1, w2, b2, w3, b3, wd, bd,
                     fcw, fcb,
                     phiw, phib, idphiw, idphib,
                     gw, gb, idgw, idgb,
                     convfw, convfb)

    def _shared_spec(a):
        # Full-array block + constant block index -> a single DMA, resident
        # in VMEM for the whole grid (no re-fetch per ROI).
        zeros = (0,) * a.ndim
        return pl.BlockSpec(a.shape, lambda i, _z=zeros: _z)

    in_specs = [pl.BlockSpec((1, p * p, hw), lambda i: (i, 0, 0))]
    in_specs += [_shared_spec(a) for a in shared_inputs]

    out_shape = (
        jax.ShapeDtypeStruct((r, 1, C_RES), jnp.float32),
        jax.ShapeDtypeStruct((r, 1, hw), jnp.float32),
        jax.ShapeDtypeStruct((r, 1, C_RES + C_CTX), jnp.float32),
    )
    out_specs = (
        pl.BlockSpec((1, 1, C_RES), lambda i: (i, 0, 0)),
        pl.BlockSpec((1, 1, hw), lambda i: (i, 0, 0)),
        pl.BlockSpec((1, 1, C_RES + C_CTX), lambda i: (i, 0, 0)),
    )

    fc_inst, attn, stream = pl.pallas_call(
        _ican_fused_kernel,
        grid=(r,),                     # ROIs are independent -> megacore split
        in_specs=in_specs,
        out_specs=out_specs,
        out_shape=out_shape,
        compiler_params=pltpu.CompilerParams(
            dimension_semantics=("parallel",)),
    )(wmat, *shared_inputs)

    fc_inst = fc_inst.reshape(r, C_RES)
    attention = attn.reshape(r, hb, wb, 1)      # NHWC of PyTorch [R,1,H,W]
    stream = stream.reshape(r, C_RES + C_CTX)
    return fc_inst, attention, stream


# ------------------------------ main ------------------------------------------
if __name__ == "__main__":
    key = jax.random.PRNGKey(0)
    k_feat, k_par = jax.random.split(key)

    base_feature = jax.random.normal(k_feat, (1, HB, WB, C_BASE), jnp.float32)
    # rois: [batch_idx, x1, y1, x2, y2] in image coords (image = 16/scale = 256)
    rois = jnp.array([[0.0, 16.0, 24.0, 180.0, 200.0],
                      [0.0, 0.0, 0.0, 255.0, 255.0],
                      [0.0, 100.0, 60.0, 140.0, 120.0]], jnp.float32)
    params = init_params(k_par)

    fwd = jax.jit(lambda bf, r: ican_forward(bf, r, params))
    fc_inst, attention, stream = fwd(base_feature, rois)
    jax.block_until_ready((fc_inst, attention, stream))

    assert fc_inst.shape == (N_ROIS, C_RES)
    assert attention.shape == (N_ROIS, HB, WB, 1)
    assert stream.shape == (N_ROIS, C_RES + C_CTX)
    assert bool(jnp.all(jnp.isfinite(fc_inst)))
    assert bool(jnp.all(jnp.isfinite(attention)))
    assert bool(jnp.all(jnp.isfinite(stream)))
    # attention rows are softmax-normalized over HW
    assert bool(jnp.allclose(attention.sum(axis=(1, 2, 3)), 1.0, atol=1e-4))
    print("KERNEL_OK")
</pallas_src>

<mosaic_0001>
module attributes {stable_mosaic.version = 11 : i64} {
  func.func @_ican_fused_kernel(%arg0: i32, %arg1: memref<1x49x256xf32, #tpu.memory_space<vmem>>, %arg2: memref<256x32xf32, #tpu.memory_space<vmem>>, %arg3: memref<9x16x49xf32, #tpu.memory_space<vmem>>, %arg4: memref<16x49xf32, #tpu.memory_space<vmem>>, %arg5: memref<9x16x16xf32, #tpu.memory_space<vmem>>, %arg6: memref<32x16xf32, #tpu.memory_space<vmem>>, %arg7: memref<2x64x16xf32, #tpu.memory_space<vmem>>, %arg8: memref<3x1x16xf32, #tpu.memory_space<vmem>>, %arg9: memref<3x9x16x16xf32, #tpu.memory_space<vmem>>, %arg10: memref<3x1x16xf32, #tpu.memory_space<vmem>>, %arg11: memref<3x16x64xf32, #tpu.memory_space<vmem>>, %arg12: memref<3x1x64xf32, #tpu.memory_space<vmem>>, %arg13: memref<32x64xf32, #tpu.memory_space<vmem>>, %arg14: memref<1x64xf32, #tpu.memory_space<vmem>>, %arg15: memref<64x16xf32, #tpu.memory_space<vmem>>, %arg16: memref<1x16xf32, #tpu.memory_space<vmem>>, %arg17: memref<32x16xf32, #tpu.memory_space<vmem>>, %arg18: memref<1x16xf32, #tpu.memory_space<vmem>>, %arg19: memref<16x16xf32, #tpu.memory_space<vmem>>, %arg20: memref<1x16xf32, #tpu.memory_space<vmem>>, %arg21: memref<32x16xf32, #tpu.memory_space<vmem>>, %arg22: memref<1x16xf32, #tpu.memory_space<vmem>>, %arg23: memref<16x16xf32, #tpu.memory_space<vmem>>, %arg24: memref<1x16xf32, #tpu.memory_space<vmem>>, %arg25: memref<16x32xf32, #tpu.memory_space<vmem>>, %arg26: memref<1x32xf32, #tpu.memory_space<vmem>>, %arg27: memref<1x1x64xf32, #tpu.memory_space<vmem>>, %arg28: memref<1x1x256xf32, #tpu.memory_space<vmem>>, %arg29: memref<1x1x96xf32, #tpu.memory_space<vmem>>) attributes {dimension_semantics = [#tpu.dimension_semantics<parallel>], iteration_bounds = array<i64: 3>, scalar_prefetch = 0 : i64, scratch_operands = 0 : i64, tpu.core_type = #tpu.core_type<tc>, window_params = [{transform_indices = @transform_0, window_bounds = array<i64: 1, 49, 256>}, {pipeline_mode = #tpu.pipeline_mode<synchronous>, transform_indices = @transform_1, window_bounds = array<i64: 256, 32>}, {pipeline_mode = #tpu.pipeline_mode<synchronous>, transform_indices = @transform_2, window_bounds = array<i64: 9, 16, 49>}, {pipeline_mode = #tpu.pipeline_mode<synchronous>, transform_indices = @transform_3, window_bounds = array<i64: 16, 49>}, {pipeline_mode = #tpu.pipeline_mode<synchronous>, transform_indices = @transform_4, window_bounds = array<i64: 9, 16, 16>}, {pipeline_mode = #tpu.pipeline_mode<synchronous>, transform_indices = @transform_5, window_bounds = array<i64: 32, 16>}, {pipeline_mode = #tpu.pipeline_mode<synchronous>, transform_indices = @transform_6, window_bounds = array<i64: 2, 64, 16>}, {pipeline_mode = #tpu.pipeline_mode<synchronous>, transform_indices = @transform_7, window_bounds = array<i64: 3, 1, 16>}, {pipeline_mode = #tpu.pipeline_mode<synchronous>, transform_indices = @transform_8, window_bounds = array<i64: 3, 9, 16, 16>}, {pipeline_mode = #tpu.pipeline_mode<synchronous>, transform_indices = @transform_9, window_bounds = array<i64: 3, 1, 16>}, {pipeline_mode = #tpu.pipeline_mode<synchronous>, transform_indices = @transform_10, window_bounds = array<i64: 3, 16, 64>}, {pipeline_mode = #tpu.pipeline_mode<synchronous>, transform_indices = @transform_11, window_bounds = array<i64: 3, 1, 64>}, {pipeline_mode = #tpu.pipeline_mode<synchronous>, transform_indices = @transform_12, window_bounds = array<i64: 32, 64>}, {pipeline_mode = #tpu.pipeline_mode<synchronous>, transform_indices = @transform_13, window_bounds = array<i64: 1, 64>}, {pipeline_mode = #tpu.pipeline_mode<synchronous>, transform_indices = @transform_14, window_bounds = array<i64: 64, 16>}, {pipeline_mode = #tpu.pipeline_mode<synchronous>, transform_indices = @transform_15, window_bounds = array<i64: 1, 16>}, {pipeline_mode = #tpu.pipeline_mode<synchronous>, transform_indices = @transform_16, window_bounds = array<i64: 32, 16>}, {pipeline_mode = #tpu.pipeline_mode<synchronous>, transform_indices = @transform_17, window_bounds = array<i64: 1, 16>}, {pipeline_mode = #tpu.pipeline_mode<synchronous>, transform_indices = @transform_18, window_bounds = array<i64: 16, 16>}, {pipeline_mode = #tpu.pipeline_mode<synchronous>, transform_indices = @transform_19, window_bounds = array<i64: 1, 16>}, {pipeline_mode = #tpu.pipeline_mode<synchronous>, transform_indices = @transform_20, window_bounds = array<i64: 32, 16>}, {pipeline_mode = #tpu.pipeline_mode<synchronous>, transform_indices = @transform_21, window_bounds = array<i64: 1, 16>}, {pipeline_mode = #tpu.pipeline_mode<synchronous>, transform_indices = @transform_22, window_bounds = array<i64: 16, 16>}, {pipeline_mode = #tpu.pipeline_mode<synchronous>, transform_indices = @transform_23, window_bounds = array<i64: 1, 16>}, {pipeline_mode = #tpu.pipeline_mode<synchronous>, transform_indices = @transform_24, window_bounds = array<i64: 16, 32>}, {pipeline_mode = #tpu.pipeline_mode<synchronous>, transform_indices = @transform_25, window_bounds = array<i64: 1, 32>}, {transform_indices = @transform_26, window_bounds = array<i64: 1, 1, 64>}, {transform_indices = @transform_27, window_bounds = array<i64: 1, 1, 256>}, {transform_indices = @transform_28, window_bounds = array<i64: 1, 1, 96>}]} {
    %c0 = arith.constant 0 : index
    %c0_0 = arith.constant 0 : index
    %0 = vector.load %arg2[%c0, %c0_0] : memref<256x32xf32, #tpu.memory_space<vmem>>, vector<256x32xf32>
    %c0_1 = arith.constant 0 : index
    %c0_2 = arith.constant 0 : index
    %c0_3 = arith.constant 0 : index
    %1 = vector.load %arg1[%c0_1, %c0_2, %c0_3] : memref<1x49x256xf32, #tpu.memory_space<vmem>>, vector<1x49x256xf32>
    %2 = vector.shape_cast %1 : vector<1x49x256xf32> to vector<49x256xf32>
    %cst = arith.constant dense<0.000000e+00> : vector<49x32xf32>
    %3 = tpu.matmul %2, %0, %cst {dimension_numbers = #tpu.dot_dimension_numbers<[1], [0], [0], [1], [0, 0, 1, 1], [], []>} : vector<49x256xf32>, vector<256x32xf32>, vector<49x32xf32> -> vector<49x32xf32>
    %c0_4 = arith.constant 0 : index
    %c0_5 = arith.constant 0 : index
    %c0_6 = arith.constant 0 : index
    %4 = vector.load %arg3[%c0_4, %c0_5, %c0_6] : memref<9x16x49xf32, #tpu.memory_space<vmem>>, vector<9x16x49xf32>
    %c0_7 = arith.constant 0 : index
    %c0_8 = arith.constant 0 : index
    %c0_9 = arith.constant 0 : index
    %5 = vector.load %arg5[%c0_7, %c0_8, %c0_9] : memref<9x16x16xf32, #tpu.memory_space<vmem>>, vector<9x16x16xf32>
    %c0_10 = arith.constant 0 : index
    %c0_11 = arith.constant 0 : index
    %6 = vector.load %arg4[%c0_10, %c0_11] : memref<16x49xf32, #tpu.memory_space<vmem>>, vector<16x49xf32>
    %cst_12 = arith.constant dense<0.000000e+00> : vector<16x32xf32>
    %7 = tpu.matmul %6, %3, %cst_12 {dimension_numbers = #tpu.dot_dimension_numbers<[1], [0], [0], [1], [0, 0, 1, 1], [], []>} : vector<16x49xf32>, vector<49x32xf32>, vector<16x32xf32> -> vector<16x32xf32>
    %c0_13 = arith.constant 0 : index
    %c0_14 = arith.constant 0 : index
    %8 = vector.load %arg13[%c0_13, %c0_14] : memref<32x64xf32, #tpu.memory_space<vmem>>, vector<32x64xf32>
    %cst_15 = arith.constant dense<0.000000e+00> : vector<16x64xf32>
    %9 = tpu.matmul %7, %8, %cst_15 {dimension_numbers = #tpu.dot_dimension_numbers<[1], [0], [0], [1], [0, 0, 1, 1], [], []>} : vector<16x32xf32>, vector<32x64xf32>, vector<16x64xf32> -> vector<16x64xf32>
    %c0_16 = arith.constant 0 : index
    %c0_17 = arith.constant 0 : index
    %10 = vector.load %arg14[%c0_16, %c0_17] : memref<1x64xf32, #tpu.memory_space<vmem>>, vector<1x64xf32>
    %11 = vector.broadcast %10 : vector<1x64xf32> to vector<16x64xf32>
    %12 = arith.addf %9, %11 : vector<16x64xf32>
    %c0_18 = arith.constant 0 : index
    %c0_19 = arith.constant 0 : index
    %13 = vector.load %arg6[%c0_18, %c0_19] : memref<32x16xf32, #tpu.memory_space<vmem>>, vector<32x16xf32>
    %c0_20 = arith.constant 0 : index
    %c0_21 = arith.constant 0 : index
    %c0_22 = arith.constant 0 : index
    %14 = vector.load %arg8[%c0_20, %c0_21, %c0_22] : memref<3x1x16xf32, #tpu.memory_space<vmem>>, vector<1x1x16xf32>
    %15 = vector.shape_cast %14 : vector<1x1x16xf32> to vector<1x16xf32>
    %c0_23 = arith.constant 0 : index
    %c0_24 = arith.constant 0 : index
    %c0_25 = arith.constant 0 : index
    %c0_26 = arith.constant 0 : index
    %16 = vector.load %arg9[%c0_23, %c0_24, %c0_25, %c0_26] : memref<3x9x16x16xf32, #tpu.memory_space<vmem>>, vector<1x9x16x16xf32>
    %17 = vector.shape_cast %16 : vector<1x9x16x16xf32> to vector<9x16x16xf32>
    %c0_27 = arith.constant 0 : index
    %c0_28 = arith.constant 0 : index
    %c0_29 = arith.constant 0 : index
    %18 = vector.load %arg10[%c0_27, %c0_28, %c0_29] : memref<3x1x16xf32, #tpu.memory_space<vmem>>, vector<1x1x16xf32>
    %19 = vector.shape_cast %18 : vector<1x1x16xf32> to vector<1x16xf32>
    %c0_30 = arith.constant 0 : index
    %c0_31 = arith.constant 0 : index
    %c0_32 = arith.constant 0 : index
    %20 = vector.load %arg11[%c0_30, %c0_31, %c0_32] : memref<3x16x64xf32, #tpu.memory_space<vmem>>, vector<1x16x64xf32>
    %21 = vector.shape_cast %20 : vector<1x16x64xf32> to vector<16x64xf32>
    %c0_33 = arith.constant 0 : index
    %c0_34 = arith.constant 0 : index
    %c0_35 = arith.constant 0 : index
    %22 = vector.load %arg12[%c0_33, %c0_34, %c0_35] : memref<3x1x64xf32, #tpu.memory_space<vmem>>, vector<1x1x64xf32>
    %23 = vector.shape_cast %22 : vector<1x1x64xf32> to vector<1x64xf32>
    %cst_36 = arith.constant dense<0.000000e+00> : vector<49x16xf32>
    %24 = tpu.matmul %3, %13, %cst_36 {dimension_numbers = #tpu.dot_dimension_numbers<[1], [0], [0], [1], [0, 0, 1, 1], [], []>} : vector<49x32xf32>, vector<32x16xf32>, vector<49x16xf32> -> vector<49x16xf32>
    %25 = vector.broadcast %15 : vector<1x16xf32> to vector<49x16xf32>
    %26 = arith.addf %24, %25 : vector<49x16xf32>
    %cst_37 = arith.constant 0.000000e+00 : f32
    %27 = vector.broadcast %cst_37 : f32 to vector<49x16xf32>
    %28 = arith.maximumf %26, %27 : vector<49x16xf32>
    %29 = vector.extract_strided_slice %4 {offsets = [0, 0, 0], sizes = [1, 16, 49], strides = [1, 1, 1]} : vector<9x16x49xf32> to vector<1x16x49xf32>
    %30 = vector.shape_cast %29 : vector<1x16x49xf32> to vector<16x49xf32>
    %cst_38 = arith.constant dense<0.000000e+00> : vector<16x16xf32>
    %31 = tpu.matmul %30, %28, %cst_38 {dimension_numbers = #tpu.dot_dimension_numbers<[1], [0], [0], [1], [0, 0, 1, 1], [], []>} : vector<16x49xf32>, vector<49x16xf32>, vector<16x16xf32> -> vector<16x16xf32>
    %32 = vector.extract_strided_slice %17 {offsets = [0, 0, 0], sizes = [1, 16, 16], strides = [1, 1, 1]} : vector<9x16x16xf32> to vector<1x16x16xf32>
    %33 = vector.shape_cast %32 : vector<1x16x16xf32> to vector<16x16xf32>
    %cst_39 = arith.constant dense<0.000000e+00> : vector<16x16xf32>
    %34 = tpu.matmul %31, %33, %cst_39 {dimension_numbers = #tpu.dot_dimension_numbers<[1], [0], [0], [1], [0, 0, 1, 1], [], []>} : vector<16x16xf32>, vector<16x16xf32>, vector<16x16xf32> -> vector<16x16xf32>
    %35 = vector.broadcast %19 : vector<1x16xf32> to vector<16x16xf32>
    %36 = arith.addf %35, %34 : vector<16x16xf32>
    %37 = vector.extract_strided_slice %4 {offsets = [1, 0, 0], sizes = [1, 16, 49], strides = [1, 1, 1]} : vector<9x16x49xf32> to vector<1x16x49xf32>
    %38 = vector.shape_cast %37 : vector<1x16x49xf32> to vector<16x49xf32>
    %cst_40 = arith.constant dense<0.000000e+00> : vector<16x16xf32>
    %39 = tpu.matmul %38, %28, %cst_40 {dimension_numbers = #tpu.dot_dimension_numbers<[1], [0], [0], [1], [0, 0, 1, 1], [], []>} : vector<16x49xf32>, vector<49x16xf32>, vector<16x16xf32> -> vector<16x16xf32>
    %40 = vector.extract_strided_slice %17 {offsets = [1, 0, 0], sizes = [1, 16, 16], strides = [1, 1, 1]} : vector<9x16x16xf32> to vector<1x16x16xf32>
    %41 = vector.shape_cast %40 : vector<1x16x16xf32> to vector<16x16xf32>
    %cst_41 = arith.constant dense<0.000000e+00> : vector<16x16xf32>
    %42 = tpu.matmul %39, %41, %cst_41 {dimension_numbers = #tpu.dot_dimension_numbers<[1], [0], [0], [1], [0, 0, 1, 1], [], []>} : vector<16x16xf32>, vector<16x16xf32>, vector<16x16xf32> -> vector<16x16xf32>
    %43 = arith.addf %36, %42 : vector<16x16xf32>
    %44 = vector.extract_strided_slice %4 {offsets = [2, 0, 0], sizes = [1, 16, 49], strides = [1, 1, 1]} : vector<9x16x49xf32> to vector<1x16x49xf32>
    %45 = vector.shape_cast %44 : vector<1x16x49xf32> to vector<16x49xf32>
    %cst_42 = arith.constant dense<0.000000e+00> : vector<16x16xf32>
    %46 = tpu.matmul %45, %28, %cst_42 {dimension_numbers = #tpu.dot_dimension_numbers<[1], [0], [0], [1], [0, 0, 1, 1], [], []>} : vector<16x49xf32>, vector<49x16xf32>, vector<16x16xf32> -> vector<16x16xf32>
    %47 = vector.extract_strided_slice %17 {offsets = [2, 0, 0], sizes = [1, 16, 16], strides = [1, 1, 1]} : vector<9x16x16xf32> to vector<1x16x16xf32>
    %48 = vector.shape_cast %47 : vector<1x16x16xf32> to vector<16x16xf32>
    %cst_43 = arith.constant dense<0.000000e+00> : vector<16x16xf32>
    %49 = tpu.matmul %46, %48, %cst_43 {dimension_numbers = #tpu.dot_dimension_numbers<[1], [0], [0], [1], [0, 0, 1, 1], [], []>} : vector<16x16xf32>, vector<16x16xf32>, vector<16x16xf32> -> vector<16x16xf32>
    %50 = arith.addf %43, %49 : vector<16x16xf32>
    %51 = vector.extract_strided_slice %4 {offsets = [3, 0, 0], sizes = [1, 16, 49], strides = [1, 1, 1]} : vector<9x16x49xf32> to vector<1x16x49xf32>
    %52 = vector.shape_cast %51 : vector<1x16x49xf32> to vector<16x49xf32>
    %cst_44 = arith.constant dense<0.000000e+00> : vector<16x16xf32>
    %53 = tpu.matmul %52, %28, %cst_44 {dimension_numbers = #tpu.dot_dimension_numbers<[1], [0], [0], [1], [0, 0, 1, 1], [], []>} : vector<16x49xf32>, vector<49x16xf32>, vector<16x16xf32> -> vector<16x16xf32>
    %54 = vector.extract_strided_slice %17 {offsets = [3, 0, 0], sizes = [1, 16, 16], strides = [1, 1, 1]} : vector<9x16x16xf32> to vector<1x16x16xf32>
    %55 = vector.shape_cast %54 : vector<1x16x16xf32> to vector<16x16xf32>
    %cst_45 = arith.constant dense<0.000000e+00> : vector<16x16xf32>
    %56 = tpu.matmul %53, %55, %cst_45 {dimension_numbers = #tpu.dot_dimension_numbers<[1], [0], [0], [1], [0, 0, 1, 1], [], []>} : vector<16x16xf32>, vector<16x16xf32>, vector<16x16xf32> -> vector<16x16xf32>
    %57 = arith.addf %50, %56 : vector<16x16xf32>
    %58 = vector.extract_strided_slice %4 {offsets = [4, 0, 0], sizes = [1, 16, 49], strides = [1, 1, 1]} : vector<9x16x49xf32> to vector<1x16x49xf32>
    %59 = vector.shape_cast %58 : vector<1x16x49xf32> to vector<16x49xf32>
    %cst_46 = arith.constant dense<0.000000e+00> : vector<16x16xf32>
    %60 = tpu.matmul %59, %28, %cst_46 {dimension_numbers = #tpu.dot_dimension_numbers<[1], [0], [0], [1], [0, 0, 1, 1], [], []>} : vector<16x49xf32>, vector<49x16xf32>, vector<16x16xf32> -> vector<16x16xf32>
    %61 = vector.extract_strided_slice %17 {offsets = [4, 0, 0], sizes = [1, 16, 16], strides = [1, 1, 1]} : vector<9x16x16xf32> to vector<1x16x16xf32>
    %62 = vector.shape_cast %61 : vector<1x16x16xf32> to vector<16x16xf32>
    %cst_47 = arith.constant dense<0.000000e+00> : vector<16x16xf32>
    %63 = tpu.matmul %60, %62, %cst_47 {dimension_numbers = #tpu.dot_dimension_numbers<[1], [0], [0], [1], [0, 0, 1, 1], [], []>} : vector<16x16xf32>, vector<16x16xf32>, vector<16x16xf32> -> vector<16x16xf32>
    %64 = arith.addf %57, %63 : vector<16x16xf32>
    %65 = vector.extract_strided_slice %4 {offsets = [5, 0, 0], sizes = [1, 16, 49], strides = [1, 1, 1]} : vector<9x16x49xf32> to vector<1x16x49xf32>
    %66 = vector.shape_cast %65 : vector<1x16x49xf32> to vector<16x49xf32>
    %cst_48 = arith.constant dense<0.000000e+00> : vector<16x16xf32>
    %67 = tpu.matmul %66, %28, %cst_48 {dimension_numbers = #tpu.dot_dimension_numbers<[1], [0], [0], [1], [0, 0, 1, 1], [], []>} : vector<16x49xf32>, vector<49x16xf32>, vector<16x16xf32> -> vector<16x16xf32>
    %68 = vector.extract_strided_slice %17 {offsets = [5, 0, 0], sizes = [1, 16, 16], strides = [1, 1, 1]} : vector<9x16x16xf32> to vector<1x16x16xf32>
    %69 = vector.shape_cast %68 : vector<1x16x16xf32> to vector<16x16xf32>
    %cst_49 = arith.constant dense<0.000000e+00> : vector<16x16xf32>
    %70 = tpu.matmul %67, %69, %cst_49 {dimension_numbers = #tpu.dot_dimension_numbers<[1], [0], [0], [1], [0, 0, 1, 1], [], []>} : vector<16x16xf32>, vector<16x16xf32>, vector<16x16xf32> -> vector<16x16xf32>
    %71 = arith.addf %64, %70 : vector<16x16xf32>
    %72 = vector.extract_strided_slice %4 {offsets = [6, 0, 0], sizes = [1, 16, 49], strides = [1, 1, 1]} : vector<9x16x49xf32> to vector<1x16x49xf32>
    %73 = vector.shape_cast %72 : vector<1x16x49xf32> to vector<16x49xf32>
    %cst_50 = arith.constant dense<0.000000e+00> : vector<16x16xf32>
    %74 = tpu.matmul %73, %28, %cst_50 {dimension_numbers = #tpu.dot_dimension_numbers<[1], [0], [0], [1], [0, 0, 1, 1], [], []>} : vector<16x49xf32>, vector<49x16xf32>, vector<16x16xf32> -> vector<16x16xf32>
    %75 = vector.extract_strided_slice %17 {offsets = [6, 0, 0], sizes = [1, 16, 16], strides = [1, 1, 1]} : vector<9x16x16xf32> to vector<1x16x16xf32>
    %76 = vector.shape_cast %75 : vector<1x16x16xf32> to vector<16x16xf32>
    %cst_51 = arith.constant dense<0.000000e+00> : vector<16x16xf32>
    %77 = tpu.matmul %74, %76, %cst_51 {dimension_numbers = #tpu.dot_dimension_numbers<[1], [0], [0], [1], [0, 0, 1, 1], [], []>} : vector<16x16xf32>, vector<16x16xf32>, vector<16x16xf32> -> vector<16x16xf32>
    %78 = arith.addf %71, %77 : vector<16x16xf32>
    %79 = vector.extract_strided_slice %4 {offsets = [7, 0, 0], sizes = [1, 16, 49], strides = [1, 1, 1]} : vector<9x16x49xf32> to vector<1x16x49xf32>
    %80 = vector.shape_cast %79 : vector<1x16x49xf32> to vector<16x49xf32>
    %cst_52 = arith.constant dense<0.000000e+00> : vector<16x16xf32>
    %81 = tpu.matmul %80, %28, %cst_52 {dimension_numbers = #tpu.dot_dimension_numbers<[1], [0], [0], [1], [0, 0, 1, 1], [], []>} : vector<16x49xf32>, vector<49x16xf32>, vector<16x16xf32> -> vector<16x16xf32>
    %82 = vector.extract_strided_slice %17 {offsets = [7, 0, 0], sizes = [1, 16, 16], strides = [1, 1, 1]} : vector<9x16x16xf32> to vector<1x16x16xf32>
    %83 = vector.shape_cast %82 : vector<1x16x16xf32> to vector<16x16xf32>
    %cst_53 = arith.constant dense<0.000000e+00> : vector<16x16xf32>
    %84 = tpu.matmul %81, %83, %cst_53 {dimension_numbers = #tpu.dot_dimension_numbers<[1], [0], [0], [1], [0, 0, 1, 1], [], []>} : vector<16x16xf32>, vector<16x16xf32>, vector<16x16xf32> -> vector<16x16xf32>
    %85 = arith.addf %78, %84 : vector<16x16xf32>
    %86 = vector.extract_strided_slice %4 {offsets = [8, 0, 0], sizes = [1, 16, 49], strides = [1, 1, 1]} : vector<9x16x49xf32> to vector<1x16x49xf32>
    %87 = vector.shape_cast %86 : vector<1x16x49xf32> to vector<16x49xf32>
    %cst_54 = arith.constant dense<0.000000e+00> : vector<16x16xf32>
    %88 = tpu.matmul %87, %28, %cst_54 {dimension_numbers = #tpu.dot_dimension_numbers<[1], [0], [0], [1], [0, 0, 1, 1], [], []>} : vector<16x49xf32>, vector<49x16xf32>, vector<16x16xf32> -> vector<16x16xf32>
    %89 = vector.extract_strided_slice %17 {offsets = [8, 0, 0], sizes = [1, 16, 16], strides = [1, 1, 1]} : vector<9x16x16xf32> to vector<1x16x16xf32>
    %90 = vector.shape_cast %89 : vector<1x16x16xf32> to vector<16x16xf32>
    %cst_55 = arith.constant dense<0.000000e+00> : vector<16x16xf32>
    %91 = tpu.matmul %88, %90, %cst_55 {dimension_numbers = #tpu.dot_dimension_numbers<[1], [0], [0], [1], [0, 0, 1, 1], [], []>} : vector<16x16xf32>, vector<16x16xf32>, vector<16x16xf32> -> vector<16x16xf32>
    %92 = arith.addf %85, %91 : vector<16x16xf32>
    %cst_56 = arith.constant 0.000000e+00 : f32
    %93 = vector.broadcast %cst_56 : f32 to vector<16x16xf32>
    %94 = arith.maximumf %92, %93 : vector<16x16xf32>
    %cst_57 = arith.constant dense<0.000000e+00> : vector<16x64xf32>
    %95 = tpu.matmul %94, %21, %cst_57 {dimension_numbers = #tpu.dot_dimension_numbers<[1], [0], [0], [1], [0, 0, 1, 1], [], []>} : vector<16x16xf32>, vector<16x64xf32>, vector<16x64xf32> -> vector<16x64xf32>
    %96 = vector.broadcast %23 : vector<1x64xf32> to vector<16x64xf32>
    %97 = arith.addf %95, %96 : vector<16x64xf32>
    %98 = arith.addf %97, %12 : vector<16x64xf32>
    %cst_58 = arith.constant 0.000000e+00 : f32
    %99 = vector.broadcast %cst_58 : f32 to vector<16x64xf32>
    %100 = arith.maximumf %98, %99 : vector<16x64xf32>
    %c0_59 = arith.constant 0 : index
    %c0_60 = arith.constant 0 : index
    %c0_61 = arith.constant 0 : index
    %101 = vector.load %arg7[%c0_59, %c0_60, %c0_61] : memref<2x64x16xf32, #tpu.memory_space<vmem>>, vector<1x64x16xf32>
    %102 = vector.shape_cast %101 : vector<1x64x16xf32> to vector<64x16xf32>
    %c1 = arith.constant 1 : index
    %c0_62 = arith.constant 0 : index
    %c0_63 = arith.constant 0 : index
    %103 = vector.load %arg8[%c1, %c0_62, %c0_63] : memref<3x1x16xf32, #tpu.memory_space<vmem>>, vector<1x1x16xf32>
    %104 = vector.shape_cast %103 : vector<1x1x16xf32> to vector<1x16xf32>
    %c1_64 = arith.constant 1 : index
    %c0_65 = arith.constant 0 : index
    %c0_66 = arith.constant 0 : index
    %c0_67 = arith.constant 0 : index
    %105 = vector.load %arg9[%c1_64, %c0_65, %c0_66, %c0_67] : memref<3x9x16x16xf32, #tpu.memory_space<vmem>>, vector<1x9x16x16xf32>
    %106 = vector.shape_cast %105 : vector<1x9x16x16xf32> to vector<9x16x16xf32>
    %c1_68 = arith.constant 1 : index
    %c0_69 = arith.constant 0 : index
    %c0_70 = arith.constant 0 : index
    %107 = vector.load %arg10[%c1_68, %c0_69, %c0_70] : memref<3x1x16xf32, #tpu.memory_space<vmem>>, vector<1x1x16xf32>
    %108 = vector.shape_cast %107 : vector<1x1x16xf32> to vector<1x16xf32>
    %c1_71 = arith.constant 1 : index
    %c0_72 = arith.constant 0 : index
    %c0_73 = arith.constant 0 : index
    %109 = vector.load %arg11[%c1_71, %c0_72, %c0_73] : memref<3x16x64xf32, #tpu.memory_space<vmem>>, vector<1x16x64xf32>
    %110 = vector.shape_cast %109 : vector<1x16x64xf32> to vector<16x64xf32>
    %c1_74 = arith.constant 1 : index
    %c0_75 = arith.constant 0 : index
    %c0_76 = arith.constant 0 : index
    %111 = vector.load %arg12[%c1_74, %c0_75, %c0_76] : memref<3x1x64xf32, #tpu.memory_space<vmem>>, vector<1x1x64xf32>
    %112 = vector.shape_cast %111 : vector<1x1x64xf32> to vector<1x64xf32>
    %cst_77 = arith.constant dense<0.000000e+00> : vector<16x16xf32>
    %113 = tpu.matmul %100, %102, %cst_77 {dimension_numbers = #tpu.dot_dimension_numbers<[1], [0], [0], [1], [0, 0, 1, 1], [], []>} : vector<16x64xf32>, vector<64x16xf32>, vector<16x16xf32> -> vector<16x16xf32>
    %114 = vector.broadcast %104 : vector<1x16xf32> to vector<16x16xf32>
    %115 = arith.addf %113, %114 : vector<16x16xf32>
    %cst_78 = arith.constant 0.000000e+00 : f32
    %116 = vector.broadcast %cst_78 : f32 to vector<16x16xf32>
    %117 = arith.maximumf %115, %116 : vector<16x16xf32>
    %118 = vector.extract_strided_slice %5 {offsets = [0, 0, 0], sizes = [1, 16, 16], strides = [1, 1, 1]} : vector<9x16x16xf32> to vector<1x16x16xf32>
    %119 = vector.shape_cast %118 : vector<1x16x16xf32> to vector<16x16xf32>
    %cst_79 = arith.constant dense<0.000000e+00> : vector<16x16xf32>
    %120 = tpu.matmul %119, %117, %cst_79 {dimension_numbers = #tpu.dot_dimension_numbers<[1], [0], [0], [1], [0, 0, 1, 1], [], []>} : vector<16x16xf32>, vector<16x16xf32>, vector<16x16xf32> -> vector<16x16xf32>
    %121 = vector.extract_strided_slice %106 {offsets = [0, 0, 0], sizes = [1, 16, 16], strides = [1, 1, 1]} : vector<9x16x16xf32> to vector<1x16x16xf32>
    %122 = vector.shape_cast %121 : vector<1x16x16xf32> to vector<16x16xf32>
    %cst_80 = arith.constant dense<0.000000e+00> : vector<16x16xf32>
    %123 = tpu.matmul %120, %122, %cst_80 {dimension_numbers = #tpu.dot_dimension_numbers<[1], [0], [0], [1], [0, 0, 1, 1], [], []>} : vector<16x16xf32>, vector<16x16xf32>, vector<16x16xf32> -> vector<16x16xf32>
    %124 = vector.broadcast %108 : vector<1x16xf32> to vector<16x16xf32>
    %125 = arith.addf %124, %123 : vector<16x16xf32>
    %126 = vector.extract_strided_slice %5 {offsets = [1, 0, 0], sizes = [1, 16, 16], strides = [1, 1, 1]} : vector<9x16x16xf32> to vector<1x16x16xf32>
    %127 = vector.shape_cast %126 : vector<1x16x16xf32> to vector<16x16xf32>
    %cst_81 = arith.constant dense<0.000000e+00> : vector<16x16xf32>
    %128 = tpu.matmul %127, %117, %cst_81 {dimension_numbers = #tpu.dot_dimension_numbers<[1], [0], [0], [1], [0, 0, 1, 1], [], []>} : vector<16x16xf32>, vector<16x16xf32>, vector<16x16xf32> -> vector<16x16xf32>
    %129 = vector.extract_strided_slice %106 {offsets = [1, 0, 0], sizes = [1, 16, 16], strides = [1, 1, 1]} : vector<9x16x16xf32> to vector<1x16x16xf32>
    %130 = vector.shape_cast %129 : vector<1x16x16xf32> to vector<16x16xf32>
    %cst_82 = arith.constant dense<0.000000e+00> : vector<16x16xf32>
    %131 = tpu.matmul %128, %130, %cst_82 {dimension_numbers = #tpu.dot_dimension_numbers<[1], [0], [0], [1], [0, 0, 1, 1], [], []>} : vector<16x16xf32>, vector<16x16xf32>, vector<16x16xf32> -> vector<16x16xf32>
    %132 = arith.addf %125, %131 : vector<16x16xf32>
    %133 = vector.extract_strided_slice %5 {offsets = [2, 0, 0], sizes = [1, 16, 16], strides = [1, 1, 1]} : vector<9x16x16xf32> to vector<1x16x16xf32>
    %134 = vector.shape_cast %133 : vector<1x16x16xf32> to vector<16x16xf32>
    %cst_83 = arith.constant dense<0.000000e+00> : vector<16x16xf32>
    %135 = tpu.matmul %134, %117, %cst_83 {dimension_numbers = #tpu.dot_dimension_numbers<[1], [0], [0], [1], [0, 0, 1, 1], [], []>} : vector<16x16xf32>, vector<16x16xf32>, vector<16x16xf32> -> vector<16x16xf32>
    %136 = vector.extract_strided_slice %106 {offsets = [2, 0, 0], sizes = [1, 16, 16], strides = [1, 1, 1]} : vector<9x16x16xf32> to vector<1x16x16xf32>
    %137 = vector.shape_cast %136 : vector<1x16x16xf32> to vector<16x16xf32>
    %cst_84 = arith.constant dense<0.000000e+00> : vector<16x16xf32>
    %138 = tpu.matmul %135, %137, %cst_84 {dimension_numbers = #tpu.dot_dimension_numbers<[1], [0], [0], [1], [0, 0, 1, 1], [], []>} : vector<16x16xf32>, vector<16x16xf32>, vector<16x16xf32> -> vector<16x16xf32>
    %139 = arith.addf %132, %138 : vector<16x16xf32>
    %140 = vector.extract_strided_slice %5 {offsets = [3, 0, 0], sizes = [1, 16, 16], strides = [1, 1, 1]} : vector<9x16x16xf32> to vector<1x16x16xf32>
    %141 = vector.shape_cast %140 : vector<1x16x16xf32> to vector<16x16xf32>
    %cst_85 = arith.constant dense<0.000000e+00> : vector<16x16xf32>
    %142 = tpu.matmul %141, %117, %cst_85 {dimension_numbers = #tpu.dot_dimension_numbers<[1], [0], [0], [1], [0, 0, 1, 1], [], []>} : vector<16x16xf32>, vector<16x16xf32>, vector<16x16xf32> -> vector<16x16xf32>
    %143 = vector.extract_strided_slice %106 {offsets = [3, 0, 0], sizes = [1, 16, 16], strides = [1, 1, 1]} : vector<9x16x16xf32> to vector<1x16x16xf32>
    %144 = vector.shape_cast %143 : vector<1x16x16xf32> to vector<16x16xf32>
    %cst_86 = arith.constant dense<0.000000e+00> : vector<16x16xf32>
    %145 = tpu.matmul %142, %144, %cst_86 {dimension_numbers = #tpu.dot_dimension_numbers<[1], [0], [0], [1], [0, 0, 1, 1], [], []>} : vector<16x16xf32>, vector<16x16xf32>, vector<16x16xf32> -> vector<16x16xf32>
    %146 = arith.addf %139, %145 : vector<16x16xf32>
    %147 = vector.extract_strided_slice %5 {offsets = [4, 0, 0], sizes = [1, 16, 16], strides = [1, 1, 1]} : vector<9x16x16xf32> to vector<1x16x16xf32>
    %148 = vector.shape_cast %147 : vector<1x16x16xf32> to vector<16x16xf32>
    %cst_87 = arith.constant dense<0.000000e+00> : vector<16x16xf32>
    %149 = tpu.matmul %148, %117, %cst_87 {dimension_numbers = #tpu.dot_dimension_numbers<[1], [0], [0], [1], [0, 0, 1, 1], [], []>} : vector<16x16xf32>, vector<16x16xf32>, vector<16x16xf32> -> vector<16x16xf32>
    %150 = vector.extract_strided_slice %106 {offsets = [4, 0, 0], sizes = [1, 16, 16], strides = [1, 1, 1]} : vector<9x16x16xf32> to vector<1x16x16xf32>
    %151 = vector.shape_cast %150 : vector<1x16x16xf32> to vector<16x16xf32>
    %cst_88 = arith.constant dense<0.000000e+00> : vector<16x16xf32>
    %152 = tpu.matmul %149, %151, %cst_88 {dimension_numbers = #tpu.dot_dimension_numbers<[1], [0], [0], [1], [0, 0, 1, 1], [], []>} : vector<16x16xf32>, vector<16x16xf32>, vector<16x16xf32> -> vector<16x16xf32>
    %153 = arith.addf %146, %152 : vector<16x16xf32>
    %154 = vector.extract_strided_slice %5 {offsets = [5, 0, 0], sizes = [1, 16, 16], strides = [1, 1, 1]} : vector<9x16x16xf32> to vector<1x16x16xf32>
    %155 = vector.shape_cast %154 : vector<1x16x16xf32> to vector<16x16xf32>
    %cst_89 = arith.constant dense<0.000000e+00> : vector<16x16xf32>
    %156 = tpu.matmul %155, %117, %cst_89 {dimension_numbers = #tpu.dot_dimension_numbers<[1], [0], [0], [1], [0, 0, 1, 1], [], []>} : vector<16x16xf32>, vector<16x16xf32>, vector<16x16xf32> -> vector<16x16xf32>
    %157 = vector.extract_strided_slice %106 {offsets = [5, 0, 0], sizes = [1, 16, 16], strides = [1, 1, 1]} : vector<9x16x16xf32> to vector<1x16x16xf32>
    %158 = vector.shape_cast %157 : vector<1x16x16xf32> to vector<16x16xf32>
    %cst_90 = arith.constant dense<0.000000e+00> : vector<16x16xf32>
    %159 = tpu.matmul %156, %158, %cst_90 {dimension_numbers = #tpu.dot_dimension_numbers<[1], [0], [0], [1], [0, 0, 1, 1], [], []>} : vector<16x16xf32>, vector<16x16xf32>, vector<16x16xf32> -> vector<16x16xf32>
    %160 = arith.addf %153, %159 : vector<16x16xf32>
    %161 = vector.extract_strided_slice %5 {offsets = [6, 0, 0], sizes = [1, 16, 16], strides = [1, 1, 1]} : vector<9x16x16xf32> to vector<1x16x16xf32>
    %162 = vector.shape_cast %161 : vector<1x16x16xf32> to vector<16x16xf32>
    %cst_91 = arith.constant dense<0.000000e+00> : vector<16x16xf32>
    %163 = tpu.matmul %162, %117, %cst_91 {dimension_numbers = #tpu.dot_dimension_numbers<[1], [0], [0], [1], [0, 0, 1, 1], [], []>} : vector<16x16xf32>, vector<16x16xf32>, vector<16x16xf32> -> vector<16x16xf32>
    %164 = vector.extract_strided_slice %106 {offsets = [6, 0, 0], sizes = [1, 16, 16], strides = [1, 1, 1]} : vector<9x16x16xf32> to vector<1x16x16xf32>
    %165 = vector.shape_cast %164 : vector<1x16x16xf32> to vector<16x16xf32>
    %cst_92 = arith.constant dense<0.000000e+00> : vector<16x16xf32>
    %166 = tpu.matmul %163, %165, %cst_92 {dimension_numbers = #tpu.dot_dimension_numbers<[1], [0], [0], [1], [0, 0, 1, 1], [], []>} : vector<16x16xf32>, vector<16x16xf32>, vector<16x16xf32> -> vector<16x16xf32>
    %167 = arith.addf %160, %166 : vector<16x16xf32>
    %168 = vector.extract_strided_slice %5 {offsets = [7, 0, 0], sizes = [1, 16, 16], strides = [1, 1, 1]} : vector<9x16x16xf32> to vector<1x16x16xf32>
    %169 = vector.shape_cast %168 : vector<1x16x16xf32> to vector<16x16xf32>
    %cst_93 = arith.constant dense<0.000000e+00> : vector<16x16xf32>
    %170 = tpu.matmul %169, %117, %cst_93 {dimension_numbers = #tpu.dot_dimension_numbers<[1], [0], [0], [1], [0, 0, 1, 1], [], []>} : vector<16x16xf32>, vector<16x16xf32>, vector<16x16xf32> -> vector<16x16xf32>
    %171 = vector.extract_strided_slice %106 {offsets = [7, 0, 0], sizes = [1, 16, 16], strides = [1, 1, 1]} : vector<9x16x16xf32> to vector<1x16x16xf32>
    %172 = vector.shape_cast %171 : vector<1x16x16xf32> to vector<16x16xf32>
    %cst_94 = arith.constant dense<0.000000e+00> : vector<16x16xf32>
    %173 = tpu.matmul %170, %172, %cst_94 {dimension_numbers = #tpu.dot_dimension_numbers<[1], [0], [0], [1], [0, 0, 1, 1], [], []>} : vector<16x16xf32>, vector<16x16xf32>, vector<16x16xf32> -> vector<16x16xf32>
    %174 = arith.addf %167, %173 : vector<16x16xf32>
    %175 = vector.extract_strided_slice %5 {offsets = [8, 0, 0], sizes = [1, 16, 16], strides = [1, 1, 1]} : vector<9x16x16xf32> to vector<1x16x16xf32>
    %176 = vector.shape_cast %175 : vector<1x16x16xf32> to vector<16x16xf32>
    %cst_95 = arith.constant dense<0.000000e+00> : vector<16x16xf32>
    %177 = tpu.matmul %176, %117, %cst_95 {dimension_numbers = #tpu.dot_dimension_numbers<[1], [0], [0], [1], [0, 0, 1, 1], [], []>} : vector<16x16xf32>, vector<16x16xf32>, vector<16x16xf32> -> vector<16x16xf32>
    %178 = vector.extract_strided_slice %106 {offsets = [8, 0, 0], sizes = [1, 16, 16], strides = [1, 1, 1]} : vector<9x16x16xf32> to vector<1x16x16xf32>
    %179 = vector.shape_cast %178 : vector<1x16x16xf32> to vector<16x16xf32>
    %cst_96 = arith.constant dense<0.000000e+00> : vector<16x16xf32>
    %180 = tpu.matmul %177, %179, %cst_96 {dimension_numbers = #tpu.dot_dimension_numbers<[1], [0], [0], [1], [0, 0, 1, 1], [], []>} : vector<16x16xf32>, vector<16x16xf32>, vector<16x16xf32> -> vector<16x16xf32>
    %181 = arith.addf %174, %180 : vector<16x16xf32>
    %cst_97 = arith.constant 0.000000e+00 : f32
    %182 = vector.broadcast %cst_97 : f32 to vector<16x16xf32>
    %183 = arith.maximumf %181, %182 : vector<16x16xf32>
    %cst_98 = arith.constant dense<0.000000e+00> : vector<16x64xf32>
    %184 = tpu.matmul %183, %110, %cst_98 {dimension_numbers = #tpu.dot_dimension_numbers<[1], [0], [0], [1], [0, 0, 1, 1], [], []>} : vector<16x16xf32>, vector<16x64xf32>, vector<16x64xf32> -> vector<16x64xf32>
    %185 = vector.broadcast %112 : vector<1x64xf32> to vector<16x64xf32>
    %186 = arith.addf %184, %185 : vector<16x64xf32>
    %187 = arith.addf %186, %100 : vector<16x64xf32>
    %cst_99 = arith.constant 0.000000e+00 : f32
    %188 = vector.broadcast %cst_99 : f32 to vector<16x64xf32>
    %189 = arith.maximumf %187, %188 : vector<16x64xf32>
    %c1_100 = arith.constant 1 : index
    %c0_101 = arith.constant 0 : index
    %c0_102 = arith.constant 0 : index
    %190 = vector.load %arg7[%c1_100, %c0_101, %c0_102] : memref<2x64x16xf32, #tpu.memory_space<vmem>>, vector<1x64x16xf32>
    %191 = vector.shape_cast %190 : vector<1x64x16xf32> to vector<64x16xf32>
    %c2 = arith.constant 2 : index
    %c0_103 = arith.constant 0 : index
    %c0_104 = arith.constant 0 : index
    %192 = vector.load %arg8[%c2, %c0_103, %c0_104] : memref<3x1x16xf32, #tpu.memory_space<vmem>>, vector<1x1x16xf32>
    %193 = vector.shape_cast %192 : vector<1x1x16xf32> to vector<1x16xf32>
    %c2_105 = arith.constant 2 : index
    %c0_106 = arith.constant 0 : index
    %c0_107 = arith.constant 0 : index
    %c0_108 = arith.constant 0 : index
    %194 = vector.load %arg9[%c2_105, %c0_106, %c0_107, %c0_108] : memref<3x9x16x16xf32, #tpu.memory_space<vmem>>, vector<1x9x16x16xf32>
    %195 = vector.shape_cast %194 : vector<1x9x16x16xf32> to vector<9x16x16xf32>
    %c2_109 = arith.constant 2 : index
    %c0_110 = arith.constant 0 : index
    %c0_111 = arith.constant 0 : index
    %196 = vector.load %arg10[%c2_109, %c0_110, %c0_111] : memref<3x1x16xf32, #tpu.memory_space<vmem>>, vector<1x1x16xf32>
    %197 = vector.shape_cast %196 : vector<1x1x16xf32> to vector<1x16xf32>
    %c2_112 = arith.constant 2 : index
    %c0_113 = arith.constant 0 : index
    %c0_114 = arith.constant 0 : index
    %198 = vector.load %arg11[%c2_112, %c0_113, %c0_114] : memref<3x16x64xf32, #tpu.memory_space<vmem>>, vector<1x16x64xf32>
    %199 = vector.shape_cast %198 : vector<1x16x64xf32> to vector<16x64xf32>
    %c2_115 = arith.constant 2 : index
    %c0_116 = arith.constant 0 : index
    %c0_117 = arith.constant 0 : index
    %200 = vector.load %arg12[%c2_115, %c0_116, %c0_117] : memref<3x1x64xf32, #tpu.memory_space<vmem>>, vector<1x1x64xf32>
    %201 = vector.shape_cast %200 : vector<1x1x64xf32> to vector<1x64xf32>
    %cst_118 = arith.constant dense<0.000000e+00> : vector<16x16xf32>
    %202 = tpu.matmul %189, %191, %cst_118 {dimension_numbers = #tpu.dot_dimension_numbers<[1], [0], [0], [1], [0, 0, 1, 1], [], []>} : vector<16x64xf32>, vector<64x16xf32>, vector<16x16xf32> -> vector<16x16xf32>
    %203 = vector.broadcast %193 : vector<1x16xf32> to vector<16x16xf32>
    %204 = arith.addf %202, %203 : vector<16x16xf32>
    %cst_119 = arith.constant 0.000000e+00 : f32
    %205 = vector.broadcast %cst_119 : f32 to vector<16x16xf32>
    %206 = arith.maximumf %204, %205 : vector<16x16xf32>
    %207 = vector.extract_strided_slice %5 {offsets = [0, 0, 0], sizes = [1, 16, 16], strides = [1, 1, 1]} : vector<9x16x16xf32> to vector<1x16x16xf32>
    %208 = vector.shape_cast %207 : vector<1x16x16xf32> to vector<16x16xf32>
    %cst_120 = arith.constant dense<0.000000e+00> : vector<16x16xf32>
    %209 = tpu.matmul %208, %206, %cst_120 {dimension_numbers = #tpu.dot_dimension_numbers<[1], [0], [0], [1], [0, 0, 1, 1], [], []>} : vector<16x16xf32>, vector<16x16xf32>, vector<16x16xf32> -> vector<16x16xf32>
    %210 = vector.extract_strided_slice %195 {offsets = [0, 0, 0], sizes = [1, 16, 16], strides = [1, 1, 1]} : vector<9x16x16xf32> to vector<1x16x16xf32>
    %211 = vector.shape_cast %210 : vector<1x16x16xf32> to vector<16x16xf32>
    %cst_121 = arith.constant dense<0.000000e+00> : vector<16x16xf32>
    %212 = tpu.matmul %209, %211, %cst_121 {dimension_numbers = #tpu.dot_dimension_numbers<[1], [0], [0], [1], [0, 0, 1, 1], [], []>} : vector<16x16xf32>, vector<16x16xf32>, vector<16x16xf32> -> vector<16x16xf32>
    %213 = vector.broadcast %197 : vector<1x16xf32> to vector<16x16xf32>
    %214 = arith.addf %213, %212 : vector<16x16xf32>
    %215 = vector.extract_strided_slice %5 {offsets = [1, 0, 0], sizes = [1, 16, 16], strides = [1, 1, 1]} : vector<9x16x16xf32> to vector<1x16x16xf32>
    %216 = vector.shape_cast %215 : vector<1x16x16xf32> to vector<16x16xf32>
    %cst_122 = arith.constant dense<0.000000e+00> : vector<16x16xf32>
    %217 = tpu.matmul %216, %206, %cst_122 {dimension_numbers = #tpu.dot_dimension_numbers<[1], [0], [0], [1], [0, 0, 1, 1], [], []>} : vector<16x16xf32>, vector<16x16xf32>, vector<16x16xf32> -> vector<16x16xf32>
    %218 = vector.extract_strided_slice %195 {offsets = [1, 0, 0], sizes = [1, 16, 16], strides = [1, 1, 1]} : vector<9x16x16xf32> to vector<1x16x16xf32>
    %219 = vector.shape_cast %218 : vector<1x16x16xf32> to vector<16x16xf32>
    %cst_123 = arith.constant dense<0.000000e+00> : vector<16x16xf32>
    %220 = tpu.matmul %217, %219, %cst_123 {dimension_numbers = #tpu.dot_dimension_numbers<[1], [0], [0], [1], [0, 0, 1, 1], [], []>} : vector<16x16xf32>, vector<16x16xf32>, vector<16x16xf32> -> vector<16x16xf32>
    %221 = arith.addf %214, %220 : vector<16x16xf32>
    %222 = vector.extract_strided_slice %5 {offsets = [2, 0, 0], sizes = [1, 16, 16], strides = [1, 1, 1]} : vector<9x16x16xf32> to vector<1x16x16xf32>
    %223 = vector.shape_cast %222 : vector<1x16x16xf32> to vector<16x16xf32>
    %cst_124 = arith.constant dense<0.000000e+00> : vector<16x16xf32>
    %224 = tpu.matmul %223, %206, %cst_124 {dimension_numbers = #tpu.dot_dimension_numbers<[1], [0], [0], [1], [0, 0, 1, 1], [], []>} : vector<16x16xf32>, vector<16x16xf32>, vector<16x16xf32> -> vector<16x16xf32>
    %225 = vector.extract_strided_slice %195 {offsets = [2, 0, 0], sizes = [1, 16, 16], strides = [1, 1, 1]} : vector<9x16x16xf32> to vector<1x16x16xf32>
    %226 = vector.shape_cast %225 : vector<1x16x16xf32> to vector<16x16xf32>
    %cst_125 = arith.constant dense<0.000000e+00> : vector<16x16xf32>
    %227 = tpu.matmul %224, %226, %cst_125 {dimension_numbers = #tpu.dot_dimension_numbers<[1], [0], [0], [1], [0, 0, 1, 1], [], []>} : vector<16x16xf32>, vector<16x16xf32>, vector<16x16xf32> -> vector<16x16xf32>
    %228 = arith.addf %221, %227 : vector<16x16xf32>
    %229 = vector.extract_strided_slice %5 {offsets = [3, 0, 0], sizes = [1, 16, 16], strides = [1, 1, 1]} : vector<9x16x16xf32> to vector<1x16x16xf32>
    %230 = vector.shape_cast %229 : vector<1x16x16xf32> to vector<16x16xf32>
    %cst_126 = arith.constant dense<0.000000e+00> : vector<16x16xf32>
    %231 = tpu.matmul %230, %206, %cst_126 {dimension_numbers = #tpu.dot_dimension_numbers<[1], [0], [0], [1], [0, 0, 1, 1], [], []>} : vector<16x16xf32>, vector<16x16xf32>, vector<16x16xf32> -> vector<16x16xf32>
    %232 = vector.extract_strided_slice %195 {offsets = [3, 0, 0], sizes = [1, 16, 16], strides = [1, 1, 1]} : vector<9x16x16xf32> to vector<1x16x16xf32>
    %233 = vector.shape_cast %232 : vector<1x16x16xf32> to vector<16x16xf32>
    %cst_127 = arith.constant dense<0.000000e+00> : vector<16x16xf32>
    %234 = tpu.matmul %231, %233, %cst_127 {dimension_numbers = #tpu.dot_dimension_numbers<[1], [0], [0], [1], [0, 0, 1, 1], [], []>} : vector<16x16xf32>, vector<16x16xf32>, vector<16x16xf32> -> vector<16x16xf32>
    %235 = arith.addf %228, %234 : vector<16x16xf32>
    %236 = vector.extract_strided_slice %5 {offsets = [4, 0, 0], sizes = [1, 16, 16], strides = [1, 1, 1]} : vector<9x16x16xf32> to vector<1x16x16xf32>
    %237 = vector.shape_cast %236 : vector<1x16x16xf32> to vector<16x16xf32>
    %cst_128 = arith.constant dense<0.000000e+00> : vector<16x16xf32>
    %238 = tpu.matmul %237, %206, %cst_128 {dimension_numbers = #tpu.dot_dimension_numbers<[1], [0], [0], [1], [0, 0, 1, 1], [], []>} : vector<16x16xf32>, vector<16x16xf32>, vector<16x16xf32> -> vector<16x16xf32>
    %239 = vector.extract_strided_slice %195 {offsets = [4, 0, 0], sizes = [1, 16, 16], strides = [1, 1, 1]} : vector<9x16x16xf32> to vector<1x16x16xf32>
    %240 = vector.shape_cast %239 : vector<1x16x16xf32> to vector<16x16xf32>
    %cst_129 = arith.constant dense<0.000000e+00> : vector<16x16xf32>
    %241 = tpu.matmul %238, %240, %cst_129 {dimension_numbers = #tpu.dot_dimension_numbers<[1], [0], [0], [1], [0, 0, 1, 1], [], []>} : vector<16x16xf32>, vector<16x16xf32>, vector<16x16xf32> -> vector<16x16xf32>
    %242 = arith.addf %235, %241 : vector<16x16xf32>
    %243 = vector.extract_strided_slice %5 {offsets = [5, 0, 0], sizes = [1, 16, 16], strides = [1, 1, 1]} : vector<9x16x16xf32> to vector<1x16x16xf32>
    %244 = vector.shape_cast %243 : vector<1x16x16xf32> to vector<16x16xf32>
    %cst_130 = arith.constant dense<0.000000e+00> : vector<16x16xf32>
    %245 = tpu.matmul %244, %206, %cst_130 {dimension_numbers = #tpu.dot_dimension_numbers<[1], [0], [0], [1], [0, 0, 1, 1], [], []>} : vector<16x16xf32>, vector<16x16xf32>, vector<16x16xf32> -> vector<16x16xf32>
    %246 = vector.extract_strided_slice %195 {offsets = [5, 0, 0], sizes = [1, 16, 16], strides = [1, 1, 1]} : vector<9x16x16xf32> to vector<1x16x16xf32>
    %247 = vector.shape_cast %246 : vector<1x16x16xf32> to vector<16x16xf32>
    %cst_131 = arith.constant dense<0.000000e+00> : vector<16x16xf32>
    %248 = tpu.matmul %245, %247, %cst_131 {dimension_numbers = #tpu.dot_dimension_numbers<[1], [0], [0], [1], [0, 0, 1, 1], [], []>} : vector<16x16xf32>, vector<16x16xf32>, vector<16x16xf32> -> vector<16x16xf32>
    %249 = arith.addf %242, %248 : vector<16x16xf32>
    %250 = vector.extract_strided_slice %5 {offsets = [6, 0, 0], sizes = [1, 16, 16], strides = [1, 1, 1]} : vector<9x16x16xf32> to vector<1x16x16xf32>
    %251 = vector.shape_cast %250 : vector<1x16x16xf32> to vector<16x16xf32>
    %cst_132 = arith.constant dense<0.000000e+00> : vector<16x16xf32>
    %252 = tpu.matmul %251, %206, %cst_132 {dimension_numbers = #tpu.dot_dimension_numbers<[1], [0], [0], [1], [0, 0, 1, 1], [], []>} : vector<16x16xf32>, vector<16x16xf32>, vector<16x16xf32> -> vector<16x16xf32>
    %253 = vector.extract_strided_slice %195 {offsets = [6, 0, 0], sizes = [1, 16, 16], strides = [1, 1, 1]} : vector<9x16x16xf32> to vector<1x16x16xf32>
    %254 = vector.shape_cast %253 : vector<1x16x16xf32> to vector<16x16xf32>
    %cst_133 = arith.constant dense<0.000000e+00> : vector<16x16xf32>
    %255 = tpu.matmul %252, %254, %cst_133 {dimension_numbers = #tpu.dot_dimension_numbers<[1], [0], [0], [1], [0, 0, 1, 1], [], []>} : vector<16x16xf32>, vector<16x16xf32>, vector<16x16xf32> -> vector<16x16xf32>
    %256 = arith.addf %249, %255 : vector<16x16xf32>
    %257 = vector.extract_strided_slice %5 {offsets = [7, 0, 0], sizes = [1, 16, 16], strides = [1, 1, 1]} : vector<9x16x16xf32> to vector<1x16x16xf32>
    %258 = vector.shape_cast %257 : vector<1x16x16xf32> to vector<16x16xf32>
    %cst_134 = arith.constant dense<0.000000e+00> : vector<16x16xf32>
    %259 = tpu.matmul %258, %206, %cst_134 {dimension_numbers = #tpu.dot_dimension_numbers<[1], [0], [0], [1], [0, 0, 1, 1], [], []>} : vector<16x16xf32>, vector<16x16xf32>, vector<16x16xf32> -> vector<16x16xf32>
    %260 = vector.extract_strided_slice %195 {offsets = [7, 0, 0], sizes = [1, 16, 16], strides = [1, 1, 1]} : vector<9x16x16xf32> to vector<1x16x16xf32>
    %261 = vector.shape_cast %260 : vector<1x16x16xf32> to vector<16x16xf32>
    %cst_135 = arith.constant dense<0.000000e+00> : vector<16x16xf32>
    %262 = tpu.matmul %259, %261, %cst_135 {dimension_numbers = #tpu.dot_dimension_numbers<[1], [0], [0], [1], [0, 0, 1, 1], [], []>} : vector<16x16xf32>, vector<16x16xf32>, vector<16x16xf32> -> vector<16x16xf32>
    %263 = arith.addf %256, %262 : vector<16x16xf32>
    %264 = vector.extract_strided_slice %5 {offsets = [8, 0, 0], sizes = [1, 16, 16], strides = [1, 1, 1]} : vector<9x16x16xf32> to vector<1x16x16xf32>
    %265 = vector.shape_cast %264 : vector<1x16x16xf32> to vector<16x16xf32>
    %cst_136 = arith.constant dense<0.000000e+00> : vector<16x16xf32>
    %266 = tpu.matmul %265, %206, %cst_136 {dimension_numbers = #tpu.dot_dimension_numbers<[1], [0], [0], [1], [0, 0, 1, 1], [], []>} : vector<16x16xf32>, vector<16x16xf32>, vector<16x16xf32> -> vector<16x16xf32>
    %267 = vector.extract_strided_slice %195 {offsets = [8, 0, 0], sizes = [1, 16, 16], strides = [1, 1, 1]} : vector<9x16x16xf32> to vector<1x16x16xf32>
    %268 = vector.shape_cast %267 : vector<1x16x16xf32> to vector<16x16xf32>
    %cst_137 = arith.constant dense<0.000000e+00> : vector<16x16xf32>
    %269 = tpu.matmul %266, %268, %cst_137 {dimension_numbers = #tpu.dot_dimension_numbers<[1], [0], [0], [1], [0, 0, 1, 1], [], []>} : vector<16x16xf32>, vector<16x16xf32>, vector<16x16xf32> -> vector<16x16xf32>
    %270 = arith.addf %263, %269 : vector<16x16xf32>
    %cst_138 = arith.constant 0.000000e+00 : f32
    %271 = vector.broadcast %cst_138 : f32 to vector<16x16xf32>
    %272 = arith.maximumf %270, %271 : vector<16x16xf32>
    %cst_139 = arith.constant dense<0.000000e+00> : vector<16x64xf32>
    %273 = tpu.matmul %272, %199, %cst_139 {dimension_numbers = #tpu.dot_dimension_numbers<[1], [0], [0], [1], [0, 0, 1, 1], [], []>} : vector<16x16xf32>, vector<16x64xf32>, vector<16x64xf32> -> vector<16x64xf32>
    %274 = vector.broadcast %201 : vector<1x64xf32> to vector<16x64xf32>
    %275 = arith.addf %273, %274 : vector<16x64xf32>
    %276 = arith.addf %275, %189 : vector<16x64xf32>
    %cst_140 = arith.constant 0.000000e+00 : f32
    %277 = vector.broadcast %cst_140 : f32 to vector<16x64xf32>
    %278 = arith.maximumf %276, %277 : vector<16x64xf32>
    %cst_141 = arith.constant 1.000000e+00 : f32
    %279 = vector.broadcast %cst_141 : f32 to vector<1x16xf32>
    %cst_142 = arith.constant dense<0.000000e+00> : vector<1x64xf32>
    %280 = tpu.matmul %279, %278, %cst_142 {dimension_numbers = #tpu.dot_dimension_numbers<[1], [0], [0], [1], [0, 0, 1, 1], [], []>} : vector<1x16xf32>, vector<16x64xf32>, vector<1x64xf32> -> vector<1x64xf32>
    %cst_143 = arith.constant 6.250000e-02 : f32
    %281 = vector.broadcast %cst_143 : f32 to vector<1x64xf32>
    %282 = arith.mulf %280, %281 : vector<1x64xf32>
    %c0_144 = arith.constant 0 : index
    %c0_145 = arith.constant 0 : index
    %283 = vector.load %arg15[%c0_144, %c0_145] : memref<64x16xf32, #tpu.memory_space<vmem>>, vector<64x16xf32>
    %cst_146 = arith.constant dense<0.000000e+00> : vector<1x16xf32>
    %284 = tpu.matmul %282, %283, %cst_146 {dimension_numbers = #tpu.dot_dimension_numbers<[1], [0], [0], [1], [0, 0, 1, 1], [], []>} : vector<1x64xf32>, vector<64x16xf32>, vector<1x16xf32> -> vector<1x16xf32>
    %c0_147 = arith.constant 0 : index
    %c0_148 = arith.constant 0 : index
    %285 = vector.load %arg16[%c0_147, %c0_148] : memref<1x16xf32, #tpu.memory_space<vmem>>, vector<1x16xf32>
    %286 = arith.addf %284, %285 : vector<1x16xf32>
    %cst_149 = arith.constant 0.000000e+00 : f32
    %287 = vector.broadcast %cst_149 : f32 to vector<1x16xf32>
    %288 = arith.maximumf %286, %287 : vector<1x16xf32>
    %c0_150 = arith.constant 0 : index
    %c0_151 = arith.constant 0 : index
    %289 = vector.load %arg17[%c0_150, %c0_151] : memref<32x16xf32, #tpu.memory_space<vmem>>, vector<32x16xf32>
    %cst_152 = arith.constant dense<0.000000e+00> : vector<256x16xf32>
    %290 = tpu.matmul %0, %289, %cst_152 {dimension_numbers = #tpu.dot_dimension_numbers<[1], [0], [0], [1], [0, 0, 1, 1], [], []>} : vector<256x32xf32>, vector<32x16xf32>, vector<256x16xf32> -> vector<256x16xf32>
    %c0_153 = arith.constant 0 : index
    %c0_154 = arith.constant 0 : index
    %291 = vector.load %arg18[%c0_153, %c0_154] : memref<1x16xf32, #tpu.memory_space<vmem>>, vector<1x16xf32>
    %292 = vector.broadcast %291 : vector<1x16xf32> to vector<256x16xf32>
    %293 = arith.addf %290, %292 : vector<256x16xf32>
    %c0_155 = arith.constant 0 : index
    %c0_156 = arith.constant 0 : index
    %294 = vector.load %arg19[%c0_155, %c0_156] : memref<16x16xf32, #tpu.memory_space<vmem>>, vector<16x16xf32>
    %cst_157 = arith.constant dense<0.000000e+00> : vector<256x16xf32>
    %295 = tpu.matmul %293, %294, %cst_157 {dimension_numbers = #tpu.dot_dimension_numbers<[1], [0], [0], [1], [0, 0, 1, 1], [], []>} : vector<256x16xf32>, vector<16x16xf32>, vector<256x16xf32> -> vector<256x16xf32>
    %296 = arith.addf %293, %295 : vector<256x16xf32>
    %c0_158 = arith.constant 0 : index
    %c0_159 = arith.constant 0 : index
    %297 = vector.load %arg20[%c0_158, %c0_159] : memref<1x16xf32, #tpu.memory_space<vmem>>, vector<1x16xf32>
    %298 = vector.broadcast %297 : vector<1x16xf32> to vector<256x16xf32>
    %299 = arith.addf %296, %298 : vector<256x16xf32>
    %cst_160 = arith.constant 0.000000e+00 : f32
    %300 = vector.broadcast %cst_160 : f32 to vector<256x16xf32>
    %301 = arith.maximumf %299, %300 : vector<256x16xf32>
    %c0_161 = arith.constant 0 : index
    %c0_162 = arith.constant 0 : index
    %302 = vector.load %arg21[%c0_161, %c0_162] : memref<32x16xf32, #tpu.memory_space<vmem>>, vector<32x16xf32>
    %cst_163 = arith.constant dense<0.000000e+00> : vector<256x16xf32>
    %303 = tpu.matmul %0, %302, %cst_163 {dimension_numbers = #tpu.dot_dimension_numbers<[1], [0], [0], [1], [0, 0, 1, 1], [], []>} : vector<256x32xf32>, vector<32x16xf32>, vector<256x16xf32> -> vector<256x16xf32>
    %c0_164 = arith.constant 0 : index
    %c0_165 = arith.constant 0 : index
    %304 = vector.load %arg22[%c0_164, %c0_165] : memref<1x16xf32, #tpu.memory_space<vmem>>, vector<1x16xf32>
    %305 = vector.broadcast %304 : vector<1x16xf32> to vector<256x16xf32>
    %306 = arith.addf %303, %305 : vector<256x16xf32>
    %c0_166 = arith.constant 0 : index
    %c0_167 = arith.constant 0 : index
    %307 = vector.load %arg23[%c0_166, %c0_167] : memref<16x16xf32, #tpu.memory_space<vmem>>, vector<16x16xf32>
    %cst_168 = arith.constant dense<0.000000e+00> : vector<256x16xf32>
    %308 = tpu.matmul %306, %307, %cst_168 {dimension_numbers = #tpu.dot_dimension_numbers<[1], [0], [0], [1], [0, 0, 1, 1], [], []>} : vector<256x16xf32>, vector<16x16xf32>, vector<256x16xf32> -> vector<256x16xf32>
    %309 = arith.addf %306, %308 : vector<256x16xf32>
    %c0_169 = arith.constant 0 : index
    %c0_170 = arith.constant 0 : index
    %310 = vector.load %arg24[%c0_169, %c0_170] : memref<1x16xf32, #tpu.memory_space<vmem>>, vector<1x16xf32>
    %311 = vector.broadcast %310 : vector<1x16xf32> to vector<256x16xf32>
    %312 = arith.addf %309, %311 : vector<256x16xf32>
    %cst_171 = arith.constant 0.000000e+00 : f32
    %313 = vector.broadcast %cst_171 : f32 to vector<256x16xf32>
    %314 = arith.maximumf %312, %313 : vector<256x16xf32>
    %c0_172 = arith.constant 0 : index
    %c0_173 = arith.constant 0 : index
    %315 = vector.load %arg25[%c0_172, %c0_173] : memref<16x32xf32, #tpu.memory_space<vmem>>, vector<16x32xf32>
    %cst_174 = arith.constant dense<0.000000e+00> : vector<256x32xf32>
    %316 = tpu.matmul %314, %315, %cst_174 {dimension_numbers = #tpu.dot_dimension_numbers<[1], [0], [0], [1], [0, 0, 1, 1], [], []>} : vector<256x16xf32>, vector<16x32xf32>, vector<256x32xf32> -> vector<256x32xf32>
    %cst_175 = arith.constant dense<0.000000e+00> : vector<1x256xf32>
    %317 = tpu.matmul %288, %301, %cst_175 {dimension_numbers = #tpu.dot_dimension_numbers<[1], [1], [0], [0], [0, 0, 1, 0], [], []>} : vector<1x16xf32>, vector<256x16xf32>, vector<1x256xf32> -> vector<1x256xf32>
    %cst_176 = arith.constant 6.250000e-02 : f32
    %318 = vector.broadcast %cst_176 : f32 to vector<1x256xf32>
    %319 = arith.mulf %317, %318 : vector<1x256xf32>
    %cst_177 = arith.constant dense<0xFF800000> : vector<1xf32>
    %320 = vector.multi_reduction <maximumf>, %319, %cst_177 [1] : vector<1x256xf32> to vector<1xf32>
    %321 = vector.shape_cast %320 : vector<1xf32> to vector<1x1xf32>
    %322 = vector.broadcast %321 : vector<1x1xf32> to vector<1x256xf32>
    %323 = arith.subf %319, %322 : vector<1x256xf32>
    %324 = math.exp %323 : vector<1x256xf32>
    %cst_178 = arith.constant dense<0.000000e+00> : vector<1xf32>
    %325 = vector.multi_reduction <add>, %324, %cst_178 [1] : vector<1x256xf32> to vector<1xf32>
    %326 = vector.shape_cast %325 : vector<1xf32> to vector<1x1xf32>
    %327 = vector.broadcast %326 : vector<1x1xf32> to vector<1x256xf32>
    %328 = arith.divf %324, %327 : vector<1x256xf32>
    %cst_179 = arith.constant dense<0.000000e+00> : vector<1x32xf32>
    %329 = tpu.matmul %328, %316, %cst_179 {dimension_numbers = #tpu.dot_dimension_numbers<[1], [0], [0], [1], [0, 0, 1, 1], [], []>} : vector<1x256xf32>, vector<256x32xf32>, vector<1x32xf32> -> vector<1x32xf32>
    %cst_180 = arith.constant 3.906250e-03 : f32
    %330 = vector.broadcast %cst_180 : f32 to vector<1x32xf32>
    %331 = arith.mulf %329, %330 : vector<1x32xf32>
    %c0_181 = arith.constant 0 : index
    %c0_182 = arith.constant 0 : index
    %332 = vector.load %arg26[%c0_181, %c0_182] : memref<1x32xf32, #tpu.memory_space<vmem>>, vector<1x32xf32>
    %333 = arith.addf %331, %332 : vector<1x32xf32>
    %334 = vector.shape_cast %282 : vector<1x64xf32> to vector<1x1x64xf32>
    %c0_183 = arith.constant 0 : index
    %c0_184 = arith.constant 0 : index
    %c0_185 = arith.constant 0 : index
    %335 = vector.load %arg27[%c0_183, %c0_184, %c0_185] : memref<1x1x64xf32, #tpu.memory_space<vmem>>, vector<1x1x64xf32>
    tpu.vector_store %arg27[%c0_183, %c0_184, %c0_185], %334 {strides = array<i32>} : memref<1x1x64xf32, #tpu.memory_space<vmem>>, vector<1x1x64xf32>,
    %336 = vector.shape_cast %328 : vector<1x256xf32> to vector<1x1x256xf32>
    %c0_186 = arith.constant 0 : index
    %c0_187 = arith.constant 0 : index
    %c0_188 = arith.constant 0 : index
    %337 = vector.load %arg28[%c0_186, %c0_187, %c0_188] : memref<1x1x256xf32, #tpu.memory_space<vmem>>, vector<1x1x256xf32>
    tpu.vector_store %arg28[%c0_186, %c0_187, %c0_188], %336 {strides = array<i32>} : memref<1x1x256xf32, #tpu.memory_space<vmem>>, vector<1x1x256xf32>,
    %338 = tpu.concatenate %282, %333 in 1 : vector<1x64xf32>, vector<1x32xf32> -> vector<1x96xf32>
    %339 = vector.shape_cast %338 : vector<1x96xf32> to vector<1x1x96xf32>
    %c0_189 = arith.constant 0 : index
    %c0_190 = arith.constant 0 : index
    %c0_191 = arith.constant 0 : index
    %340 = vector.load %arg29[%c0_189, %c0_190, %c0_191] : memref<1x1x96xf32, #tpu.memory_space<vmem>>, vector<1x1x96xf32>
    tpu.vector_store %arg29[%c0_189, %c0_190, %c0_191], %339 {strides = array<i32>} : memref<1x1x96xf32, #tpu.memory_space<vmem>>, vector<1x1x96xf32>,
    return
  }
  func.func @transform_0(%arg0: i32) -> (i32, i32, i32) {
    %c0_i32 = arith.constant 0 : i32
    %c0_i32_0 = arith.constant 0 : i32
    %c0_i32_1 = arith.constant 0 : i32
    return %arg0, %c0_i32, %c0_i32_0 : i32, i32, i32
  }
  func.func @transform_1(%arg0: i32) -> (i32, i32) {
    %c0_i32 = arith.constant 0 : i32
    %c0_i32_0 = arith.constant 0 : i32
    %c0_i32_1 = arith.constant 0 : i32
    return %c0_i32, %c0_i32_0 : i32, i32
  }
  func.func @transform_2(%arg0: i32) -> (i32, i32, i32) {
    %c0_i32 = arith.constant 0 : i32
    %c0_i32_0 = arith.constant 0 : i32
    %c0_i32_1 = arith.constant 0 : i32
    %c0_i32_2 = arith.constant 0 : i32
    return %c0_i32, %c0_i32_0, %c0_i32_1 : i32, i32, i32
  }
  func.func @transform_3(%arg0: i32) -> (i32, i32) {
    %c0_i32 = arith.constant 0 : i32
    %c0_i32_0 = arith.constant 0 : i32
    %c0_i32_1 = arith.constant 0 : i32
    return %c0_i32, %c0_i32_0 : i32, i32
  }
  func.func @transform_4(%arg0: i32) -> (i32, i32, i32) {
    %c0_i32 = arith.constant 0 : i32
    %c0_i32_0 = arith.constant 0 : i32
    %c0_i32_1 = arith.constant 0 : i32
    %c0_i32_2 = arith.constant 0 : i32
    return %c0_i32, %c0_i32_0, %c0_i32_1 : i32, i32, i32
  }
  func.func @transform_5(%arg0: i32) -> (i32, i32) {
    %c0_i32 = arith.constant 0 : i32
    %c0_i32_0 = arith.constant 0 : i32
    %c0_i32_1 = arith.constant 0 : i32
    return %c0_i32, %c0_i32_0 : i32, i32
  }
  func.func @transform_6(%arg0: i32) -> (i32, i32, i32) {
    %c0_i32 = arith.constant 0 : i32
    %c0_i32_0 = arith.constant 0 : i32
    %c0_i32_1 = arith.constant 0 : i32
    %c0_i32_2 = arith.constant 0 : i32
    return %c0_i32, %c0_i32_0, %c0_i32_1 : i32, i32, i32
  }
  func.func @transform_7(%arg0: i32) -> (i32, i32, i32) {
    %c0_i32 = arith.constant 0 : i32
    %c0_i32_0 = arith.constant 0 : i32
    %c0_i32_1 = arith.constant 0 : i32
    %c0_i32_2 = arith.constant 0 : i32
    return %c0_i32, %c0_i32_0, %c0_i32_1 : i32, i32, i32
  }
  func.func @transform_8(%arg0: i32) -> (i32, i32, i32, i32) {
    %c0_i32 = arith.constant 0 : i32
    %c0_i32_0 = arith.constant 0 : i32
    %c0_i32_1 = arith.constant 0 : i32
    %c0_i32_2 = arith.constant 0 : i32
    %c0_i32_3 = arith.constant 0 : i32
    return %c0_i32, %c0_i32_0, %c0_i32_1, %c0_i32_2 : i32, i32, i32, i32
  }
  func.func @transform_9(%arg0: i32) -> (i32, i32, i32) {
    %c0_i32 = arith.constant 0 : i32
    %c0_i32_0 = arith.constant 0 : i32
    %c0_i32_1 = arith.constant 0 : i32
    %c0_i32_2 = arith.constant 0 : i32
    return %c0_i32, %c0_i32_0, %c0_i32_1 : i32, i32, i32
  }
  func.func @transform_10(%arg0: i32) -> (i32, i32, i32) {
    %c0_i32 = arith.constant 0 : i32
    %c0_i32_0 = arith.constant 0 : i32
    %c0_i32_1 = arith.constant 0 : i32
    %c0_i32_2 = arith.constant 0 : i32
    return %c0_i32, %c0_i32_0, %c0_i32_1 : i32, i32, i32
  }
  func.func @transform_11(%arg0: i32) -> (i32, i32, i32) {
    %c0_i32 = arith.constant 0 : i32
    %c0_i32_0 = arith.constant 0 : i32
    %c0_i32_1 = arith.constant 0 : i32
    %c0_i32_2 = arith.constant 0 : i32
    return %c0_i32, %c0_i32_0, %c0_i32_1 : i32, i32, i32
  }
  func.func @transform_12(%arg0: i32) -> (i32, i32) {
    %c0_i32 = arith.constant 0 : i32
    %c0_i32_0 = arith.constant 0 : i32
    %c0_i32_1 = arith.constant 0 : i32
    return %c0_i32, %c0_i32_0 : i32, i32
  }
  func.func @transform_13(%arg0: i32) -> (i32, i32) {
    %c0_i32 = arith.constant 0 : i32
    %c0_i32_0 = arith.constant 0 : i32
    %c0_i32_1 = arith.constant 0 : i32
    return %c0_i32, %c0_i32_0 : i32, i32
  }
  func.func @transform_14(%arg0: i32) -> (i32, i32) {
    %c0_i32 = arith.constant 0 : i32
    %c0_i32_0 = arith.constant 0 : i32
    %c0_i32_1 = arith.constant 0 : i32
    return %c0_i32, %c0_i32_0 : i32, i32
  }
  func.func @transform_15(%arg0: i32) -> (i32, i32) {
    %c0_i32 = arith.constant 0 : i32
    %c0_i32_0 = arith.constant 0 : i32
    %c0_i32_1 = arith.constant 0 : i32
    return %c0_i32, %c0_i32_0 : i32, i32
  }
  func.func @transform_16(%arg0: i32) -> (i32, i32) {
    %c0_i32 = arith.constant 0 : i32
    %c0_i32_0 = arith.constant 0 : i32
    %c0_i32_1 = arith.constant 0 : i32
    return %c0_i32, %c0_i32_0 : i32, i32
  }
  func.func @transform_17(%arg0: i32) -> (i32, i32) {
    %c0_i32 = arith.constant 0 : i32
    %c0_i32_0 = arith.constant 0 : i32
    %c0_i32_1 = arith.constant 0 : i32
    return %c0_i32, %c0_i32_0 : i32, i32
  }
  func.func @transform_18(%arg0: i32) -> (i32, i32) {
    %c0_i32 = arith.constant 0 : i32
    %c0_i32_0 = arith.constant 0 : i32
    %c0_i32_1 = arith.constant 0 : i32
    return %c0_i32, %c0_i32_0 : i32, i32
  }
  func.func @transform_19(%arg0: i32) -> (i32, i32) {
    %c0_i32 = arith.constant 0 : i32
    %c0_i32_0 = arith.constant 0 : i32
    %c0_i32_1 = arith.constant 0 : i32
    return %c0_i32, %c0_i32_0 : i32, i32
  }
  func.func @transform_20(%arg0: i32) -> (i32, i32) {
    %c0_i32 = arith.constant 0 : i32
    %c0_i32_0 = arith.constant 0 : i32
    %c0_i32_1 = arith.constant 0 : i32
    return %c0_i32, %c0_i32_0 : i32, i32
  }
  func.func @transform_21(%arg0: i32) -> (i32, i32) {
    %c0_i32 = arith.constant 0 : i32
    %c0_i32_0 = arith.constant 0 : i32
    %c0_i32_1 = arith.constant 0 : i32
    return %c0_i32, %c0_i32_0 : i32, i32
  }
  func.func @transform_22(%arg0: i32) -> (i32, i32) {
    %c0_i32 = arith.constant 0 : i32
    %c0_i32_0 = arith.constant 0 : i32
    %c0_i32_1 = arith.constant 0 : i32
    return %c0_i32, %c0_i32_0 : i32, i32
  }
  func.func @transform_23(%arg0: i32) -> (i32, i32) {
    %c0_i32 = arith.constant 0 : i32
    %c0_i32_0 = arith.constant 0 : i32
    %c0_i32_1 = arith.constant 0 : i32
    return %c0_i32, %c0_i32_0 : i32, i32
  }
  func.func @transform_24(%arg0: i32) -> (i32, i32) {
    %c0_i32 = arith.constant 0 : i32
    %c0_i32_0 = arith.constant 0 : i32
    %c0_i32_1 = arith.constant 0 : i32
    return %c0_i32, %c0_i32_0 : i32, i32
  }
  func.func @transform_25(%arg0: i32) -> (i32, i32) {
    %c0_i32 = arith.constant 0 : i32
    %c0_i32_0 = arith.constant 0 : i32
    %c0_i32_1 = arith.constant 0 : i32
    return %c0_i32, %c0_i32_0 : i32, i32
  }
  func.func @transform_26(%arg0: i32) -> (i32, i32, i32) {
    %c0_i32 = arith.constant 0 : i32
    %c0_i32_0 = arith.constant 0 : i32
    %c0_i32_1 = arith.constant 0 : i32
    return %arg0, %c0_i32, %c0_i32_0 : i32, i32, i32
  }
  func.func @transform_27(%arg0: i32) -> (i32, i32, i32) {
    %c0_i32 = arith.constant 0 : i32
    %c0_i32_0 = arith.constant 0 : i32
    %c0_i32_1 = arith.constant 0 : i32
    return %arg0, %c0_i32, %c0_i32_0 : i32, i32, i32
  }
  func.func @transform_28(%arg0: i32) -> (i32, i32, i32) {
    %c0_i32 = arith.constant 0 : i32
    %c0_i32_0 = arith.constant 0 : i32
    %c0_i32_1 = arith.constant 0 : i32
    return %arg0, %c0_i32, %c0_i32_0 : i32, i32, i32
  }
}

</mosaic_0001>

<llo_original>
// kernel: _lambda_.1
$region0: #{_lambda_.1}
  #allocation0 [shape = 'u32[]', space=smem, size = 0x4, offset = 0x4, fixed_abs, tag = 'smem constant byte address 0x4 - core index']
  #allocation1 [shape = 'u32[72,128]{1,0:T(1,128)}', space=vmem, size = 0x9000, scoped, tag = 'internal scratch']
  %s0 = inlined_call_operand.vmem [shape: f32[3,49,256], index: 0, kind: input, shape index: {}]
  %s1 = inlined_call_operand.vmem [shape: f32[256,32], index: 1, kind: input, shape index: {}]
  %s2 = inlined_call_operand.vmem [shape: f32[9,16,49], index: 2, kind: input, shape index: {}]
  %s3 = inlined_call_operand.vmem [shape: f32[16,49], index: 3, kind: input, shape index: {}]
  %s4 = inlined_call_operand.vmem [shape: f32[9,16,16], index: 4, kind: input, shape index: {}]
  %s5 = inlined_call_operand.vmem [shape: f32[32,16], index: 5, kind: input, shape index: {}]
  %s6 = inlined_call_operand.vmem [shape: f32[2,64,16], index: 6, kind: input, shape index: {}]
  %s7 = inlined_call_operand.vmem [shape: f32[3,1,16], index: 7, kind: input, shape index: {}, may-alias: {7,9}]
  %s8 = inlined_call_operand.vmem [shape: f32[3,9,16,16], index: 8, kind: input, shape index: {}]
  %s9 = inlined_call_operand.vmem [shape: f32[3,1,16], index: 9, kind: input, shape index: {}, may-alias: {7,9}]
  %s10 = inlined_call_operand.vmem [shape: f32[3,16,64], index: 10, kind: input, shape index: {}]
  %s11 = inlined_call_operand.vmem [shape: f32[3,1,64], index: 11, kind: input, shape index: {}]
  %s12 = inlined_call_operand.vmem [shape: f32[32,64], index: 12, kind: input, shape index: {}]
  %s13 = inlined_call_operand.vmem [shape: f32[1,64], index: 13, kind: input, shape index: {}]
  %s14 = inlined_call_operand.vmem [shape: f32[64,16], index: 14, kind: input, shape index: {}]
  %s15 = inlined_call_operand.vmem [shape: f32[1,16], index: 15, kind: input, shape index: {}, may-alias: {15,17,19,21,23}]
  %s16 = inlined_call_operand.vmem [shape: f32[32,16], index: 16, kind: input, shape index: {}]
  %s17 = inlined_call_operand.vmem [shape: f32[1,16], index: 17, kind: input, shape index: {}, may-alias: {15,17,19,21,23}]
  %s18 = inlined_call_operand.vmem [shape: f32[16,16], index: 18, kind: input, shape index: {}]
  %s19 = inlined_call_operand.vmem [shape: f32[1,16], index: 19, kind: input, shape index: {}, may-alias: {15,17,19,21,23}]
  %s20 = inlined_call_operand.vmem [shape: f32[32,16], index: 20, kind: input, shape index: {}]
  %s21 = inlined_call_operand.vmem [shape: f32[1,16], index: 21, kind: input, shape index: {}, may-alias: {15,17,19,21,23}]
  %s22 = inlined_call_operand.vmem [shape: f32[16,16], index: 22, kind: input, shape index: {}]
  %s23 = inlined_call_operand.vmem [shape: f32[1,16], index: 23, kind: input, shape index: {}, may-alias: {15,17,19,21,23}]
  %s24 = inlined_call_operand.vmem [shape: f32[16,32], index: 24, kind: input, shape index: {}]
  %s25 = inlined_call_operand.vmem [shape: f32[1,32], index: 25, kind: input, shape index: {}]
  %s26 = inlined_call_operand.vmem [shape: f32[3,1,64], index: 26, kind: output, shape index: {0}]
  %s27 = inlined_call_operand.vmem [shape: f32[3,1,256], index: 27, kind: output, shape index: {1}]
  %s28 = inlined_call_operand.vmem [shape: f32[3,1,96], index: 28, kind: output, shape index: {2}]
  %29 = xla_tuple %s26, %s27, %s28
  %s30 = sld [smem:[#allocation0]]
  $region153: #{_lambda_.1} parent=0
    _
  %s32 = ssub.s32 1, %s30
  %s33 = scalar_select 0, %s32, %s30
  loop: start=0, step=1, limit=5
  $region2: #{_lambda_.1} parent=0 // loop_pre_header
    _
  $region3: #{_lambda_.1} parent=0 // loop_header
    %s35 = sphi 0, %s39
    %p36 = scmp.ge.s32.totalorder %s35, 5
    %s45 = sphi 0, %s47
    %s48 = sphi 0, %s45
    %s49 = sphi 0, %s48
    %s65 = sphi 0, %s49
    %s69 = sphi 0, %s69
    %s71 = sphi 0, %s69
    %s72 = sphi 0, %s71
    %s86 = sphi 0, %s72
    %s90 = sphi 0, %s90
    %s92 = sphi 0, %s90
    %s93 = sphi 0, %s92
    %s107 = sphi 0, %s93
    %s111 = sphi 0, %s111
    %s113 = sphi 0, %s111
    %s114 = sphi 0, %s113
    %s128 = sphi 0, %s114
    %s132 = sphi 0, %s132
    %s134 = sphi 0, %s132
    %s135 = sphi 0, %s134
    %s149 = sphi 0, %s135
    %s153 = sphi 0, %s153
    %s155 = sphi 0, %s153
    %s156 = sphi 0, %s155
    %s170 = sphi 0, %s156
    %s174 = sphi 0, %s174
    %s176 = sphi 0, %s174
    %s177 = sphi 0, %s176
    %s191 = sphi 0, %s177
    %s195 = sphi 0, %s195
    %s197 = sphi 0, %s195
    %s198 = sphi 0, %s197
    %s212 = sphi 0, %s198
    %s216 = sphi 0, %s216
    %s218 = sphi 0, %s216
    %s219 = sphi 0, %s218
    %s233 = sphi 0, %s219
    %s237 = sphi 0, %s237
    %s239 = sphi 0, %s237
    %s240 = sphi 0, %s239
    %s254 = sphi 0, %s240
    %s258 = sphi 0, %s258
    %s260 = sphi 0, %s258
    %s261 = sphi 0, %s260
    %s275 = sphi 0, %s261
    %s279 = sphi 0, %s279
    %s281 = sphi 0, %s279
    %s282 = sphi 0, %s281
    %s296 = sphi 0, %s282
    %s300 = sphi 0, %s300
    %s302 = sphi 0, %s300
    %s303 = sphi 0, %s302
    %s317 = sphi 0, %s303
    %s321 = sphi 0, %s321
    %s323 = sphi 0, %s321
    %s324 = sphi 0, %s323
    %s338 = sphi 0, %s324
    %s342 = sphi 0, %s342
    %s344 = sphi 0, %s342
    %s345 = sphi 0, %s344
    %s359 = sphi 0, %s345
    %s363 = sphi 0, %s363
    %s365 = sphi 0, %s363
    %s366 = sphi 0, %s365
    %s380 = sphi 0, %s366
    %s384 = sphi 0, %s384
    %s386 = sphi 0, %s384
    %s387 = sphi 0, %s386
    %s401 = sphi 0, %s387
    %s405 = sphi 0, %s405
    %s407 = sphi 0, %s405
    %s408 = sphi 0, %s407
    %s422 = sphi 0, %s408
    %s426 = sphi 0, %s426
    %s428 = sphi 0, %s426
    %s429 = sphi 0, %s428
    %s443 = sphi 0, %s429
    %s447 = sphi 0, %s447
    %s449 = sphi 0, %s447
    %s450 = sphi 0, %s449
    %s464 = sphi 0, %s450
    %s468 = sphi 0, %s468
    %s470 = sphi 0, %s468
    %s471 = sphi 0, %s470
    %s485 = sphi 0, %s471
    %s489 = sphi 0, %s489
    %s491 = sphi 0, %s489
    %s492 = sphi 0, %s491
    %s506 = sphi 0, %s492
    %s510 = sphi 0, %s510
    %s512 = sphi 0, %s510
    %s513 = sphi 0, %s512
    %s527 = sphi 0, %s513
    %s531 = sphi 0, %s531
    %s533 = sphi 0, %s531
    %s534 = sphi 0, %s533
    %s548 = sphi 0, %s534
    %s552 = sphi 0, %s552
    %s554 = sphi 0, %s552
    %s555 = sphi 0, %s554
    %s569 = sphi 0, %s555
    %s573 = sphi 0, %s573
    %s575 = sphi 0, %s573
    %s576 = sphi 0, %s575
    %s590 = sphi 0, %s576
    %s596 = sphi 0, %s598
    %s599 = sphi 0, %s596
    %s600 = sphi 0, %s599
    %s616 = sphi 0, %s600
    %s622 = sphi 0, %s624
    %s625 = sphi 0, %s622
    %s626 = sphi 0, %s625
    %s642 = sphi 0, %s626
    %s648 = sphi 0, %s650
    %s651 = sphi 0, %s648
    %s652 = sphi 0, %s651
    %s668 = sphi 0, %s652
  $region4: #{_lambda_.1} parent=0 // loop_header_branch
    %38 = sbr.rel (%p36) target = $region8
  $region5: #{_lambda_.1} parent=0 // loop_body
    %s40 = ssub.s32 %s35, 1
    %s41 = ssub.s32 %s35, 2
    %s42 = sadd.s32 %s35, 1
    %s43 = ssub.s32 %s35, %s42
    %p44 = scmp.eq.s32.totalorder %s43, 0
    %s46 = sadd.s32 %s45, 1
    %s47 = scalar_select %p44, %s45, %s46
    %p50 = pneg %p44
    %p51 = scmp.eq.s32.totalorder %s35, 2
    %p52 = por %p50, %p51
    %p53 = scmp.ne.s32.totalorder %s45, %s48
    %p54 = scmp.eq.s32.totalorder %s35, 0
    %p55 = por %p53, %p54
    %p56 = scmp.ne.s32.totalorder %s45, %s48
    %p57 = scmp.eq.s32.totalorder %s40, 2
    %p58 = por %p56, %p57
    %p59 = scmp.ne.s32.totalorder %s48, %s49
    %p60 = scmp.eq.s32.totalorder %s40, 0
    %p61 = por %p59, %p60
    %p62 = scmp.ne.s32.totalorder %s48, %s49
    %p63 = scmp.eq.s32.totalorder %s41, 2
    %p64 = por %p62, %p63
    %p66 = scmp.ne.s32.totalorder %s49, %s65
    %p67 = scmp.eq.s32.totalorder %s41, 0
    %p68 = por %p66, %p67
    %s70 = sadd.s32 %s69, 1
    %p73 = scmp.eq.s32.totalorder %s35, 2
    %p74 = scmp.ne.s32.totalorder %s69, %s71
    %p75 = scmp.eq.s32.totalorder %s35, 0
    %p76 = por %p74, %p75
    %p77 = scmp.ne.s32.totalorder %s69, %s71
    %p78 = scmp.eq.s32.totalorder %s40, 2
    %p79 = por %p77, %p78
    %p80 = scmp.ne.s32.totalorder %s71, %s72
    %p81 = scmp.eq.s32.totalorder %s40, 0
    %p82 = por %p80, %p81
    %p83 = scmp.ne.s32.totalorder %s71, %s72
    %p84 = scmp.eq.s32.totalorder %s41, 2
    %p85 = por %p83, %p84
    %p87 = scmp.ne.s32.totalorder %s72, %s86
    %p88 = scmp.eq.s32.totalorder %s41, 0
    %p89 = por %p87, %p88
    %s91 = sadd.s32 %s90, 1
    %p94 = scmp.eq.s32.totalorder %s35, 2
    %p95 = scmp.ne.s32.totalorder %s90, %s92
    %p96 = scmp.eq.s32.totalorder %s35, 0
    %p97 = por %p95, %p96
    %p98 = scmp.ne.s32.totalorder %s90, %s92
    %p99 = scmp.eq.s32.totalorder %s40, 2
    %p100 = por %p98, %p99
    %p101 = scmp.ne.s32.totalorder %s92, %s93
    %p102 = scmp.eq.s32.totalorder %s40, 0
    %p103 = por %p101, %p102
    %p104 = scmp.ne.s32.totalorder %s92, %s93
    %p105 = scmp.eq.s32.totalorder %s41, 2
    %p106 = por %p104, %p105
    %p108 = scmp.ne.s32.totalorder %s93, %s107
    %p109 = scmp.eq.s32.totalorder %s41, 0
    %p110 = por %p108, %p109
    %s112 = sadd.s32 %s111, 1
    %p115 = scmp.eq.s32.totalorder %s35, 2
    %p116 = scmp.ne.s32.totalorder %s111, %s113
    %p117 = scmp.eq.s32.totalorder %s35, 0
    %p118 = por %p116, %p117
    %p119 = scmp.ne.s32.totalorder %s111, %s113
    %p120 = scmp.eq.s32.totalorder %s40, 2
    %p121 = por %p119, %p120
    %p122 = scmp.ne.s32.totalorder %s113, %s114
    %p123 = scmp.eq.s32.totalorder %s40, 0
    %p124 = por %p122, %p123
    %p125 = scmp.ne.s32.totalorder %s113, %s114
    %p126 = scmp.eq.s32.totalorder %s41, 2
    %p127 = por %p125, %p126
    %p129 = scmp.ne.s32.totalorder %s114, %s128
    %p130 = scmp.eq.s32.totalorder %s41, 0
    %p131 = por %p129, %p130
    %s133 = sadd.s32 %s132, 1
    %p136 = scmp.eq.s32.totalorder %s35, 2
    %p137 = scmp.ne.s32.totalorder %s132, %s134
    %p138 = scmp.eq.s32.totalorder %s35, 0
    %p139 = por %p137, %p138
    %p140 = scmp.ne.s32.totalorder %s132, %s134
    %p141 = scmp.eq.s32.totalorder %s40, 2
    %p142 = por %p140, %p141
    %p143 = scmp.ne.s32.totalorder %s134, %s135
    %p144 = scmp.eq.s32.totalorder %s40, 0
    %p145 = por %p143, %p144
    %p146 = scmp.ne.s32.totalorder %s134, %s135
    %p147 = scmp.eq.s32.totalorder %s41, 2
    %p148 = por %p146, %p147
    %p150 = scmp.ne.s32.totalorder %s135, %s149
    %p151 = scmp.eq.s32.totalorder %s41, 0
    %p152 = por %p150, %p151
    %s154 = sadd.s32 %s153, 1
    %p157 = scmp.eq.s32.totalorder %s35, 2
    %p158 = scmp.ne.s32.totalorder %s153, %s155
    %p159 = scmp.eq.s32.totalorder %s35, 0
    %p160 = por %p158, %p159
    %p161 = scmp.ne.s32.totalorder %s153, %s155
    %p162 = scmp.eq.s32.totalorder %s40, 2
    %p163 = por %p161, %p162
    %p164 = scmp.ne.s32.totalorder %s155, %s156
    %p165 = scmp.eq.s32.totalorder %s40, 0
    %p166 = por %p164, %p165
    %p167 = scmp.ne.s32.totalorder %s155, %s156
    %p168 = scmp.eq.s32.totalorder %s41, 2
    %p169 = por %p167, %p168
    %p171 = scmp.ne.s32.totalorder %s156, %s170
    %p172 = scmp.eq.s32.totalorder %s41, 0
    %p173 = por %p171, %p172
    %s175 = sadd.s32 %s174, 1
    %p178 = scmp.eq.s32.totalorder %s35, 2
    %p179 = scmp.ne.s32.totalorder %s174, %s176
    %p180 = scmp.eq.s32.totalorder %s35, 0
    %p181 = por %p179, %p180
    %p182 = scmp.ne.s32.totalorder %s174, %s176
    %p183 = scmp.eq.s32.totalorder %s40, 2
    %p184 = por %p182, %p183
    %p185 = scmp.ne.s32.totalorder %s176, %s177
    %p186 = scmp.eq.s32.totalorder %s40, 0
    %p187 = por %p185, %p186
    %p188 = scmp.ne.s32.totalorder %s176, %s177
    %p189 = scmp.eq.s32.totalorder %s41, 2
    %p190 = por %p188, %p189
    %p192 = scmp.ne.s32.totalorder %s177, %s191
    %p193 = scmp.eq.s32.totalorder %s41, 0
    %p194 = por %p192, %p193
    %s196 = sadd.s32 %s195, 1
    %p199 = scmp.eq.s32.totalorder %s35, 2
    %p200 = scmp.ne.s32.totalorder %s195, %s197
    %p201 = scmp.eq.s32.totalorder %s35, 0
    %p202 = por %p200, %p201
    %p203 = scmp.ne.s32.totalorder %s195, %s197
    %p204 = scmp.eq.s32.totalorder %s40, 2
    %p205 = por %p203, %p204
    %p206 = scmp.ne.s32.totalorder %s197, %s198
    %p207 = scmp.eq.s32.totalorder %s40, 0
    %p208 = por %p206, %p207
    %p209 = scmp.ne.s32.totalorder %s197, %s198
    %p210 = scmp.eq.s32.totalorder %s41, 2
    %p211 = por %p209, %p210
    %p213 = scmp.ne.s32.totalorder %s198, %s212
    %p214 = scmp.eq.s32.totalorder %s41, 0
    %p215 = por %p213, %p214
    %s217 = sadd.s32 %s216, 1
    %p220 = scmp.eq.s32.totalorder %s35, 2
    %p221 = scmp.ne.s32.totalorder %s216, %s218
    %p222 = scmp.eq.s32.totalorder %s35, 0
    %p223 = por %p221, %p222
    %p224 = scmp.ne.s32.totalorder %s216, %s218
    %p225 = scmp.eq.s32.totalorder %s40, 2
    %p226 = por %p224, %p225
    %p227 = scmp.ne.s32.totalorder %s218, %s219
    %p228 = scmp.eq.s32.totalorder %s40, 0
    %p229 = por %p227, %p228
    %p230 = scmp.ne.s32.totalorder %s218, %s219
    %p231 = scmp.eq.s32.totalorder %s41, 2
    %p232 = por %p230, %p231
    %p234 = scmp.ne.s32.totalorder %s219, %s233
    %p235 = scmp.eq.s32.totalorder %s41, 0
    %p236 = por %p234, %p235
    %s238 = sadd.s32 %s237, 1
    %p241 = scmp.eq.s32.totalorder %s35, 2
    %p242 = scmp.ne.s32.totalorder %s237, %s239
    %p243 = scmp.eq.s32.totalorder %s35, 0
    %p244 = por %p242, %p243
    %p245 = scmp.ne.s32.totalorder %s237, %s239
    %p246 = scmp.eq.s32.totalorder %s40, 2
    %p247 = por %p245, %p246
    %p248 = scmp.ne.s32.totalorder %s239, %s240
    %p249 = scmp.eq.s32.totalorder %s40, 0
    %p250 = por %p248, %p249
    %p251 = scmp.ne.s32.totalorder %s239, %s240
    %p252 = scmp.eq.s32.totalorder %s41, 2
    %p253 = por %p251, %p252
    %p255 = scmp.ne.s32.totalorder %s240, %s254
    %p256 = scmp.eq.s32.totalorder %s41, 0
    %p257 = por %p255, %p256
    %s259 = sadd.s32 %s258, 1
    %p262 = scmp.eq.s32.totalorder %s35, 2
    %p263 = scmp.ne.s32.totalorder %s258, %s260
    %p264 = scmp.eq.s32.totalorder %s35, 0
    %p265 = por %p263, %p264
    %p266 = scmp.ne.s32.totalorder %s258, %s260
    %p267 = scmp.eq.s32.totalorder %s40, 2
    %p268 = por %p266, %p267
    %p269 = scmp.ne.s32.totalorder %s260, %s261
    %p270 = scmp.eq.s32.totalorder %s40, 0
    %p271 = por %p269, %p270
    %p272 = scmp.ne.s32.totalorder %s260, %s261
    %p273 = scmp.eq.s32.totalorder %s41, 2
    %p274 = por %p272, %p273
    %p276 = scmp.ne.s32.totalorder %s261, %s275
    %p277 = scmp.eq.s32.totalorder %s41, 0
    %p278 = por %p276, %p277
    %s280 = sadd.s32 %s279, 1
    %p283 = scmp.eq.s32.totalorder %s35, 2
    %p284 = scmp.ne.s32.totalorder %s279, %s281
    %p285 = scmp.eq.s32.totalorder %s35, 0
    %p286 = por %p284, %p285
    %p287 = scmp.ne.s32.totalorder %s279, %s281
    %p288 = scmp.eq.s32.totalorder %s40, 2
    %p289 = por %p287, %p288
    %p290 = scmp.ne.s32.totalorder %s281, %s282
    %p291 = scmp.eq.s32.totalorder %s40, 0
    %p292 = por %p290, %p291
    %p293 = scmp.ne.s32.totalorder %s281, %s282
    %p294 = scmp.eq.s32.totalorder %s41, 2
    %p295 = por %p293, %p294
    %p297 = scmp.ne.s32.totalorder %s282, %s296
    %p298 = scmp.eq.s32.totalorder %s41, 0
    %p299 = por %p297, %p298
    %s301 = sadd.s32 %s300, 1
    %p304 = scmp.eq.s32.totalorder %s35, 2
    %p305 = scmp.ne.s32.totalorder %s300, %s302
    %p306 = scmp.eq.s32.totalorder %s35, 0
    %p307 = por %p305, %p306
    %p308 = scmp.ne.s32.totalorder %s300, %s302
    %p309 = scmp.eq.s32.totalorder %s40, 2
    %p310 = por %p308, %p309
    %p311 = scmp.ne.s32.totalorder %s302, %s303
    %p312 = scmp.eq.s32.totalorder %s40, 0
    %p313 = por %p311, %p312
    %p314 = scmp.ne.s32.totalorder %s302, %s303
    %p315 = scmp.eq.s32.totalorder %s41, 2
    %p316 = por %p314, %p315
    %p318 = scmp.ne.s32.totalorder %s303, %s317
    %p319 = scmp.eq.s32.totalorder %s41, 0
    %p320 = por %p318, %p319
    %s322 = sadd.s32 %s321, 1
    %p325 = scmp.eq.s32.totalorder %s35, 2
    %p326 = scmp.ne.s32.totalorder %s321, %s323
    %p327 = scmp.eq.s32.totalorder %s35, 0
    %p328 = por %p326, %p327
    %p329 = scmp.ne.s32.totalorder %s321, %s323
    %p330 = scmp.eq.s32.totalorder %s40, 2
    %p331 = por %p329, %p330
    %p332 = scmp.ne.s32.totalorder %s323, %s324
    %p333 = scmp.eq.s32.totalorder %s40, 0
    %p334 = por %p332, %p333
    %p335 = scmp.ne.s32.totalorder %s323, %s324
    %p336 = scmp.eq.s32.totalorder %s41, 2
    %p337 = por %p335, %p336
    %p339 = scmp.ne.s32.totalorder %s324, %s338
    %p340 = scmp.eq.s32.totalorder %s41, 0
    %p341 = por %p339, %p340
    %s343 = sadd.s32 %s342, 1
    %p346 = scmp.eq.s32.totalorder %s35, 2
    %p347 = scmp.ne.s32.totalorder %s342, %s344
    %p348 = scmp.eq.s32.totalorder %s35, 0
    %p349 = por %p347, %p348
    %p350 = scmp.ne.s32.totalorder %s342, %s344
    %p351 = scmp.eq.s32.totalorder %s40, 2
    %p352 = por %p350, %p351
    %p353 = scmp.ne.s32.totalorder %s344, %s345
    %p354 = scmp.eq.s32.totalorder %s40, 0
    %p355 = por %p353, %p354
    %p356 = scmp.ne.s32.totalorder %s344, %s345
    %p357 = scmp.eq.s32.totalorder %s41, 2
    %p358 = por %p356, %p357
    %p360 = scmp.ne.s32.totalorder %s345, %s359
    %p361 = scmp.eq.s32.totalorder %s41, 0
    %p362 = por %p360, %p361
    %s364 = sadd.s32 %s363, 1
    %p367 = scmp.eq.s32.totalorder %s35, 2
    %p368 = scmp.ne.s32.totalorder %s363, %s365
    %p369 = scmp.eq.s32.totalorder %s35, 0
    %p370 = por %p368, %p369
    %p371 = scmp.ne.s32.totalorder %s363, %s365
    %p372 = scmp.eq.s32.totalorder %s40, 2
    %p373 = por %p371, %p372
    %p374 = scmp.ne.s32.totalorder %s365, %s366
    %p375 = scmp.eq.s32.totalorder %s40, 0
    %p376 = por %p374, %p375
    %p377 = scmp.ne.s32.totalorder %s365, %s366
    %p378 = scmp.eq.s32.totalorder %s41, 2
    %p379 = por %p377, %p378
    %p381 = scmp.ne.s32.totalorder %s366, %s380
    %p382 = scmp.eq.s32.totalorder %s41, 0
    %p383 = por %p381, %p382
    %s385 = sadd.s32 %s384, 1
    %p388 = scmp.eq.s32.totalorder %s35, 2
    %p389 = scmp.ne.s32.totalorder %s384, %s386
    %p390 = scmp.eq.s32.totalorder %s35, 0
    %p391 = por %p389, %p390
    %p392 = scmp.ne.s32.totalorder %s384, %s386
    %p393 = scmp.eq.s32.totalorder %s40, 2
    %p394 = por %p392, %p393
    %p395 = scmp.ne.s32.totalorder %s386, %s387
    %p396 = scmp.eq.s32.totalorder %s40, 0
    %p397 = por %p395, %p396
    %p398 = scmp.ne.s32.totalorder %s386, %s387
    %p399 = scmp.eq.s32.totalorder %s41, 2
    %p400 = por %p398, %p399
    %p402 = scmp.ne.s32.totalorder %s387, %s401
    %p403 = scmp.eq.s32.totalorder %s41, 0
    %p404 = por %p402, %p403
    %s406 = sadd.s32 %s405, 1
    %p409 = scmp.eq.s32.totalorder %s35, 2
    %p410 = scmp.ne.s32.totalorder %s405, %s407
    %p411 = scmp.eq.s32.totalorder %s35, 0
    %p412 = por %p410, %p411
    %p413 = scmp.ne.s32.totalorder %s405, %s407
    %p414 = scmp.eq.s32.totalorder %s40, 2
    %p415 = por %p413, %p414
    %p416 = scmp.ne.s32.totalorder %s407, %s408
    %p417 = scmp.eq.s32.totalorder %s40, 0
    %p418 = por %p416, %p417
    %p419 = scmp.ne.s32.totalorder %s407, %s408
    %p420 = scmp.eq.s32.totalorder %s41, 2
    %p421 = por %p419, %p420
    %p423 = scmp.ne.s32.totalorder %s408, %s422
    %p424 = scmp.eq.s32.totalorder %s41, 0
    %p425 = por %p423, %p424
    %s427 = sadd.s32 %s426, 1
    %p430 = scmp.eq.s32.totalorder %s35, 2
    %p431 = scmp.ne.s32.totalorder %s426, %s428
    %p432 = scmp.eq.s32.totalorder %s35, 0
    %p433 = por %p431, %p432
    %p434 = scmp.ne.s32.totalorder %s426, %s428
    %p435 = scmp.eq.s32.totalorder %s40, 2
    %p436 = por %p434, %p435
    %p437 = scmp.ne.s32.totalorder %s428, %s429
    %p438 = scmp.eq.s32.totalorder %s40, 0
    %p439 = por %p437, %p438
    %p440 = scmp.ne.s32.totalorder %s428, %s429
    %p441 = scmp.eq.s32.totalorder %s41, 2
    %p442 = por %p440, %p441
    %p444 = scmp.ne.s32.totalorder %s429, %s443
    %p445 = scmp.eq.s32.totalorder %s41, 0
    %p446 = por %p444, %p445
    %s448 = sadd.s32 %s447, 1
    %p451 = scmp.eq.s32.totalorder %s35, 2
    %p452 = scmp.ne.s32.totalorder %s447, %s449
    %p453 = scmp.eq.s32.totalorder %s35, 0
    %p454 = por %p452, %p453
    %p455 = scmp.ne.s32.totalorder %s447, %s449
    %p456 = scmp.eq.s32.totalorder %s40, 2
    %p457 = por %p455, %p456
    %p458 = scmp.ne.s32.totalorder %s449, %s450
    %p459 = scmp.eq.s32.totalorder %s40, 0
    %p460 = por %p458, %p459
    %p461 = scmp.ne.s32.totalorder %s449, %s450
    %p462 = scmp.eq.s32.totalorder %s41, 2
    %p463 = por %p461, %p462
    %p465 = scmp.ne.s32.totalorder %s450, %s464
    %p466 = scmp.eq.s32.totalorder %s41, 0
    %p467 = por %p465, %p466
    %s469 = sadd.s32 %s468, 1
    %p472 = scmp.eq.s32.totalorder %s35, 2
    %p473 = scmp.ne.s32.totalorder %s468, %s470
    %p474 = scmp.eq.s32.totalorder %s35, 0
    %p475 = por %p473, %p474
    %p476 = scmp.ne.s32.totalorder %s468, %s470
    %p477 = scmp.eq.s32.totalorder %s40, 2
    %p478 = por %p476, %p477
    %p479 = scmp.ne.s32.totalorder %s470, %s471
    %p480 = scmp.eq.s32.totalorder %s40, 0
    %p481 = por %p479, %p480
    %p482 = scmp.ne.s32.totalorder %s470, %s471
    %p483 = scmp.eq.s32.totalorder %s41, 2
    %p484 = por %p482, %p483
    %p486 = scmp.ne.s32.totalorder %s471, %s485
    %p487 = scmp.eq.s32.totalorder %s41, 0
    %p488 = por %p486, %p487
    %s490 = sadd.s32 %s489, 1
    %p493 = scmp.eq.s32.totalorder %s35, 2
    %p494 = scmp.ne.s32.totalorder %s489, %s491
    %p495 = scmp.eq.s32.totalorder %s35, 0
    %p496 = por %p494, %p495
    %p497 = scmp.ne.s32.totalorder %s489, %s491
    %p498 = scmp.eq.s32.totalorder %s40, 2
    %p499 = por %p497, %p498
    %p500 = scmp.ne.s32.totalorder %s491, %s492
    %p501 = scmp.eq.s32.totalorder %s40, 0
    %p502 = por %p500, %p501
    %p503 = scmp.ne.s32.totalorder %s491, %s492
    %p504 = scmp.eq.s32.totalorder %s41, 2
    %p505 = por %p503, %p504
    %p507 = scmp.ne.s32.totalorder %s492, %s506
    %p508 = scmp.eq.s32.totalorder %s41, 0
    %p509 = por %p507, %p508
    %s511 = sadd.s32 %s510, 1
    %p514 = scmp.eq.s32.totalorder %s35, 2
    %p515 = scmp.ne.s32.totalorder %s510, %s512
    %p516 = scmp.eq.s32.totalorder %s35, 0
    %p517 = por %p515, %p516
    %p518 = scmp.ne.s32.totalorder %s510, %s512
    %p519 = scmp.eq.s32.totalorder %s40, 2
    %p520 = por %p518, %p519
    %p521 = scmp.ne.s32.totalorder %s512, %s513
    %p522 = scmp.eq.s32.totalorder %s40, 0
    %p523 = por %p521, %p522
    %p524 = scmp.ne.s32.totalorder %s512, %s513
    %p525 = scmp.eq.s32.totalorder %s41, 2
    %p526 = por %p524, %p525
    %p528 = scmp.ne.s32.totalorder %s513, %s527
    %p529 = scmp.eq.s32.totalorder %s41, 0
    %p530 = por %p528, %p529
    %s532 = sadd.s32 %s531, 1
    %p535 = scmp.eq.s32.totalorder %s35, 2
    %p536 = scmp.ne.s32.totalorder %s531, %s533
    %p537 = scmp.eq.s32.totalorder %s35, 0
    %p538 = por %p536, %p537
    %p539 = scmp.ne.s32.totalorder %s531, %s533
    %p540 = scmp.eq.s32.totalorder %s40, 2
    %p541 = por %p539, %p540
    %p542 = scmp.ne.s32.totalorder %s533, %s534
    %p543 = scmp.eq.s32.totalorder %s40, 0
    %p544 = por %p542, %p543
    %p545 = scmp.ne.s32.totalorder %s533, %s534
    %p546 = scmp.eq.s32.totalorder %s41, 2
    %p547 = por %p545, %p546
    %p549 = scmp.ne.s32.totalorder %s534, %s548
    %p550 = scmp.eq.s32.totalorder %s41, 0
    %p551 = por %p549, %p550
    %s553 = sadd.s32 %s552, 1
    %p556 = scmp.eq.s32.totalorder %s35, 2
    %p557 = scmp.ne.s32.totalorder %s552, %s554
    %p558 = scmp.eq.s32.totalorder %s35, 0
    %p559 = por %p557, %p558
    %p560 = scmp.ne.s32.totalorder %s552, %s554
    %p561 = scmp.eq.s32.totalorder %s40, 2
    %p562 = por %p560, %p561
    %p563 = scmp.ne.s32.totalorder %s554, %s555
    %p564 = scmp.eq.s32.totalorder %s40, 0
    %p565 = por %p563, %p564
    %p566 = scmp.ne.s32.totalorder %s554, %s555
    %p567 = scmp.eq.s32.totalorder %s41, 2
    %p568 = por %p566, %p567
    %p570 = scmp.ne.s32.totalorder %s555, %s569
    %p571 = scmp.eq.s32.totalorder %s41, 0
    %p572 = por %p570, %p571
    %s574 = sadd.s32 %s573, 1
    %p577 = scmp.eq.s32.totalorder %s35, 2
    %p578 = scmp.ne.s32.totalorder %s573, %s575
    %p579 = scmp.eq.s32.totalorder %s35, 0
    %p580 = por %p578, %p579
    %p581 = scmp.ne.s32.totalorder %s573, %s575
    %p582 = scmp.eq.s32.totalorder %s40, 2
    %p583 = por %p581, %p582
    %p584 = scmp.ne.s32.totalorder %s575, %s576
    %p585 = scmp.eq.s32.totalorder %s40, 0
    %p586 = por %p584, %p585
    %p587 = scmp.ne.s32.totalorder %s575, %s576
    %p588 = scmp.eq.s32.totalorder %s41, 2
    %p589 = por %p587, %p588
    %p591 = scmp.ne.s32.totalorder %s576, %s590
    %p592 = scmp.eq.s32.totalorder %s41, 0
    %p593 = por %p591, %p592
    %s594 = ssub.s32 %s35, %s42
    %p595 = scmp.eq.s32.totalorder %s594, 0
    %s597 = sadd.s32 %s596, 1
    %s598 = scalar_select %p595, %s596, %s597
    %p601 = pneg %p595
    %p602 = scmp.eq.s32.totalorder %s35, 2
    %p603 = por %p601, %p602
    %p604 = scmp.ne.s32.totalorder %s596, %s599
    %p605 = scmp.eq.s32.totalorder %s35, 0
    %p606 = por %p604, %p605
    %p607 = scmp.ne.s32.totalorder %s596, %s599
    %p608 = scmp.eq.s32.totalorder %s40, 2
    %p609 = por %p607, %p608
    %p610 = scmp.ne.s32.totalorder %s599, %s600
    %p611 = scmp.eq.s32.totalorder %s40, 0
    %p612 = por %p610, %p611
    %p613 = scmp.ne.s32.totalorder %s599, %s600
    %p614 = scmp.eq.s32.totalorder %s41, 2
    %p615 = por %p613, %p614
    %p617 = scmp.ne.s32.totalorder %s600, %s616
    %p618 = scmp.eq.s32.totalorder %s41, 0
    %p619 = por %p617, %p618
    %s620 = ssub.s32 %s35, %s42
    %p621 = scmp.eq.s32.totalorder %s620, 0
    %s623 = sadd.s32 %s622, 1
    %s624 = scalar_select %p621, %s622, %s623
    %p627 = pneg %p621
    %p628 = scmp.eq.s32.totalorder %s35, 2
    %p629 = por %p627, %p628
    %p630 = scmp.ne.s32.totalorder %s622, %s625
    %p631 = scmp.eq.s32.totalorder %s35, 0
    %p632 = por %p630, %p631
    %p633 = scmp.ne.s32.totalorder %s622, %s625
    %p634 = scmp.eq.s32.totalorder %s40, 2
    %p635 = por %p633, %p634
    %p636 = scmp.ne.s32.totalorder %s625, %s626
    %p637 = scmp.eq.s32.totalorder %s40, 0
    %p638 = por %p636, %p637
    %p639 = scmp.ne.s32.totalorder %s625, %s626
    %p640 = scmp.eq.s32.totalorder %s41, 2
    %p641 = por %p639, %p640
    %p643 = scmp.ne.s32.totalorder %s626, %s642
    %p644 = scmp.eq.s32.totalorder %s41, 0
    %p645 = por %p643, %p644
    %s646 = ssub.s32 %s35, %s42
    %p647 = scmp.eq.s32.totalorder %s646, 0
    %s649 = sadd.s32 %s648, 1
    %s650 = scalar_select %p647, %s648, %s649
    %p653 = pneg %p647
    %p654 = scmp.eq.s32.totalorder %s35, 2
    %p655 = por %p653, %p654
    %p656 = scmp.ne.s32.totalorder %s648, %s651
    %p657 = scmp.eq.s32.totalorder %s35, 0
    %p658 = por %p656, %p657
    %p659 = scmp.ne.s32.totalorder %s648, %s651
    %p660 = scmp.eq.s32.totalorder %s40, 2
    %p661 = por %p659, %p660
    %p662 = scmp.ne.s32.totalorder %s651, %s652
    %p663 = scmp.eq.s32.totalorder %s40, 0
    %p664 = por %p662, %p663
    %p665 = scmp.ne.s32.totalorder %s651, %s652
    %p666 = scmp.eq.s32.totalorder %s41, 2
    %p667 = por %p665, %p666
    %p669 = scmp.ne.s32.totalorder %s652, %s668
    %p670 = scmp.eq.s32.totalorder %s41, 0
    %p671 = por %p669, %p670
    %p672 = scmp.le.s32.totalorder 1, %s35
    %p673 = scmp.lt.s32.totalorder %s35, 4
    %p674 = pnand %p672, %p673
    %p675 = pneg %p674
    // Predicated region
    $region9: #{_lambda_.1} parent=5 // pred_check
      _
    $region10: #{_lambda_.1} parent=5 // pred_check_branch
      %677 = sbr.rel (%p674) target = $region12
    $region11: #{_lambda_.1} parent=5 // pred_region
      %s678 = ssub.s32 %s35, 1
      // Predicated region
      $region13: #{_lambda_.1} parent=11 // pred_check
        %p679 = pneg %p82
      $region14: #{_lambda_.1} parent=11 // pred_check_branch
        %681 = sbr.rel (%p679) target = $region16
      $region15: #{_lambda_.1} parent=11 // pred_region
        _
      $region16: #{_lambda_.1} parent=11 // pred_fallthru
        _
      // Predicated region
      $region17: #{_lambda_.1} parent=11 // pred_check
        %p682 = pneg %p103
      $region18: #{_lambda_.1} parent=11 // pred_check_branch
        %684 = sbr.rel (%p682) target = $region20
      $region19: #{_lambda_.1} parent=11 // pred_region
        _
      $region20: #{_lambda_.1} parent=11 // pred_fallthru
        _
      // Predicated region
      $region21: #{_lambda_.1} parent=11 // pred_check
        %p685 = pneg %p124
      $region22: #{_lambda_.1} parent=11 // pred_check_branch
        %687 = sbr.rel (%p685) target = $region24
      $region23: #{_lambda_.1} parent=11 // pred_region
        _
      $region24: #{_lambda_.1} parent=11 // pred_fallthru
        _
      // Predicated region
      $region25: #{_lambda_.1} parent=11 // pred_check
        %p688 = pneg %p145
      $region26: #{_lambda_.1} parent=11 // pred_check_branch
        %690 = sbr.rel (%p688) target = $region28
      $region27: #{_lambda_.1} parent=11 // pred_region
        _
      $region28: #{_lambda_.1} parent=11 // pred_fallthru
        _
      // Predicated region
      $region29: #{_lambda_.1} parent=11 // pred_check
        %p691 = pneg %p166
      $region30: #{_lambda_.1} parent=11 // pred_check_branch
        %693 = sbr.rel (%p691) target = $region32
      $region31: #{_lambda_.1} parent=11 // pred_region
        _
      $region32: #{_lambda_.1} parent=11 // pred_fallthru
        _
      // Predicated region
      $region33: #{_lambda_.1} parent=11 // pred_check
        %p694 = pneg %p187
      $region34: #{_lambda_.1} parent=11 // pred_check_branch
        %696 = sbr.rel (%p694) target = $region36
      $region35: #{_lambda_.1} parent=11 // pred_region
        _
      $region36: #{_lambda_.1} parent=11 // pred_fallthru
        _
      // Predicated region
      $region37: #{_lambda_.1} parent=11 // pred_check
        %p697 = pneg %p208
      $region38: #{_lambda_.1} parent=11 // pred_check_branch
        %699 = sbr.rel (%p697) target = $region40
      $region39: #{_lambda_.1} parent=11 // pred_region
        _
      $region40: #{_lambda_.1} parent=11 // pred_fallthru
        _
      // Predicated region
      $region41: #{_lambda_.1} parent=11 // pred_check
        %p700 = pneg %p229
      $region42: #{_lambda_.1} parent=11 // pred_check_branch
        %702 = sbr.rel (%p700) target = $region44
      $region43: #{_lambda_.1} parent=11 // pred_region
        _
      $region44: #{_lambda_.1} parent=11 // pred_fallthru
        _
      // Predicated region
      $region45: #{_lambda_.1} parent=11 // pred_check
        %p703 = pneg %p250
      $region46: #{_lambda_.1} parent=11 // pred_check_branch
        %705 = sbr.rel (%p703) target = $region48
      $region47: #{_lambda_.1} parent=11 // pred_region
        _
      $region48: #{_lambda_.1} parent=11 // pred_fallthru
        _
      // Predicated region
      $region49: #{_lambda_.1} parent=11 // pred_check
        %p706 = pneg %p271
      $region50: #{_lambda_.1} parent=11 // pred_check_branch
        %708 = sbr.rel (%p706) target = $region52
      $region51: #{_lambda_.1} parent=11 // pred_region
        _
      $region52: #{_lambda_.1} parent=11 // pred_fallthru
        _
      // Predicated region
      $region53: #{_lambda_.1} parent=11 // pred_check
        %p709 = pneg %p292
      $region54: #{_lambda_.1} parent=11 // pred_check_branch
        %711 = sbr.rel (%p709) target = $region56
      $region55: #{_lambda_.1} parent=11 // pred_region
        _
      $region56: #{_lambda_.1} parent=11 // pred_fallthru
        _
      // Predicated region
      $region57: #{_lambda_.1} parent=11 // pred_check
        %p712 = pneg %p313
      $region58: #{_lambda_.1} parent=11 // pred_check_branch
        %714 = sbr.rel (%p712) target = $region60
      $region59: #{_lambda_.1} parent=11 // pred_region
        _
      $region60: #{_lambda_.1} parent=11 // pred_fallthru
        _
      // Predicated region
      $region61: #{_lambda_.1} parent=11 // pred_check
        %p715 = pneg %p334
      $region62: #{_lambda_.1} parent=11 // pred_check_branch
        %717 = sbr.rel (%p715) target = $region64
      $region63: #{_lambda_.1} parent=11 // pred_region
        _
      $region64: #{_lambda_.1} parent=11 // pred_fallthru
        _
      // Predicated region
      $region65: #{_lambda_.1} parent=11 // pred_check
        %p718 = pneg %p355
      $region66: #{_lambda_.1} parent=11 // pred_check_branch
        %720 = sbr.rel (%p718) target = $region68
      $region67: #{_lambda_.1} parent=11 // pred_region
        _
      $region68: #{_lambda_.1} parent=11 // pred_fallthru
        _
      // Predicated region
      $region69: #{_lambda_.1} parent=11 // pred_check
        %p721 = pneg %p376
      $region70: #{_lambda_.1} parent=11 // pred_check_branch
        %723 = sbr.rel (%p721) target = $region72
      $region71: #{_lambda_.1} parent=11 // pred_region
        _
      $region72: #{_lambda_.1} parent=11 // pred_fallthru
        _
      // Predicated region
      $region73: #{_lambda_.1} parent=11 // pred_check
        %p724 = pneg %p397
      $region74: #{_lambda_.1} parent=11 // pred_check_branch
        %726 = sbr.rel (%p724) target = $region76
      $region75: #{_lambda_.1} parent=11 // pred_region
        _
      $region76: #{_lambda_.1} parent=11 // pred_fallthru
        _
      // Predicated region
      $region77: #{_lambda_.1} parent=11 // pred_check
        %p727 = pneg %p418
      $region78: #{_lambda_.1} parent=11 // pred_check_branch
        %729 = sbr.rel (%p727) target = $region80
      $region79: #{_lambda_.1} parent=11 // pred_region
        _
      $region80: #{_lambda_.1} parent=11 // pred_fallthru
        _
      // Predicated region
      $region81: #{_lambda_.1} parent=11 // pred_check
        %p730 = pneg %p439
      $region82: #{_lambda_.1} parent=11 // pred_check_branch
        %732 = sbr.rel (%p730) target = $region84
      $region83: #{_lambda_.1} parent=11 // pred_region
        _
      $region84: #{_lambda_.1} parent=11 // pred_fallthru
        _
      // Predicated region
      $region85: #{_lambda_.1} parent=11 // pred_check
        %p733 = pneg %p460
      $region86: #{_lambda_.1} parent=11 // pred_check_branch
        %735 = sbr.rel (%p733) target = $region88
      $region87: #{_lambda_.1} parent=11 // pred_region
        _
      $region88: #{_lambda_.1} parent=11 // pred_fallthru
        _
      // Predicated region
      $region89: #{_lambda_.1} parent=11 // pred_check
        %p736 = pneg %p481
      $region90: #{_lambda_.1} parent=11 // pred_check_branch
        %738 = sbr.rel (%p736) target = $region92
      $region91: #{_lambda_.1} parent=11 // pred_region
        _
      $region92: #{_lambda_.1} parent=11 // pred_fallthru
        _
      // Predicated region
      $region93: #{_lambda_.1} parent=11 // pred_check
        %p739 = pneg %p502
      $region94: #{_lambda_.1} parent=11 // pred_check_branch
        %741 = sbr.rel (%p739) target = $region96
      $region95: #{_lambda_.1} parent=11 // pred_region
        _
      $region96: #{_lambda_.1} parent=11 // pred_fallthru
        _
      // Predicated region
      $region97: #{_lambda_.1} parent=11 // pred_check
        %p742 = pneg %p523
      $region98: #{_lambda_.1} parent=11 // pred_check_branch
        %744 = sbr.rel (%p742) target = $region100
      $region99: #{_lambda_.1} parent=11 // pred_region
        _
      $region100: #{_lambda_.1} parent=11 // pred_fallthru
        _
      // Predicated region
      $region101: #{_lambda_.1} parent=11 // pred_check
        %p745 = pneg %p544
      $region102: #{_lambda_.1} parent=11 // pred_check_branch
        %747 = sbr.rel (%p745) target = $region104
      $region103: #{_lambda_.1} parent=11 // pred_region
        _
      $region104: #{_lambda_.1} parent=11 // pred_fallthru
        _
      // Predicated region
      $region105: #{_lambda_.1} parent=11 // pred_check
        %p748 = pneg %p565
      $region106: #{_lambda_.1} parent=11 // pred_check_branch
        %750 = sbr.rel (%p748) target = $region108
      $region107: #{_lambda_.1} parent=11 // pred_region
        _
      $region108: #{_lambda_.1} parent=11 // pred_fallthru
        _
      // Predicated region
      $region109: #{_lambda_.1} parent=11 // pred_check
        %p751 = pneg %p586
      $region110: #{_lambda_.1} parent=11 // pred_check_branch
        %753 = sbr.rel (%p751) target = $region112
      $region111: #{_lambda_.1} parent=11 // pred_region
        _
      $region112: #{_lambda_.1} parent=11 // pred_fallthru
        _
    $region12: #{_lambda_.1} parent=5 // pred_fallthru
      _
    %p754 = scmp.lt.s32.totalorder %s35, 3
    // Predicated region
    $region113: #{_lambda_.1} parent=5 // pred_check
      %p755 = pneg %p754
    $region114: #{_lambda_.1} parent=5 // pred_check_branch
      %757 = sbr.rel (%p755) target = $region116
    $region115: #{_lambda_.1} parent=5 // pred_region
      // Predicated region
      $region117: #{_lambda_.1} parent=115 // pred_check
        %p758 = pneg %p55
      $region118: #{_lambda_.1} parent=115 // pred_check_branch
        %760 = sbr.rel (%p758) target = $region120
      $region119: #{_lambda_.1} parent=115 // pred_region
        %p761 = scmp.lt.s32.totalorder %s35, 2
        %s762 = scalar_select %p761, %s35, 2
        %s763 = smul.addr %s762, 14
        %s764 = smul.addr %s763, 8
        %s765 = scalar_lea.vmem %s0, %s764
      $region120: #{_lambda_.1} parent=115 // pred_fallthru
        _
    $region116: #{_lambda_.1} parent=5 // pred_fallthru
      _
    %p766 = scmp.le.s32.totalorder 1, %s35
    %p767 = scmp.lt.s32.totalorder %s35, 4
    %p768 = pnand %p766, %p767
    %p769 = pneg %p768
    // Predicated region
    $region121: #{_lambda_.1} parent=5 // pred_check
      _
    $region122: #{_lambda_.1} parent=5 // pred_check_branch
      %771 = sbr.rel (%p768) target = $region124
    $region123: #{_lambda_.1} parent=5 // pred_region
      %s772 = ssub.s32 %s35, 1
      %p773 = scmp.lt.s32.totalorder %s40, 2
      %s774 = scalar_select %p773, %s40, 2
      %s775 = smul.addr %s774, 14
      %s776 = smul.addr %s775, 8
      %s777 = scalar_lea.vmem %s0, %s776
      %p778 = pneg %p61
      %p779 = pneg %p58
      %p780 = pneg %p82
      %p781 = pneg %p79
      %p782 = pneg %p103
      %p783 = pneg %p100
      %p784 = pneg %p124
      %p785 = pneg %p121
      %p786 = pneg %p145
      %p787 = pneg %p142
      %p788 = pneg %p166
      %p789 = pneg %p163
      %p790 = pneg %p187
      %p791 = pneg %p184
      %p792 = pneg %p208
      %p793 = pneg %p205
      %p794 = pneg %p229
      %p795 = pneg %p226
      %p796 = pneg %p250
      %p797 = pneg %p247
      %p798 = pneg %p271
      %p799 = pneg %p268
      %p800 = pneg %p292
      %p801 = pneg %p289
      %p802 = pneg %p313
      %p803 = pneg %p310
      %p804 = pneg %p334
      %p805 = pneg %p331
      %p806 = pneg %p355
      %p807 = pneg %p352
      %p808 = pneg %p376
      %p809 = pneg %p373
      %p810 = pneg %p397
      %p811 = pneg %p394
      %p812 = pneg %p418
      %p813 = pneg %p415
      %p814 = pneg %p439
      %p815 = pneg %p436
      %p816 = pneg %p460
      %p817 = pneg %p457
      %p818 = pneg %p481
      %p819 = pneg %p478
      %p820 = pneg %p502
      %p821 = pneg %p499
      %p822 = pneg %p523
      %p823 = pneg %p520
      %p824 = pneg %p544
      %p825 = pneg %p541
      %p826 = pneg %p565
      %p827 = pneg %p562
      %p828 = pneg %p586
      %p829 = pneg %p583
      %p830 = pneg %p612
      %p831 = pneg %p609
      %p832 = scmp.lt.s32.totalorder %s40, 2
      %s833 = scalar_select %p832, %s40, 2
      %s834 = scalar_lea.vmem %s26, %s833
      %p835 = pneg %p638
      %p836 = pneg %p635
      %p837 = scmp.lt.s32.totalorder %s40, 2
      %s838 = scalar_select %p837, %s40, 2
      %s839 = smul.addr %s838, 2
      %s840 = scalar_lea.vmem %s27, %s839
      %p841 = pneg %p664
      %p842 = pneg %p661
      %p843 = scmp.lt.s32.totalorder %s40, 2
      %s844 = scalar_select %p843, %s40, 2
      %s845 = scalar_lea.vmem %s28, %s844
      %p846 = scmp.lt.s32.totalorder %s40, 2
      %s847 = scalar_select %p846, %s40, 2
      %s848 = smul.addr %s847, 14
      %s849 = smul.addr %s848, 8
      %s850 = scalar_lea.vmem %s0, %s849
      %p851 = scmp.lt.s32.totalorder %s40, 2
      %s852 = scalar_select %p851, %s40, 2
      %s853 = scalar_lea.vmem %s26, %s852
      %p854 = scmp.lt.s32.totalorder %s40, 2
      %s855 = scalar_select %p854, %s40, 2
      %s856 = smul.addr %s855, 2
      %s857 = scalar_lea.vmem %s27, %s856
      %p858 = scmp.lt.s32.totalorder %s40, 2
      %s859 = scalar_select %p858, %s40, 2
      %s860 = scalar_lea.vmem %s28, %s859
      %v861 = vld [vmem:[%s1] sm:$0xff]
      %v862 = vld [vmem:[%s1 + $0x8] sm:$0xff]
      %v863 = vld [vmem:[%s1 + $0x10] sm:$0xff]
      %v864 = vld [vmem:[%s1 + $0x18] sm:$0xff]
      %v865 = vld [vmem:[%s1 + $0x20] sm:$0xff]
      %v866 = vld [vmem:[%s1 + $0x28] sm:$0xff]
      %v867 = vld [vmem:[%s1 + $0x30] sm:$0xff]
      %v868 = vld [vmem:[%s1 + $0x38] sm:$0xff]
      %v869 = vld [vmem:[%s1 + $0x40] sm:$0xff]
      %v870 = vld [vmem:[%s1 + $0x48] sm:$0xff]
      %v871 = vld [vmem:[%s1 + $0x50] sm:$0xff]
      %v872 = vld [vmem:[%s1 + $0x58] sm:$0xff]
      %v873 = vld [vmem:[%s1 + $0x60] sm:$0xff]
      %v874 = vld [vmem:[%s1 + $0x68] sm:$0xff]
      %v875 = vld [vmem:[%s1 + $0x70] sm:$0xff]
      %v876 = vld [vmem:[%s1 + $0x78] sm:$0xff]
      %v877 = vld [vmem:[%s1 + $0x80] sm:$0xff]
      %v878 = vld [vmem:[%s1 + $0x88] sm:$0xff]
      %v879 = vld [vmem:[%s1 + $0x90] sm:$0xff]
      %v880 = vld [vmem:[%s1 + $0x98] sm:$0xff]
      %v881 = vld [vmem:[%s1 + $0xa0] sm:$0xff]
      %v882 = vld [vmem:[%s1 + $0xa8] sm:$0xff]
      %v883 = vld [vmem:[%s1 + $0xb0] sm:$0xff]
      %v884 = vld [vmem:[%s1 + $0xb8] sm:$0xff]
      %v885 = vld [vmem:[%s1 + $0xc0] sm:$0xff]
      %v886 = vld [vmem:[%s1 + $0xc8] sm:$0xff]
      %v887 = vld [vmem:[%s1 + $0xd0] sm:$0xff]
      %v888 = vld [vmem:[%s1 + $0xd8] sm:$0xff]
      %v889 = vld [vmem:[%s1 + $0xe0] sm:$0xff]
      %v890 = vld [vmem:[%s1 + $0xe8] sm:$0xff]
      %v891 = vld [vmem:[%s1 + $0xf0] sm:$0xff]
      %v892 = vld [vmem:[%s1 + $0xf8] sm:$0xff]
      %v893 = vld [vmem:[%s850] sm:$0xff]
      %v894 = vld [vmem:[%s850 + $0x8] sm:$0xff]
      %v895 = vld [vmem:[%s850 + $0x10] sm:$0xff]
      %v896 = vld [vmem:[%s850 + $0x18] sm:$0xff]
      %v897 = vld [vmem:[%s850 + $0x20] sm:$0xff]
      %v898 = vld [vmem:[%s850 + $0x28] sm:$0xff]
      %v899 = vld [vmem:[%s850 + $0x30] sm:$0xff]
      %v900 = vld [vmem:[%s850 + $0x38] sm:$0xff]
      %v901 = vld [vmem:[%s850 + $0x40] sm:$0xff]
      %v902 = vld [vmem:[%s850 + $0x48] sm:$0xff]
      %v903 = vld [vmem:[%s850 + $0x50] sm:$0xff]
      %v904 = vld [vmem:[%s850 + $0x58] sm:$0xff]
      %v905 = vld [vmem:[%s850 + $0x60] sm:$0x1]
      %v906 = vld [vmem:[%s850 + $0x68] sm:$0x1]
      %907 = vmatpush.msra.mxu0 %v876
      %908 = vmatpush.msra.mxu0 %v875
      %909 = vmatpush.msra.mxu0 %v874
      %910 = vmatpush.msra.mxu0 %v873
      %911 = vmatpush.msra.mxu0 %v872
      %912 = vmatpush.msra.mxu0 %v871
      %913 = vmatpush.msra.mxu0 %v870
      %914 = vmatpush.msra.mxu0 %v869
      %915 = vmatpush.msra.mxu0 %v868
      %916 = vmatpush.msra.mxu0 %v867
      %917 = vmatpush.msra.mxu0 %v866
      %918 = vmatpush.msra.mxu0 %v865
      %919 = vmatpush.msra.mxu0 %v864
      %920 = vmatpush.msra.mxu0 %v863
      %921 = vmatpush.msra.mxu0 %v862
      %922 = vmatpush.msra.mxu0 %v861
      %923 = vmatmul.f32.gmra.mxu0 %v893
      %v924 = vpop.f32.mrf.mxu0
      %v925 = vadd.f32 0.0, %v924
      %926 = vmatmul.f32.gmra.mxu0 %v895
      %v927 = vpop.f32.mrf.mxu0
      %v928 = vadd.f32 0.0, %v927
      %929 = vmatmul.f32.gmra.mxu0 %v897
      %v930 = vpop.f32.mrf.mxu0
      %v931 = vadd.f32 0.0, %v930
      %932 = vmatmul.f32.gmra.mxu0 %v899
      %v933 = vpop.f32.mrf.mxu0
      %v934 = vadd.f32 0.0, %v933
      %935 = vmatmul.f32.gmra.mxu0 %v901
      %v936 = vpop.f32.mrf.mxu0
      %v937 = vadd.f32 0.0, %v936
      %938 = vmatmul.f32.gmra.mxu0 %v903
      %v939 = vpop.f32.mrf.mxu0
      %v940 = vadd.f32 0.0, %v939
      %941 = vmatmul.f32.gmra.mxu0 %v905
      %v942 = vpop.f32.mrf.mxu0
      %v943 = vadd.f32 0.0, %v942
      %944 = vdwg.mxu0
      %945 = vmatpush.msra.mxu0 %v892
      %946 = vmatpush.msra.mxu0 %v891
      %947 = vmatpush.msra.mxu0 %v890
      %948 = vmatpush.msra.mxu0 %v889
      %949 = vmatpush.msra.mxu0 %v888
      %950 = vmatpush.msra.mxu0 %v887
      %951 = vmatpush.msra.mxu0 %v886
      %952 = vmatpush.msra.mxu0 %v885
      %953 = vmatpush.msra.mxu0 %v884
      %954 = vmatpush.msra.mxu0 %v883
      %955 = vmatpush.msra.mxu0 %v882
      %956 = vmatpush.msra.mxu0 %v881
      %957 = vmatpush.msra.mxu0 %v880
      %958 = vmatpush.msra.mxu0 %v879
      %959 = vmatpush.msra.mxu0 %v878
      %960 = vmatpush.msra.mxu0 %v877
      %961 = vmatmul.f32.gmra.mxu0 %v894
      %v962 = vpop.f32.mrf.mxu0
      %v963 = vadd.f32 %v925, %v962
      %964 = vmatmul.f32.gmra.mxu0 %v896
      %v965 = vpop.f32.mrf.mxu0
      %v966 = vadd.f32 %v928, %v965
      %967 = vmatmul.f32.gmra.mxu0 %v898
      %v968 = vpop.f32.mrf.mxu0
      %v969 = vadd.f32 %v931, %v968
      %970 = vmatmul.f32.gmra.mxu0 %v900
      %v971 = vpop.f32.mrf.mxu0
      %v972 = vadd.f32 %v934, %v971
      %973 = vmatmul.f32.gmra.mxu0 %v902
      %v974 = vpop.f32.mrf.mxu0
      %v975 = vadd.f32 %v937, %v974
      %976 = vmatmul.f32.gmra.mxu0 %v904
      %v977 = vpop.f32.mrf.mxu0
      %v978 = vadd.f32 %v940, %v977
      %979 = vmatmul.f32.gmra.mxu0 %v906
      %v980 = vpop.f32.mrf.mxu0
      %v981 = vadd.f32 %v943, %v980
      %982 = vdwg.mxu0
      %v983 = vld [vmem:[%s2] sm:$0xff]
      %v984 = vld [vmem:[%s2 + $0x8] sm:$0xff]
      %v985 = vld [vmem:[%s2 + $0x10] sm:$0xff]
      %v986 = vld [vmem:[%s2 + $0x18] sm:$0xff]
      %v987 = vld [vmem:[%s2 + $0x20] sm:$0xff]
      %v988 = vld [vmem:[%s2 + $0x28] sm:$0xff]
      %v989 = vld [vmem:[%s2 + $0x30] sm:$0xff]
      %v990 = vld [vmem:[%s2 + $0x38] sm:$0xff]
      %v991 = vld [vmem:[%s2 + $0x40] sm:$0xff]
      %v992 = vld [vmem:[%s2 + $0x48] sm:$0xff]
      %v993 = vld [vmem:[%s2 + $0x50] sm:$0xff]
      %v994 = vld [vmem:[%s2 + $0x58] sm:$0xff]
      %v995 = vld [vmem:[%s2 + $0x60] sm:$0xff]
      %v996 = vld [vmem:[%s2 + $0x68] sm:$0xff]
      %v997 = vld [vmem:[%s2 + $0x70] sm:$0xff]
      %v998 = vld [vmem:[%s2 + $0x78] sm:$0xff]
      %v999 = vld [vmem:[%s2 + $0x80] sm:$0xff]
      %v1000 = vld [vmem:[%s2 + $0x88] sm:$0xff]
      %v1001 = vld [vmem:[%s4] sm:$0xff]
      %v1002 = vld [vmem:[%s4 + $0x8] sm:$0xff]
      %v1003 = vld [vmem:[%s4 + $0x10] sm:$0xff]
      %v1004 = vld [vmem:[%s4 + $0x18] sm:$0xff]
      %v1005 = vld [vmem:[%s4 + $0x20] sm:$0xff]
      %v1006 = vld [vmem:[%s4 + $0x28] sm:$0xff]
      %v1007 = vld [vmem:[%s4 + $0x30] sm:$0xff]
      %v1008 = vld [vmem:[%s4 + $0x38] sm:$0xff]
      %v1009 = vld [vmem:[%s4 + $0x40] sm:$0xff]
      %v1010 = vld [vmem:[%s4 + $0x48] sm:$0xff]
      %v1011 = vld [vmem:[%s4 + $0x50] sm:$0xff]
      %v1012 = vld [vmem:[%s4 + $0x58] sm:$0xff]
      %v1013 = vld [vmem:[%s4 + $0x60] sm:$0xff]
      %v1014 = vld [vmem:[%s4 + $0x68] sm:$0xff]
      %v1015 = vld [vmem:[%s4 + $0x70] sm:$0xff]
      %v1016 = vld [vmem:[%s4 + $0x78] sm:$0xff]
      %v1017 = vld [vmem:[%s4 + $0x80] sm:$0xff]
      %v1018 = vld [vmem:[%s4 + $0x88] sm:$0xff]
      %v1019 = vld [vmem:[%s3] sm:$0xff]
      %v1020 = vld [vmem:[%s3 + $0x8] sm:$0xff]
      %vm1021 = vcmask 400384
      %v1023 = vsel %vm1021, %v1019, 0
      %v1026 = vsel %vm1021, %v1020, 0
      %vm1028 = vcmask 1040384
      %v1030 = vsel %vm1028, %v981, 0
      %1032 = vmatpush.msra.mxu0 0.0
      %1033 = vmatpush.msra.mxu0 0.0
      %1034 = vmatpush.msra.mxu0 0.0
      %1035 = vmatpush.msra.mxu0 0.0
      %1036 = vmatpush.msra.mxu0 0.0
      %1037 = vmatpush.msra.mxu0 0.0
      %1038 = vmatpush.msra.mxu0 0.0
      %1039 = vmatpush.msra.mxu0 0.0
      %1040 = vmatpush.msra.mxu0 0.0
      %1041 = vmatpush.msra.mxu0 %v1030
      %1042 = vmatpush.msra.mxu0 %v978
      %1043 = vmatpush.msra.mxu0 %v975
      %1044 = vmatpush.msra.mxu0 %v972
      %1045 = vmatpush.msra.mxu0 %v969
      %1046 = vmatpush.msra.mxu0 %v966
      %1047 = vmatpush.msra.mxu0 %v963
      %1048 = vmatmul.f32.gmra.mxu0 %v1023
      %v1049 = vpop.f32.mrf.mxu0
      %v1050 = vadd.f32 0.0, %v1049
      %1051 = vmatmul.f32.gmra.mxu0 %v1026
      %v1052 = vpop.f32.mrf.mxu0
      %v1053 = vadd.f32 0.0, %v1052
      %1054 = vdwg.mxu0
      %v1055 = vld [vmem:[%s12] sm:$0xff]
      %v1056 = vld [vmem:[%s12 + $0x8] sm:$0xff]
      %v1057 = vld [vmem:[%s12 + $0x10] sm:$0xff]
      %v1058 = vld [vmem:[%s12 + $0x18] sm:$0xff]
      %v1059 = vld [vmem:[%s13] sm:$0x1]
      %v1061 = vperm.slane %v1059, 0
      %vm1063 = vcmask 261120
      %v1065 = vsel %vm1063, %v1050, 0
      %v1068 = vsel %vm1063, %v1053, 0
      %1070 = vmatpush.msra.mxu0 0.0
      %1071 = vmatpush.msra.mxu0 0.0
      %1072 = vmatpush.msra.mxu0 0.0
      %1073 = vmatpush.msra.mxu0 0.0
      %1074 = vmatpush.msra.mxu0 0.0
      %1075 = vmatpush.msra.mxu0 0.0
      %1076 = vmatpush.msra.mxu0 0.0
      %1077 = vmatpush.msra.mxu0 0.0
      %1078 = vmatpush.msra.mxu0 0.0
      %1079 = vmatpush.msra.mxu0 0.0
      %1080 = vmatpush.msra.mxu0 0.0
      %1081 = vmatpush.msra.mxu0 0.0
      %1082 = vmatpush.msra.mxu0 %v1058
      %1083 = vmatpush.msra.mxu0 %v1057
      %1084 = vmatpush.msra.mxu0 %v1056
      %1085 = vmatpush.msra.mxu0 %v1055
      %1086 = vmatmul.f32.gmra.mxu0 %v1065
      %v1087 = vpop.f32.mrf.mxu0
      %v1088 = vadd.f32 %v1061, %v1087
      %1089 = vmatmul.f32.gmra.mxu0 %v1068
      %v1090 = vpop.f32.mrf.mxu0
      %v1091 = vadd.f32 %v1061, %v1090
      %1092 = vdwg.mxu0
      %v1093 = vld [vmem:[%s5] sm:$0xff]
      %v1094 = vld [vmem:[%s5 + $0x8] sm:$0xff]
      %v1095 = vld [vmem:[%s5 + $0x10] sm:$0xff]
      %v1096 = vld [vmem:[%s5 + $0x18] sm:$0xff]
      %v1097 = vld [vmem:[%s7] sm:$0x1]
      %v1098 = vld [vmem:[%s8] sm:$0xff]
      %v1099 = vld [vmem:[%s8 + $0x8] sm:$0xff]
      %v1100 = vld [vmem:[%s8 + $0x10] sm:$0xff]
      %v1101 = vld [vmem:[%s8 + $0x18] sm:$0xff]
      %v1102 = vld [vmem:[%s8 + $0x20] sm:$0xff]
      %v1103 = vld [vmem:[%s8 + $0x28] sm:$0xff]
      %v1104 = vld [vmem:[%s8 + $0x30] sm:$0xff]
      %v1105 = vld [vmem:[%s8 + $0x38] sm:$0xff]
      %v1106 = vld [vmem:[%s8 + $0x40] sm:$0xff]
      %v1107 = vld [vmem:[%s8 + $0x48] sm:$0xff]
      %v1108 = vld [vmem:[%s8 + $0x50] sm:$0xff]
      %v1109 = vld [vmem:[%s8 + $0x58] sm:$0xff]
      %v1110 = vld [vmem:[%s8 + $0x60] sm:$0xff]
      %v1111 = vld [vmem:[%s8 + $0x68] sm:$0xff]
      %v1112 = vld [vmem:[%s8 + $0x70] sm:$0xff]
      %v1113 = vld [vmem:[%s8 + $0x78] sm:$0xff]
      %v1114 = vld [vmem:[%s8 + $0x80] sm:$0xff]
      %v1115 = vld [vmem:[%s8 + $0x88] sm:$0xff]
      %v1116 = vld [vmem:[%s9] sm:$0x1]
      %v1117 = vld [vmem:[%s10] sm:$0xff]
      %v1118 = vld [vmem:[%s10 + $0x8] sm:$0xff]
      %v1119 = vld [vmem:[%s11] sm:$0x1]
      %v1121 = vperm.slane %v1097, 0
      %v1124 = vsel %vm1063, %v963, 0
      %v1127 = vsel %vm1063, %v966, 0
      %v1130 = vsel %vm1063, %v969, 0
      %v1133 = vsel %vm1063, %v972, 0
      %v1136 = vsel %vm1063, %v975, 0
      %v1139 = vsel %vm1063, %v978, 0
      %v1141 = vsel %vm1063, %v981, 0
      %1143 = vmatpush.msra.mxu0 0.0
      %1144 = vmatpush.msra.mxu0 0.0
      %1145 = vmatpush.msra.mxu0 0.0
      %1146 = vmatpush.msra.mxu0 0.0
      %1147 = vmatpush.msra.mxu0 0.0
      %1148 = vmatpush.msra.mxu0 0.0
      %1149 = vmatpush.msra.mxu0 0.0
      %1150 = vmatpush.msra.mxu0 0.0
      %1151 = vmatpush.msra.mxu0 0.0
      %1152 = vmatpush.msra.mxu0 0.0
      %1153 = vmatpush.msra.mxu0 0.0
      %1154 = vmatpush.msra.mxu0 0.0
      %1155 = vmatpush.msra.mxu0 %v1096
      %1156 = vmatpush.msra.mxu0 %v1095
      %1157 = vmatpush.msra.mxu0 %v1094
      %1158 = vmatpush.msra.mxu0 %v1093
      %1159 = vmatmul.f32.gmra.mxu0 %v1124
      %v1160 = vpop.f32.mrf.mxu0
      %v1161 = vadd.f32 %v1121, %v1160
      %1162 = vmatmul.f32.gmra.mxu0 %v1127
      %v1163 = vpop.f32.mrf.mxu0
      %v1164 = vadd.f32 %v1121, %v1163
      %1165 = vmatmul.f32.gmra.mxu0 %v1130
      %v1166 = vpop.f32.mrf.mxu0
      %v1167 = vadd.f32 %v1121, %v1166
      %1168 = vmatmul.f32.gmra.mxu0 %v1133
      %v1169 = vpop.f32.mrf.mxu0
      %v1170 = vadd.f32 %v1121, %v1169
      %1171 = vmatmul.f32.gmra.mxu0 %v1136
      %v1172 = vpop.f32.mrf.mxu0
      %v1173 = vadd.f32 %v1121, %v1172
      %1174 = vmatmul.f32.gmra.mxu0 %v1139
      %v1175 = vpop.f32.mrf.mxu0
      %v1176 = vadd.f32 %v1121, %v1175
      %1177 = vmatmul.f32.gmra.mxu0 %v1141
      %v1178 = vpop.f32.mrf.mxu0
      %v1179 = vadd.f32 %v1121, %v1178
      %1180 = vdwg.mxu0
      %v1181 = vmax.f32 %v1161, 0.0
      %v1182 = vmax.f32 %v1164, 0.0
      %v1183 = vmax.f32 %v1167, 0.0
      %v1184 = vmax.f32 %v1170, 0.0
      %v1185 = vmax.f32 %v1173, 0.0
      %v1186 = vmax.f32 %v1176, 0.0
      %v1187 = vmax.f32 %v1179, 0.0
      %v1189 = vsel %vm1021, %v983, 0
      %v1192 = vsel %vm1021, %v984, 0
      %v1195 = vsel %vm1028, %v1187, 0
      %1197 = vmatpush.msra.mxu0 0.0
      %1198 = vmatpush.msra.mxu0 0.0
      %1199 = vmatpush.msra.mxu0 0.0
      %1200 = vmatpush.msra.mxu0 0.0
      %1201 = vmatpush.msra.mxu0 0.0
      %1202 = vmatpush.msra.mxu0 0.0
      %1203 = vmatpush.msra.mxu0 0.0
      %1204 = vmatpush.msra.mxu0 0.0
      %1205 = vmatpush.msra.mxu0 0.0
      %1206 = vmatpush.msra.mxu0 %v1195
      %1207 = vmatpush.msra.mxu0 %v1186
      %1208 = vmatpush.msra.mxu0 %v1185
      %1209 = vmatpush.msra.mxu0 %v1184
      %1210 = vmatpush.msra.mxu0 %v1183
      %1211 = vmatpush.msra.mxu0 %v1182
      %1212 = vmatpush.msra.mxu0 %v1181
      %1213 = vmatmul.f32.gmra.mxu0 %v1189
      %v1214 = vpop.f32.mrf.mxu0
      %v1215 = vadd.f32 0.0, %v1214
      %1216 = vmatmul.f32.gmra.mxu0 %v1192
      %v1217 = vpop.f32.mrf.mxu0
      %v1218 = vadd.f32 0.0, %v1217
      %1219 = vdwg.mxu0
      %vm1220 = vcmask 130048
      %v1222 = vsel %vm1220, %v1215, 0
      %v1225 = vsel %vm1220, %v1218, 0
      %1227 = vmatpush.msra.mxu0 0.0
      %1228 = vmatpush.msra.mxu0 0.0
      %1229 = vmatpush.msra.mxu0 0.0
      %1230 = vmatpush.msra.mxu0 0.0
      %1231 = vmatpush.msra.mxu0 0.0
      %1232 = vmatpush.msra.mxu0 0.0
      %1233 = vmatpush.msra.mxu0 0.0
      %1234 = vmatpush.msra.mxu0 0.0
      %1235 = vmatpush.msra.mxu0 0.0
      %1236 = vmatpush.msra.mxu0 0.0
      %1237 = vmatpush.msra.mxu0 0.0
      %1238 = vmatpush.msra.mxu0 0.0
      %1239 = vmatpush.msra.mxu0 0.0
      %1240 = vmatpush.msra.mxu0 0.0
      %1241 = vmatpush.msra.mxu0 %v1099
      %1242 = vmatpush.msra.mxu0 %v1098
      %1243 = vmatmul.f32.gmra.mxu0 %v1222
      %v1244 = vpop.f32.mrf.mxu0
      %v1245 = vadd.f32 0.0, %v1244
      %1246 = vmatmul.f32.gmra.mxu0 %v1225
      %v1247 = vpop.f32.mrf.mxu0
      %v1248 = vadd.f32 0.0, %v1247
      %1249 = vdwg.mxu0
      %v1251 = vperm.slane %v1116, 0
      %v1253 = vadd.f32 %v1251, %v1245
      %v1254 = vadd.f32 %v1251, %v1248
      %v1256 = vsel %vm1021, %v985, 0
      %v1259 = vsel %vm1021, %v986, 0
      %1261 = vmatpush.msra.mxu0 0.0
      %1262 = vmatpush.msra.mxu0 0.0
      %1263 = vmatpush.msra.mxu0 0.0
      %1264 = vmatpush.msra.mxu0 0.0
      %1265 = vmatpush.msra.mxu0 0.0
      %1266 = vmatpush.msra.mxu0 0.0
      %1267 = vmatpush.msra.mxu0 0.0
      %1268 = vmatpush.msra.mxu0 0.0
      %1269 = vmatpush.msra.mxu0 0.0
      %1270 = vmatpush.msra.mxu0 %v1195
      %1271 = vmatpush.msra.mxu0 %v1186
      %1272 = vmatpush.msra.mxu0 %v1185
      %1273 = vmatpush.msra.mxu0 %v1184
      %1274 = vmatpush.msra.mxu0 %v1183
      %1275 = vmatpush.msra.mxu0 %v1182
      %1276 = vmatpush.msra.mxu0 %v1181
      %1277 = vmatmul.f32.gmra.mxu0 %v1256
      %v1278 = vpop.f32.mrf.mxu0
      %v1279 = vadd.f32 0.0, %v1278
      %1280 = vmatmul.f32.gmra.mxu0 %v1259
      %v1281 = vpop.f32.mrf.mxu0
      %v1282 = vadd.f32 0.0, %v1281
      %1283 = vdwg.mxu0
      %v1285 = vsel %vm1220, %v1279, 0
      %v1288 = vsel %vm1220, %v1282, 0
      %1290 = vmatpush.msra.mxu0 0.0
      %1291 = vmatpush.msra.mxu0 0.0
      %1292 = vmatpush.msra.mxu0 0.0
      %1293 = vmatpush.msra.mxu0 0.0
      %1294 = vmatpush.msra.mxu0 0.0
      %1295 = vmatpush.msra.mxu0 0.0
      %1296 = vmatpush.msra.mxu0 0.0
      %1297 = vmatpush.msra.mxu0 0.0
      %1298 = vmatpush.msra.mxu0 0.0
      %1299 = vmatpush.msra.mxu0 0.0
      %1300 = vmatpush.msra.mxu0 0.0
      %1301 = vmatpush.msra.mxu0 0.0
      %1302 = vmatpush.msra.mxu0 0.0
      %1303 = vmatpush.msra.mxu0 0.0
      %1304 = vmatpush.msra.mxu0 %v1101
      %1305 = vmatpush.msra.mxu0 %v1100
      %1306 = vmatmul.f32.gmra.mxu0 %v1285
      %v1307 = vpop.f32.mrf.mxu0
      %v1308 = vadd.f32 0.0, %v1307
      %1309 = vmatmul.f32.gmra.mxu0 %v1288
      %v1310 = vpop.f32.mrf.mxu0
      %v1311 = vadd.f32 0.0, %v1310
      %1312 = vdwg.mxu0
      %v1313 = vadd.f32 %v1253, %v1308
      %v1314 = vadd.f32 %v1254, %v1311
      %v1316 = vsel %vm1021, %v987, 0
      %v1319 = vsel %vm1021, %v988, 0
      %1321 = vmatpush.msra.mxu0 0.0
      %1322 = vmatpush.msra.mxu0 0.0
      %1323 = vmatpush.msra.mxu0 0.0
      %1324 = vmatpush.msra.mxu0 0.0
      %1325 = vmatpush.msra.mxu0 0.0
      %1326 = vmatpush.msra.mxu0 0.0
      %1327 = vmatpush.msra.mxu0 0.0
      %1328 = vmatpush.msra.mxu0 0.0
      %1329 = vmatpush.msra.mxu0 0.0
      %1330 = vmatpush.msra.mxu0 %v1195
      %1331 = vmatpush.msra.mxu0 %v1186
      %1332 = vmatpush.msra.mxu0 %v1185
      %1333 = vmatpush.msra.mxu0 %v1184
      %1334 = vmatpush.msra.mxu0 %v1183
      %1335 = vmatpush.msra.mxu0 %v1182
      %1336 = vmatpush.msra.mxu0 %v1181
      %1337 = vmatmul.f32.gmra.mxu0 %v1316
      %v1338 = vpop.f32.mrf.mxu0
      %v1339 = vadd.f32 0.0, %v1338
      %1340 = vmatmul.f32.gmra.mxu0 %v1319
      %v1341 = vpop.f32.mrf.mxu0
      %v1342 = vadd.f32 0.0, %v1341
      %1343 = vdwg.mxu0
      %v1345 = vsel %vm1220, %v1339, 0
      %v1348 = vsel %vm1220, %v1342, 0
      %1350 = vmatpush.msra.mxu0 0.0
      %1351 = vmatpush.msra.mxu0 0.0
      %1352 = vmatpush.msra.mxu0 0.0
      %1353 = vmatpush.msra.mxu0 0.0
      %1354 = vmatpush.msra.mxu0 0.0
      %1355 = vmatpush.msra.mxu0 0.0
      %1356 = vmatpush.msra.mxu0 0.0
      %1357 = vmatpush.msra.mxu0 0.0
      %1358 = vmatpush.msra.mxu0 0.0
      %1359 = vmatpush.msra.mxu0 0.0
      %1360 = vmatpush.msra.mxu0 0.0
      %1361 = vmatpush.msra.mxu0 0.0
      %1362 = vmatpush.msra.mxu0 0.0
      %1363 = vmatpush.msra.mxu0 0.0
      %1364 = vmatpush.msra.mxu0 %v1103
      %1365 = vmatpush.msra.mxu0 %v1102
      %1366 = vmatmul.f32.gmra.mxu0 %v1345
      %v1367 = vpop.f32.mrf.mxu0
      %v1368 = vadd.f32 0.0, %v1367
      %1369 = vmatmul.f32.gmra.mxu0 %v1348
      %v1370 = vpop.f32.mrf.mxu0
      %v1371 = vadd.f32 0.0, %v1370
      %1372 = vdwg.mxu0
      %v1373 = vadd.f32 %v1313, %v1368
      %v1374 = vadd.f32 %v1314, %v1371
      %v1376 = vsel %vm1021, %v989, 0
      %v1379 = vsel %vm1021, %v990, 0
      %1381 = vmatpush.msra.mxu0 0.0
      %1382 = vmatpush.msra.mxu0 0.0
      %1383 = vmatpush.msra.mxu0 0.0
      %1384 = vmatpush.msra.mxu0 0.0
      %1385 = vmatpush.msra.mxu0 0.0
      %1386 = vmatpush.msra.mxu0 0.0
      %1387 = vmatpush.msra.mxu0 0.0
      %1388 = vmatpush.msra.mxu0 0.0
      %1389 = vmatpush.msra.mxu0 0.0
      %1390 = vmatpush.msra.mxu0 %v1195
      %1391 = vmatpush.msra.mxu0 %v1186
      %1392 = vmatpush.msra.mxu0 %v1185
      %1393 = vmatpush.msra.mxu0 %v1184
      %1394 = vmatpush.msra.mxu0 %v1183
      %1395 = vmatpush.msra.mxu0 %v1182
      %1396 = vmatpush.msra.mxu0 %v1181
      %1397 = vmatmul.f32.gmra.mxu0 %v1376
      %v1398 = vpop.f32.mrf.mxu0
      %v1399 = vadd.f32 0.0, %v1398
      %1400 = vmatmul.f32.gmra.mxu0 %v1379
      %v1401 = vpop.f32.mrf.mxu0
      %v1402 = vadd.f32 0.0, %v1401
      %1403 = vdwg.mxu0
      %v1405 = vsel %vm1220, %v1399, 0
      %v1408 = vsel %vm1220, %v1402, 0
      %1410 = vmatpush.msra.mxu0 0.0
      %1411 = vmatpush.msra.mxu0 0.0
      %1412 = vmatpush.msra.mxu0 0.0
      %1413 = vmatpush.msra.mxu0 0.0
      %1414 = vmatpush.msra.mxu0 0.0
      %1415 = vmatpush.msra.mxu0 0.0
      %1416 = vmatpush.msra.mxu0 0.0
      %1417 = vmatpush.msra.mxu0 0.0
      %1418 = vmatpush.msra.mxu0 0.0
      %1419 = vmatpush.msra.mxu0 0.0
      %1420 = vmatpush.msra.mxu0 0.0
      %1421 = vmatpush.msra.mxu0 0.0
      %1422 = vmatpush.msra.mxu0 0.0
      %1423 = vmatpush.msra.mxu0 0.0
      %1424 = vmatpush.msra.mxu0 %v1105
      %1425 = vmatpush.msra.mxu0 %v1104
      %1426 = vmatmul.f32.gmra.mxu0 %v1405
      %v1427 = vpop.f32.mrf.mxu0
      %v1428 = vadd.f32 0.0, %v1427
      %1429 = vmatmul.f32.gmra.mxu0 %v1408
      %v1430 = vpop.f32.mrf.mxu0
      %v1431 = vadd.f32 0.0, %v1430
      %1432 = vdwg.mxu0
      %v1433 = vadd.f32 %v1373, %v1428
      %v1434 = vadd.f32 %v1374, %v1431
      %v1436 = vsel %vm1021, %v991, 0
      %v1439 = vsel %vm1021, %v992, 0
      %1441 = vmatpush.msra.mxu0 0.0
      %1442 = vmatpush.msra.mxu0 0.0
      %1443 = vmatpush.msra.mxu0 0.0
      %1444 = vmatpush.msra.mxu0 0.0
      %1445 = vmatpush.msra.mxu0 0.0
      %1446 = vmatpush.msra.mxu0 0.0
      %1447 = vmatpush.msra.mxu0 0.0
      %1448 = vmatpush.msra.mxu0 0.0
      %1449 = vmatpush.msra.mxu0 0.0
      %1450 = vmatpush.msra.mxu0 %v1195
      %1451 = vmatpush.msra.mxu0 %v1186
      %1452 = vmatpush.msra.mxu0 %v1185
      %1453 = vmatpush.msra.mxu0 %v1184
      %1454 = vmatpush.msra.mxu0 %v1183
      %1455 = vmatpush.msra.mxu0 %v1182
      %1456 = vmatpush.msra.mxu0 %v1181
      %1457 = vmatmul.f32.gmra.mxu0 %v1436
      %v1458 = vpop.f32.mrf.mxu0
      %v1459 = vadd.f32 0.0, %v1458
      %1460 = vmatmul.f32.gmra.mxu0 %v1439
      %v1461 = vpop.f32.mrf.mxu0
      %v1462 = vadd.f32 0.0, %v1461
      %1463 = vdwg.mxu0
      %v1465 = vsel %vm1220, %v1459, 0
      %v1468 = vsel %vm1220, %v1462, 0
      %1470 = vmatpush.msra.mxu0 0.0
      %1471 = vmatpush.msra.mxu0 0.0
      %1472 = vmatpush.msra.mxu0 0.0
      %1473 = vmatpush.msra.mxu0 0.0
      %1474 = vmatpush.msra.mxu0 0.0
      %1475 = vmatpush.msra.mxu0 0.0
      %1476 = vmatpush.msra.mxu0 0.0
      %1477 = vmatpush.msra.mxu0 0.0
      %1478 = vmatpush.msra.mxu0 0.0
      %1479 = vmatpush.msra.mxu0 0.0
      %1480 = vmatpush.msra.mxu0 0.0
      %1481 = vmatpush.msra.mxu0 0.0
      %1482 = vmatpush.msra.mxu0 0.0
      %1483 = vmatpush.msra.mxu0 0.0
      %1484 = vmatpush.msra.mxu0 %v1107
      %1485 = vmatpush.msra.mxu0 %v1106
      %1486 = vmatmul.f32.gmra.mxu0 %v1465
      %v1487 = vpop.f32.mrf.mxu0
      %v1488 = vadd.f32 0.0, %v1487
      %1489 = vmatmul.f32.gmra.mxu0 %v1468
      %v1490 = vpop.f32.mrf.mxu0
      %v1491 = vadd.f32 0.0, %v1490
      %1492 = vdwg.mxu0
      %v1493 = vadd.f32 %v1433, %v1488
      %v1494 = vadd.f32 %v1434, %v1491
      %v1496 = vsel %vm1021, %v993, 0
      %v1499 = vsel %vm1021, %v994, 0
      %1501 = vmatpush.msra.mxu0 0.0
      %1502 = vmatpush.msra.mxu0 0.0
      %1503 = vmatpush.msra.mxu0 0.0
      %1504 = vmatpush.msra.mxu0 0.0
      %1505 = vmatpush.msra.mxu0 0.0
      %1506 = vmatpush.msra.mxu0 0.0
      %1507 = vmatpush.msra.mxu0 0.0
      %1508 = vmatpush.msra.mxu0 0.0
      %1509 = vmatpush.msra.mxu0 0.0
      %1510 = vmatpush.msra.mxu0 %v1195
      %1511 = vmatpush.msra.mxu0 %v1186
      %1512 = vmatpush.msra.mxu0 %v1185
      %1513 = vmatpush.msra.mxu0 %v1184
      %1514 = vmatpush.msra.mxu0 %v1183
      %1515 = vmatpush.msra.mxu0 %v1182
      %1516 = vmatpush.msra.mxu0 %v1181
      %1517 = vmatmul.f32.gmra.mxu0 %v1496
      %v1518 = vpop.f32.mrf.mxu0
      %v1519 = vadd.f32 0.0, %v1518
      %1520 = vmatmul.f32.gmra.mxu0 %v1499
      %v1521 = vpop.f32.mrf.mxu0
      %v1522 = vadd.f32 0.0, %v1521
      %1523 = vdwg.mxu0
      %v1525 = vsel %vm1220, %v1519, 0
      %v1528 = vsel %vm1220, %v1522, 0
      %1530 = vmatpush.msra.mxu0 0.0
      %1531 = vmatpush.msra.mxu0 0.0
      %1532 = vmatpush.msra.mxu0 0.0
      %1533 = vmatpush.msra.mxu0 0.0
      %1534 = vmatpush.msra.mxu0 0.0
      %1535 = vmatpush.msra.mxu0 0.0
      %1536 = vmatpush.msra.mxu0 0.0
      %1537 = vmatpush.msra.mxu0 0.0
      %1538 = vmatpush.msra.mxu0 0.0
      %1539 = vmatpush.msra.mxu0 0.0
      %1540 = vmatpush.msra.mxu0 0.0
      %1541 = vmatpush.msra.mxu0 0.0
      %1542 = vmatpush.msra.mxu0 0.0
      %1543 = vmatpush.msra.mxu0 0.0
      %1544 = vmatpush.msra.mxu0 %v1109
      %1545 = vmatpush.msra.mxu0 %v1108
      %1546 = vmatmul.f32.gmra.mxu0 %v1525
      %v1547 = vpop.f32.mrf.mxu0
      %v1548 = vadd.f32 0.0, %v1547
      %1549 = vmatmul.f32.gmra.mxu0 %v1528
      %v1550 = vpop.f32.mrf.mxu0
      %v1551 = vadd.f32 0.0, %v1550
      %1552 = vdwg.mxu0
      %v1553 = vadd.f32 %v1493, %v1548
      %v1554 = vadd.f32 %v1494, %v1551
      %v1556 = vsel %vm1021, %v995, 0
      %v1559 = vsel %vm1021, %v996, 0
      %1561 = vmatpush.msra.mxu0 0.0
      %1562 = vmatpush.msra.mxu0 0.0
      %1563 = vmatpush.msra.mxu0 0.0
      %1564 = vmatpush.msra.mxu0 0.0
      %1565 = vmatpush.msra.mxu0 0.0
      %1566 = vmatpush.msra.mxu0 0.0
      %1567 = vmatpush.msra.mxu0 0.0
      %1568 = vmatpush.msra.mxu0 0.0
      %1569 = vmatpush.msra.mxu0 0.0
      %1570 = vmatpush.msra.mxu0 %v1195
      %1571 = vmatpush.msra.mxu0 %v1186
      %1572 = vmatpush.msra.mxu0 %v1185
      %1573 = vmatpush.msra.mxu0 %v1184
      %1574 = vmatpush.msra.mxu0 %v1183
      %1575 = vmatpush.msra.mxu0 %v1182
      %1576 = vmatpush.msra.mxu0 %v1181
      %1577 = vmatmul.f32.gmra.mxu0 %v1556
      %v1578 = vpop.f32.mrf.mxu0
      %v1579 = vadd.f32 0.0, %v1578
      %1580 = vmatmul.f32.gmra.mxu0 %v1559
      %v1581 = vpop.f32.mrf.mxu0
      %v1582 = vadd.f32 0.0, %v1581
      %1583 = vdwg.mxu0
      %v1585 = vsel %vm1220, %v1579, 0
      %v1588 = vsel %vm1220, %v1582, 0
      %1590 = vmatpush.msra.mxu0 0.0
      %1591 = vmatpush.msra.mxu0 0.0
      %1592 = vmatpush.msra.mxu0 0.0
      %1593 = vmatpush.msra.mxu0 0.0
      %1594 = vmatpush.msra.mxu0 0.0
      %1595 = vmatpush.msra.mxu0 0.0
      %1596 = vmatpush.msra.mxu0 0.0
      %1597 = vmatpush.msra.mxu0 0.0
      %1598 = vmatpush.msra.mxu0 0.0
      %1599 = vmatpush.msra.mxu0 0.0
      %1600 = vmatpush.msra.mxu0 0.0
      %1601 = vmatpush.msra.mxu0 0.0
      %1602 = vmatpush.msra.mxu0 0.0
      %1603 = vmatpush.msra.mxu0 0.0
      %1604 = vmatpush.msra.mxu0 %v1111
      %1605 = vmatpush.msra.mxu0 %v1110
      %1606 = vmatmul.f32.gmra.mxu0 %v1585
      %v1607 = vpop.f32.mrf.mxu0
      %v1608 = vadd.f32 0.0, %v1607
      %1609 = vmatmul.f32.gmra.mxu0 %v1588
      %v1610 = vpop.f32.mrf.mxu0
      %v1611 = vadd.f32 0.0, %v1610
      %1612 = vdwg.mxu0
      %v1613 = vadd.f32 %v1553, %v1608
      %v1614 = vadd.f32 %v1554, %v1611
      %v1616 = vsel %vm1021, %v997, 0
      %v1619 = vsel %vm1021, %v998, 0
      %1621 = vmatpush.msra.mxu0 0.0
      %1622 = vmatpush.msra.mxu0 0.0
      %1623 = vmatpush.msra.mxu0 0.0
      %1624 = vmatpush.msra.mxu0 0.0
      %1625 = vmatpush.msra.mxu0 0.0
      %1626 = vmatpush.msra.mxu0 0.0
      %1627 = vmatpush.msra.mxu0 0.0
      %1628 = vmatpush.msra.mxu0 0.0
      %1629 = vmatpush.msra.mxu0 0.0
      %1630 = vmatpush.msra.mxu0 %v1195
      %1631 = vmatpush.msra.mxu0 %v1186
      %1632 = vmatpush.msra.mxu0 %v1185
      %1633 = vmatpush.msra.mxu0 %v1184
      %1634 = vmatpush.msra.mxu0 %v1183
      %1635 = vmatpush.msra.mxu0 %v1182
      %1636 = vmatpush.msra.mxu0 %v1181
      %1637 = vmatmul.f32.gmra.mxu0 %v1616
      %v1638 = vpop.f32.mrf.mxu0
      %v1639 = vadd.f32 0.0, %v1638
      %1640 = vmatmul.f32.gmra.mxu0 %v1619
      %v1641 = vpop.f32.mrf.mxu0
      %v1642 = vadd.f32 0.0, %v1641
      %1643 = vdwg.mxu0
      %v1645 = vsel %vm1220, %v1639, 0
      %v1648 = vsel %vm1220, %v1642, 0
      %1650 = vmatpush.msra.mxu0 0.0
      %1651 = vmatpush.msra.mxu0 0.0
      %1652 = vmatpush.msra.mxu0 0.0
      %1653 = vmatpush.msra.mxu0 0.0
      %1654 = vmatpush.msra.mxu0 0.0
      %1655 = vmatpush.msra.mxu0 0.0
      %1656 = vmatpush.msra.mxu0 0.0
      %1657 = vmatpush.msra.mxu0 0.0
      %1658 = vmatpush.msra.mxu0 0.0
      %1659 = vmatpush.msra.mxu0 0.0
      %1660 = vmatpush.msra.mxu0 0.0
      %1661 = vmatpush.msra.mxu0 0.0
      %1662 = vmatpush.msra.mxu0 0.0
      %1663 = vmatpush.msra.mxu0 0.0
      %1664 = vmatpush.msra.mxu0 %v1113
      %1665 = vmatpush.msra.mxu0 %v1112
      %1666 = vmatmul.f32.gmra.mxu0 %v1645
      %v1667 = vpop.f32.mrf.mxu0
      %v1668 = vadd.f32 0.0, %v1667
      %1669 = vmatmul.f32.gmra.mxu0 %v1648
      %v1670 = vpop.f32.mrf.mxu0
      %v1671 = vadd.f32 0.0, %v1670
      %1672 = vdwg.mxu0
      %v1673 = vadd.f32 %v1613, %v1668
      %v1674 = vadd.f32 %v1614, %v1671
      %v1676 = vsel %vm1021, %v999, 0
      %v1679 = vsel %vm1021, %v1000, 0
      %1681 = vmatpush.msra.mxu0 0.0
      %1682 = vmatpush.msra.mxu0 0.0
      %1683 = vmatpush.msra.mxu0 0.0
      %1684 = vmatpush.msra.mxu0 0.0
      %1685 = vmatpush.msra.mxu0 0.0
      %1686 = vmatpush.msra.mxu0 0.0
      %1687 = vmatpush.msra.mxu0 0.0
      %1688 = vmatpush.msra.mxu0 0.0
      %1689 = vmatpush.msra.mxu0 0.0
      %1690 = vmatpush.msra.mxu0 %v1195
      %1691 = vmatpush.msra.mxu0 %v1186
      %1692 = vmatpush.msra.mxu0 %v1185
      %1693 = vmatpush.msra.mxu0 %v1184
      %1694 = vmatpush.msra.mxu0 %v1183
      %1695 = vmatpush.msra.mxu0 %v1182
      %1696 = vmatpush.msra.mxu0 %v1181
      %1697 = vmatmul.f32.gmra.mxu0 %v1676
      %v1698 = vpop.f32.mrf.mxu0
      %v1699 = vadd.f32 0.0, %v1698
      %1700 = vmatmul.f32.gmra.mxu0 %v1679
      %v1701 = vpop.f32.mrf.mxu0
      %v1702 = vadd.f32 0.0, %v1701
      %1703 = vdwg.mxu0
      %v1705 = vsel %vm1220, %v1699, 0
      %v1708 = vsel %vm1220, %v1702, 0
      %1710 = vmatpush.msra.mxu0 0.0
      %1711 = vmatpush.msra.mxu0 0.0
      %1712 = vmatpush.msra.mxu0 0.0
      %1713 = vmatpush.msra.mxu0 0.0
      %1714 = vmatpush.msra.mxu0 0.0
      %1715 = vmatpush.msra.mxu0 0.0
      %1716 = vmatpush.msra.mxu0 0.0
      %1717 = vmatpush.msra.mxu0 0.0
      %1718 = vmatpush.msra.mxu0 0.0
      %1719 = vmatpush.msra.mxu0 0.0
      %1720 = vmatpush.msra.mxu0 0.0
      %1721 = vmatpush.msra.mxu0 0.0
      %1722 = vmatpush.msra.mxu0 0.0
      %1723 = vmatpush.msra.mxu0 0.0
      %1724 = vmatpush.msra.mxu0 %v1115
      %1725 = vmatpush.msra.mxu0 %v1114
      %1726 = vmatmul.f32.gmra.mxu0 %v1705
      %v1727 = vpop.f32.mrf.mxu0
      %v1728 = vadd.f32 0.0, %v1727
      %1729 = vmatmul.f32.gmra.mxu0 %v1708
      %v1730 = vpop.f32.mrf.mxu0
      %v1731 = vadd.f32 0.0, %v1730
      %1732 = vdwg.mxu0
      %v1733 = vadd.f32 %v1673, %v1728
      %v1734 = vadd.f32 %v1674, %v1731
      %v1735 = vmax.f32 %v1733, 0.0
      %v1736 = vmax.f32 %v1734, 0.0
      %v1738 = vperm.slane %v1119, 0
      %v1741 = vsel %vm1220, %v1735, 0
      %v1744 = vsel %vm1220, %v1736, 0
      %1746 = vmatpush.msra.mxu0 0.0
      %1747 = vmatpush.msra.mxu0 0.0
      %1748 = vmatpush.msra.mxu0 0.0
      %1749 = vmatpush.msra.mxu0 0.0
      %1750 = vmatpush.msra.mxu0 0.0
      %1751 = vmatpush.msra.mxu0 0.0
      %1752 = vmatpush.msra.mxu0 0.0
      %1753 = vmatpush.msra.mxu0 0.0
      %1754 = vmatpush.msra.mxu0 0.0
      %1755 = vmatpush.msra.mxu0 0.0
      %1756 = vmatpush.msra.mxu0 0.0
      %1757 = vmatpush.msra.mxu0 0.0
      %1758 = vmatpush.msra.mxu0 0.0
      %1759 = vmatpush.msra.mxu0 0.0
      %1760 = vmatpush.msra.mxu0 %v1118
      %1761 = vmatpush.msra.mxu0 %v1117
      %1762 = vmatmul.f32.gmra.mxu0 %v1741
      %v1763 = vpop.f32.mrf.mxu0
      %v1764 = vadd.f32 %v1738, %v1763
      %1765 = vmatmul.f32.gmra.mxu0 %v1744
      %v1766 = vpop.f32.mrf.mxu0
      %v1767 = vadd.f32 %v1738, %v1766
      %1768 = vdwg.mxu0
      %v1769 = vadd.f32 %v1764, %v1088
      %v1770 = vadd.f32 %v1767, %v1091
      %v1771 = vmax.f32 %v1769, 0.0
      %v1772 = vmax.f32 %v1770, 0.0
      %v1773 = vld [vmem:[%s6] sm:$0xff]
      %v1774 = vld [vmem:[%s6 + $0x8] sm:$0xff]
      %v1775 = vld [vmem:[%s6 + $0x10] sm:$0xff]
      %v1776 = vld [vmem:[%s6 + $0x18] sm:$0xff]
      %v1777 = vld [vmem:[%s6 + $0x20] sm:$0xff]
      %v1778 = vld [vmem:[%s6 + $0x28] sm:$0xff]
      %v1779 = vld [vmem:[%s6 + $0x30] sm:$0xff]
      %v1780 = vld [vmem:[%s6 + $0x38] sm:$0xff]
      %s1781 = scalar_lea.vmem %s7, 1
      %v1782 = vld [vmem:[%s1781] sm:$0x1]
      %s1783 = scalar_lea.vmem %s8, 144
      %v1784 = vld [vmem:[%s1783] sm:$0xff]
      %v1785 = vld [vmem:[%s1783 + $0x8] sm:$0xff]
      %v1786 = vld [vmem:[%s1783 + $0x10] sm:$0xff]
      %v1787 = vld [vmem:[%s1783 + $0x18] sm:$0xff]
      %v1788 = vld [vmem:[%s1783 + $0x20] sm:$0xff]
      %v1789 = vld [vmem:[%s1783 + $0x28] sm:$0xff]
      %v1790 = vld [vmem:[%s1783 + $0x30] sm:$0xff]
      %v1791 = vld [vmem:[%s1783 + $0x38] sm:$0xff]
      %v1792 = vld [vmem:[%s1783 + $0x40] sm:$0xff]
      %v1793 = vld [vmem:[%s1783 + $0x48] sm:$0xff]
      %v1794 = vld [vmem:[%s1783 + $0x50] sm:$0xff]
      %v1795 = vld [vmem:[%s1783 + $0x58] sm:$0xff]
      %v1796 = vld [vmem:[%s1783 + $0x60] sm:$0xff]
      %v1797 = vld [vmem:[%s1783 + $0x68] sm:$0xff]
      %v1798 = vld [vmem:[%s1783 + $0x70] sm:$0xff]
      %v1799 = vld [vmem:[%s1783 + $0x78] sm:$0xff]
      %v1800 = vld [vmem:[%s1783 + $0x80] sm:$0xff]
      %v1801 = vld [vmem:[%s1783 + $0x88] sm:$0xff]
      %s1802 = scalar_lea.vmem %s9, 1
      %v1803 = vld [vmem:[%s1802] sm:$0x1]
      %s1804 = scalar_lea.vmem %s10, 16
      %v1805 = vld [vmem:[%s1804] sm:$0xff]
      %v1806 = vld [vmem:[%s1804 + $0x8] sm:$0xff]
      %s1807 = scalar_lea.vmem %s11, 1
      %v1808 = vld [vmem:[%s1807] sm:$0x1]
      %v1810 = vperm.slane %v1782, 0
      %vm1812 = vcmask 523264
      %v1814 = vsel %vm1812, %v1771, 0
      %v1817 = vsel %vm1812, %v1772, 0
      %1819 = vmatpush.msra.mxu0 0.0
      %1820 = vmatpush.msra.mxu0 0.0
      %1821 = vmatpush.msra.mxu0 0.0
      %1822 = vmatpush.msra.mxu0 0.0
      %1823 = vmatpush.msra.mxu0 0.0
      %1824 = vmatpush.msra.mxu0 0.0
      %1825 = vmatpush.msra.mxu0 0.0
      %1826 = vmatpush.msra.mxu0 0.0
      %1827 = vmatpush.msra.mxu0 %v1780
      %1828 = vmatpush.msra.mxu0 %v1779
      %1829 = vmatpush.msra.mxu0 %v1778
      %1830 = vmatpush.msra.mxu0 %v1777
      %1831 = vmatpush.msra.mxu0 %v1776
      %1832 = vmatpush.msra.mxu0 %v1775
      %1833 = vmatpush.msra.mxu0 %v1774
      %1834 = vmatpush.msra.mxu0 %v1773
      %1835 = vmatmul.f32.gmra.mxu0 %v1814
      %v1836 = vpop.f32.mrf.mxu0
      %v1837 = vadd.f32 %v1810, %v1836
      %1838 = vmatmul.f32.gmra.mxu0 %v1817
      %v1839 = vpop.f32.mrf.mxu0
      %v1840 = vadd.f32 %v1810, %v1839
      %1841 = vdwg.mxu0
      %v1842 = vmax.f32 %v1837, 0.0
      %v1843 = vmax.f32 %v1840, 0.0
      %v1845 = vsel %vm1220, %v1001, 0
      %v1848 = vsel %vm1220, %v1002, 0
      %1850 = vmatpush.msra.mxu0 0.0
      %1851 = vmatpush.msra.mxu0 0.0
      %1852 = vmatpush.msra.mxu0 0.0
      %1853 = vmatpush.msra.mxu0 0.0
      %1854 = vmatpush.msra.mxu0 0.0
      %1855 = vmatpush.msra.mxu0 0.0
      %1856 = vmatpush.msra.mxu0 0.0
      %1857 = vmatpush.msra.mxu0 0.0
      %1858 = vmatpush.msra.mxu0 0.0
      %1859 = vmatpush.msra.mxu0 0.0
      %1860 = vmatpush.msra.mxu0 0.0
      %1861 = vmatpush.msra.mxu0 0.0
      %1862 = vmatpush.msra.mxu0 0.0
      %1863 = vmatpush.msra.mxu0 0.0
      %1864 = vmatpush.msra.mxu0 %v1843
      %1865 = vmatpush.msra.mxu0 %v1842
      %1866 = vmatmul.f32.gmra.mxu0 %v1845
      %v1867 = vpop.f32.mrf.mxu0
      %v1868 = vadd.f32 0.0, %v1867
      %1869 = vmatmul.f32.gmra.mxu0 %v1848
      %v1870 = vpop.f32.mrf.mxu0
      %v1871 = vadd.f32 0.0, %v1870
      %1872 = vdwg.mxu0
      %v1874 = vsel %vm1220, %v1868, 0
      %v1877 = vsel %vm1220, %v1871, 0
      %1879 = vmatpush.msra.mxu0 0.0
      %1880 = vmatpush.msra.mxu0 0.0
      %1881 = vmatpush.msra.mxu0 0.0
      %1882 = vmatpush.msra.mxu0 0.0
      %1883 = vmatpush.msra.mxu0 0.0
      %1884 = vmatpush.msra.mxu0 0.0
      %1885 = vmatpush.msra.mxu0 0.0
      %1886 = vmatpush.msra.mxu0 0.0
      %1887 = vmatpush.msra.mxu0 0.0
      %1888 = vmatpush.msra.mxu0 0.0
      %1889 = vmatpush.msra.mxu0 0.0
      %1890 = vmatpush.msra.mxu0 0.0
      %1891 = vmatpush.msra.mxu0 0.0
      %1892 = vmatpush.msra.mxu0 0.0
      %1893 = vmatpush.msra.mxu0 %v1785
      %1894 = vmatpush.msra.mxu0 %v1784
      %1895 = vmatmul.f32.gmra.mxu0 %v1874
      %v1896 = vpop.f32.mrf.mxu0
      %v1897 = vadd.f32 0.0, %v1896
      %1898 = vmatmul.f32.gmra.mxu0 %v1877
      %v1899 = vpop.f32.mrf.mxu0
      %v1900 = vadd.f32 0.0, %v1899
      %1901 = vdwg.mxu0
      %v1903 = vperm.slane %v1803, 0
      %v1905 = vadd.f32 %v1903, %v1897
      %v1906 = vadd.f32 %v1903, %v1900
      %v1908 = vsel %vm1220, %v1003, 0
      %v1911 = vsel %vm1220, %v1004, 0
      %1913 = vmatpush.msra.mxu0 0.0
      %1914 = vmatpush.msra.mxu0 0.0
      %1915 = vmatpush.msra.mxu0 0.0
      %1916 = vmatpush.msra.mxu0 0.0
      %1917 = vmatpush.msra.mxu0 0.0
      %1918 = vmatpush.msra.mxu0 0.0
      %1919 = vmatpush.msra.mxu0 0.0
      %1920 = vmatpush.msra.mxu0 0.0
      %1921 = vmatpush.msra.mxu0 0.0
      %1922 = vmatpush.msra.mxu0 0.0
      %1923 = vmatpush.msra.mxu0 0.0
      %1924 = vmatpush.msra.mxu0 0.0
      %1925 = vmatpush.msra.mxu0 0.0
      %1926 = vmatpush.msra.mxu0 0.0
      %1927 = vmatpush.msra.mxu0 %v1843
      %1928 = vmatpush.msra.mxu0 %v1842
      %1929 = vmatmul.f32.gmra.mxu0 %v1908
      %v1930 = vpop.f32.mrf.mxu0
      %v1931 = vadd.f32 0.0, %v1930
      %1932 = vmatmul.f32.gmra.mxu0 %v1911
      %v1933 = vpop.f32.mrf.mxu0
      %v1934 = vadd.f32 0.0, %v1933
      %1935 = vdwg.mxu0
      %v1937 = vsel %vm1220, %v1931, 0
      %v1940 = vsel %vm1220, %v1934, 0
      %1942 = vmatpush.msra.mxu0 0.0
      %1943 = vmatpush.msra.mxu0 0.0
      %1944 = vmatpush.msra.mxu0 0.0
      %1945 = vmatpush.msra.mxu0 0.0
      %1946 = vmatpush.msra.mxu0 0.0
      %1947 = vmatpush.msra.mxu0 0.0
      %1948 = vmatpush.msra.mxu0 0.0
      %1949 = vmatpush.msra.mxu0 0.0
      %1950 = vmatpush.msra.mxu0 0.0
      %1951 = vmatpush.msra.mxu0 0.0
      %1952 = vmatpush.msra.mxu0 0.0
      %1953 = vmatpush.msra.mxu0 0.0
      %1954 = vmatpush.msra.mxu0 0.0
      %1955 = vmatpush.msra.mxu0 0.0
      %1956 = vmatpush.msra.mxu0 %v1787
      %1957 = vmatpush.msra.mxu0 %v1786
      %1958 = vmatmul.f32.gmra.mxu0 %v1937
      %v1959 = vpop.f32.mrf.mxu0
      %v1960 = vadd.f32 0.0, %v1959
      %1961 = vmatmul.f32.gmra.mxu0 %v1940
      %v1962 = vpop.f32.mrf.mxu0
      %v1963 = vadd.f32 0.0, %v1962
      %1964 = vdwg.mxu0
      %v1965 = vadd.f32 %v1905, %v1960
      %v1966 = vadd.f32 %v1906, %v1963
      %v1968 = vsel %vm1220, %v1005, 0
      %v1971 = vsel %vm1220, %v1006, 0
      %1973 = vmatpush.msra.mxu0 0.0
      %1974 = vmatpush.msra.mxu0 0.0
      %1975 = vmatpush.msra.mxu0 0.0
      %1976 = vmatpush.msra.mxu0 0.0
      %1977 = vmatpush.msra.mxu0 0.0
      %1978 = vmatpush.msra.mxu0 0.0
      %1979 = vmatpush.msra.mxu0 0.0
      %1980 = vmatpush.msra.mxu0 0.0
      %1981 = vmatpush.msra.mxu0 0.0
      %1982 = vmatpush.msra.mxu0 0.0
      %1983 = vmatpush.msra.mxu0 0.0
      %1984 = vmatpush.msra.mxu0 0.0
      %1985 = vmatpush.msra.mxu0 0.0
      %1986 = vmatpush.msra.mxu0 0.0
      %1987 = vmatpush.msra.mxu0 %v1843
      %1988 = vmatpush.msra.mxu0 %v1842
      %1989 = vmatmul.f32.gmra.mxu0 %v1968
      %v1990 = vpop.f32.mrf.mxu0
      %v1991 = vadd.f32 0.0, %v1990
      %1992 = vmatmul.f32.gmra.mxu0 %v1971
      %v1993 = vpop.f32.mrf.mxu0
      %v1994 = vadd.f32 0.0, %v1993
      %1995 = vdwg.mxu0
      %v1997 = vsel %vm1220, %v1991, 0
      %v2000 = vsel %vm1220, %v1994, 0
      %2002 = vmatpush.msra.mxu0 0.0
      %2003 = vmatpush.msra.mxu0 0.0
      %2004 = vmatpush.msra.mxu0 0.0
      %2005 = vmatpush.msra.mxu0 0.0
      %2006 = vmatpush.msra.mxu0 0.0
      %2007 = vmatpush.msra.mxu0 0.0
      %2008 = vmatpush.msra.mxu0 0.0
      %2009 = vmatpush.msra.mxu0 0.0
      %2010 = vmatpush.msra.mxu0 0.0
      %2011 = vmatpush.msra.mxu0 0.0
      %2012 = vmatpush.msra.mxu0 0.0
      %2013 = vmatpush.msra.mxu0 0.0
      %2014 = vmatpush.msra.mxu0 0.0
      %2015 = vmatpush.msra.mxu0 0.0
      %2016 = vmatpush.msra.mxu0 %v1789
      %2017 = vmatpush.msra.mxu0 %v1788
      %2018 = vmatmul.f32.gmra.mxu0 %v1997
      %v2019 = vpop.f32.mrf.mxu0
      %v2020 = vadd.f32 0.0, %v2019
      %2021 = vmatmul.f32.gmra.mxu0 %v2000
      %v2022 = vpop.f32.mrf.mxu0
      %v2023 = vadd.f32 0.0, %v2022
      %2024 = vdwg.mxu0
      %v2025 = vadd.f32 %v1965, %v2020
      %v2026 = vadd.f32 %v1966, %v2023
      %v2028 = vsel %vm1220, %v1007, 0
      %v2031 = vsel %vm1220, %v1008, 0
      %2033 = vmatpush.msra.mxu0 0.0
      %2034 = vmatpush.msra.mxu0 0.0
      %2035 = vmatpush.msra.mxu0 0.0
      %2036 = vmatpush.msra.mxu0 0.0
      %2037 = vmatpush.msra.mxu0 0.0
      %2038 = vmatpush.msra.mxu0 0.0
      %2039 = vmatpush.msra.mxu0 0.0
      %2040 = vmatpush.msra.mxu0 0.0
      %2041 = vmatpush.msra.mxu0 0.0
      %2042 = vmatpush.msra.mxu0 0.0
      %2043 = vmatpush.msra.mxu0 0.0
      %2044 = vmatpush.msra.mxu0 0.0
      %2045 = vmatpush.msra.mxu0 0.0
      %2046 = vmatpush.msra.mxu0 0.0
      %2047 = vmatpush.msra.mxu0 %v1843
      %2048 = vmatpush.msra.mxu0 %v1842
      %2049 = vmatmul.f32.gmra.mxu0 %v2028
      %v2050 = vpop.f32.mrf.mxu0
      %v2051 = vadd.f32 0.0, %v2050
      %2052 = vmatmul.f32.gmra.mxu0 %v2031
      %v2053 = vpop.f32.mrf.mxu0
      %v2054 = vadd.f32 0.0, %v2053
      %2055 = vdwg.mxu0
      %v2057 = vsel %vm1220, %v2051, 0
      %v2060 = vsel %vm1220, %v2054, 0
      %2062 = vmatpush.msra.mxu0 0.0
      %2063 = vmatpush.msra.mxu0 0.0
      %2064 = vmatpush.msra.mxu0 0.0
      %2065 = vmatpush.msra.mxu0 0.0
      %2066 = vmatpush.msra.mxu0 0.0
      %2067 = vmatpush.msra.mxu0 0.0
      %2068 = vmatpush.msra.mxu0 0.0
      %2069 = vmatpush.msra.mxu0 0.0
      %2070 = vmatpush.msra.mxu0 0.0
      %2071 = vmatpush.msra.mxu0 0.0
      %2072 = vmatpush.msra.mxu0 0.0
      %2073 = vmatpush.msra.mxu0 0.0
      %2074 = vmatpush.msra.mxu0 0.0
      %2075 = vmatpush.msra.mxu0 0.0
      %2076 = vmatpush.msra.mxu0 %v1791
      %2077 = vmatpush.msra.mxu0 %v1790
      %2078 = vmatmul.f32.gmra.mxu0 %v2057
      %v2079 = vpop.f32.mrf.mxu0
      %v2080 = vadd.f32 0.0, %v2079
      %2081 = vmatmul.f32.gmra.mxu0 %v2060
      %v2082 = vpop.f32.mrf.mxu0
      %v2083 = vadd.f32 0.0, %v2082
      %2084 = vdwg.mxu0
      %v2085 = vadd.f32 %v2025, %v2080
      %v2086 = vadd.f32 %v2026, %v2083
      %v2088 = vsel %vm1220, %v1009, 0
      %v2091 = vsel %vm1220, %v1010, 0
      %2093 = vmatpush.msra.mxu0 0.0
      %2094 = vmatpush.msra.mxu0 0.0
      %2095 = vmatpush.msra.mxu0 0.0
      %2096 = vmatpush.msra.mxu0 0.0
      %2097 = vmatpush.msra.mxu0 0.0
      %2098 = vmatpush.msra.mxu0 0.0
      %2099 = vmatpush.msra.mxu0 0.0
      %2100 = vmatpush.msra.mxu0 0.0
      %2101 = vmatpush.msra.mxu0 0.0
      %2102 = vmatpush.msra.mxu0 0.0
      %2103 = vmatpush.msra.mxu0 0.0
      %2104 = vmatpush.msra.mxu0 0.0
      %2105 = vmatpush.msra.mxu0 0.0
      %2106 = vmatpush.msra.mxu0 0.0
      %2107 = vmatpush.msra.mxu0 %v1843
      %2108 = vmatpush.msra.mxu0 %v1842
      %2109 = vmatmul.f32.gmra.mxu0 %v2088
      %v2110 = vpop.f32.mrf.mxu0
      %v2111 = vadd.f32 0.0, %v2110
      %2112 = vmatmul.f32.gmra.mxu0 %v2091
      %v2113 = vpop.f32.mrf.mxu0
      %v2114 = vadd.f32 0.0, %v2113
      %2115 = vdwg.mxu0
      %v2117 = vsel %vm1220, %v2111, 0
      %v2120 = vsel %vm1220, %v2114, 0
      %2122 = vmatpush.msra.mxu0 0.0
      %2123 = vmatpush.msra.mxu0 0.0
      %2124 = vmatpush.msra.mxu0 0.0
      %2125 = vmatpush.msra.mxu0 0.0
      %2126 = vmatpush.msra.mxu0 0.0
      %2127 = vmatpush.msra.mxu0 0.0
      %2128 = vmatpush.msra.mxu0 0.0
      %2129 = vmatpush.msra.mxu0 0.0
      %2130 = vmatpush.msra.mxu0 0.0
      %2131 = vmatpush.msra.mxu0 0.0
      %2132 = vmatpush.msra.mxu0 0.0
      %2133 = vmatpush.msra.mxu0 0.0
      %2134 = vmatpush.msra.mxu0 0.0
      %2135 = vmatpush.msra.mxu0 0.0
      %2136 = vmatpush.msra.mxu0 %v1793
      %2137 = vmatpush.msra.mxu0 %v1792
      %2138 = vmatmul.f32.gmra.mxu0 %v2117
      %v2139 = vpop.f32.mrf.mxu0
      %v2140 = vadd.f32 0.0, %v2139
      %2141 = vmatmul.f32.gmra.mxu0 %v2120
      %v2142 = vpop.f32.mrf.mxu0
      %v2143 = vadd.f32 0.0, %v2142
      %2144 = vdwg.mxu0
      %v2145 = vadd.f32 %v2085, %v2140
      %v2146 = vadd.f32 %v2086, %v2143
      %v2148 = vsel %vm1220, %v1011, 0
      %v2151 = vsel %vm1220, %v1012, 0
      %2153 = vmatpush.msra.mxu0 0.0
      %2154 = vmatpush.msra.mxu0 0.0
      %2155 = vmatpush.msra.mxu0 0.0
      %2156 = vmatpush.msra.mxu0 0.0
      %2157 = vmatpush.msra.mxu0 0.0
      %2158 = vmatpush.msra.mxu0 0.0
      %2159 = vmatpush.msra.mxu0 0.0
      %2160 = vmatpush.msra.mxu0 0.0
      %2161 = vmatpush.msra.mxu0 0.0
      %2162 = vmatpush.msra.mxu0 0.0
      %2163 = vmatpush.msra.mxu0 0.0
      %2164 = vmatpush.msra.mxu0 0.0
      %2165 = vmatpush.msra.mxu0 0.0
      %2166 = vmatpush.msra.mxu0 0.0
      %2167 = vmatpush.msra.mxu0 %v1843
      %2168 = vmatpush.msra.mxu0 %v1842
      %2169 = vmatmul.f32.gmra.mxu0 %v2148
      %v2170 = vpop.f32.mrf.mxu0
      %v2171 = vadd.f32 0.0, %v2170
      %2172 = vmatmul.f32.gmra.mxu0 %v2151
      %v2173 = vpop.f32.mrf.mxu0
      %v2174 = vadd.f32 0.0, %v2173
      %2175 = vdwg.mxu0
      %v2177 = vsel %vm1220, %v2171, 0
      %v2180 = vsel %vm1220, %v2174, 0
      %2182 = vmatpush.msra.mxu0 0.0
      %2183 = vmatpush.msra.mxu0 0.0
      %2184 = vmatpush.msra.mxu0 0.0
      %2185 = vmatpush.msra.mxu0 0.0
      %2186 = vmatpush.msra.mxu0 0.0
      %2187 = vmatpush.msra.mxu0 0.0
      %2188 = vmatpush.msra.mxu0 0.0
      %2189 = vmatpush.msra.mxu0 0.0
      %2190 = vmatpush.msra.mxu0 0.0
      %2191 = vmatpush.msra.mxu0 0.0
      %2192 = vmatpush.msra.mxu0 0.0
      %2193 = vmatpush.msra.mxu0 0.0
      %2194 = vmatpush.msra.mxu0 0.0
      %2195 = vmatpush.msra.mxu0 0.0
      %2196 = vmatpush.msra.mxu0 %v1795
      %2197 = vmatpush.msra.mxu0 %v1794
      %2198 = vmatmul.f32.gmra.mxu0 %v2177
      %v2199 = vpop.f32.mrf.mxu0
      %v2200 = vadd.f32 0.0, %v2199
      %2201 = vmatmul.f32.gmra.mxu0 %v2180
      %v2202 = vpop.f32.mrf.mxu0
      %v2203 = vadd.f32 0.0, %v2202
      %2204 = vdwg.mxu0
      %v2205 = vadd.f32 %v2145, %v2200
      %v2206 = vadd.f32 %v2146, %v2203
      %v2208 = vsel %vm1220, %v1013, 0
      %v2211 = vsel %vm1220, %v1014, 0
      %2213 = vmatpush.msra.mxu0 0.0
      %2214 = vmatpush.msra.mxu0 0.0
      %2215 = vmatpush.msra.mxu0 0.0
      %2216 = vmatpush.msra.mxu0 0.0
      %2217 = vmatpush.msra.mxu0 0.0
      %2218 = vmatpush.msra.mxu0 0.0
      %2219 = vmatpush.msra.mxu0 0.0
      %2220 = vmatpush.msra.mxu0 0.0
      %2221 = vmatpush.msra.mxu0 0.0
      %2222 = vmatpush.msra.mxu0 0.0
      %2223 = vmatpush.msra.mxu0 0.0
      %2224 = vmatpush.msra.mxu0 0.0
      %2225 = vmatpush.msra.mxu0 0.0
      %2226 = vmatpush.msra.mxu0 0.0
      %2227 = vmatpush.msra.mxu0 %v1843
      %2228 = vmatpush.msra.mxu0 %v1842
      %2229 = vmatmul.f32.gmra.mxu0 %v2208
      %v2230 = vpop.f32.mrf.mxu0
      %v2231 = vadd.f32 0.0, %v2230
      %2232 = vmatmul.f32.gmra.mxu0 %v2211
      %v2233 = vpop.f32.mrf.mxu0
      %v2234 = vadd.f32 0.0, %v2233
      %2235 = vdwg.mxu0
      %v2237 = vsel %vm1220, %v2231, 0
      %v2240 = vsel %vm1220, %v2234, 0
      %2242 = vmatpush.msra.mxu0 0.0
      %2243 = vmatpush.msra.mxu0 0.0
      %2244 = vmatpush.msra.mxu0 0.0
      %2245 = vmatpush.msra.mxu0 0.0
      %2246 = vmatpush.msra.mxu0 0.0
      %2247 = vmatpush.msra.mxu0 0.0
      %2248 = vmatpush.msra.mxu0 0.0
      %2249 = vmatpush.msra.mxu0 0.0
      %2250 = vmatpush.msra.mxu0 0.0
      %2251 = vmatpush.msra.mxu0 0.0
      %2252 = vmatpush.msra.mxu0 0.0
      %2253 = vmatpush.msra.mxu0 0.0
      %2254 = vmatpush.msra.mxu0 0.0
      %2255 = vmatpush.msra.mxu0 0.0
      %2256 = vmatpush.msra.mxu0 %v1797
      %2257 = vmatpush.msra.mxu0 %v1796
      %2258 = vmatmul.f32.gmra.mxu0 %v2237
      %v2259 = vpop.f32.mrf.mxu0
      %v2260 = vadd.f32 0.0, %v2259
      %2261 = vmatmul.f32.gmra.mxu0 %v2240
      %v2262 = vpop.f32.mrf.mxu0
      %v2263 = vadd.f32 0.0, %v2262
      %2264 = vdwg.mxu0
      %v2265 = vadd.f32 %v2205, %v2260
      %v2266 = vadd.f32 %v2206, %v2263
      %v2268 = vsel %vm1220, %v1015, 0
      %v2271 = vsel %vm1220, %v1016, 0
      %2273 = vmatpush.msra.mxu0 0.0
      %2274 = vmatpush.msra.mxu0 0.0
      %2275 = vmatpush.msra.mxu0 0.0
      %2276 = vmatpush.msra.mxu0 0.0
      %2277 = vmatpush.msra.mxu0 0.0
      %2278 = vmatpush.msra.mxu0 0.0
      %2279 = vmatpush.msra.mxu0 0.0
      %2280 = vmatpush.msra.mxu0 0.0
      %2281 = vmatpush.msra.mxu0 0.0
      %2282 = vmatpush.msra.mxu0 0.0
      %2283 = vmatpush.msra.mxu0 0.0
      %2284 = vmatpush.msra.mxu0 0.0
      %2285 = vmatpush.msra.mxu0 0.0
      %2286 = vmatpush.msra.mxu0 0.0
      %2287 = vmatpush.msra.mxu0 %v1843
      %2288 = vmatpush.msra.mxu0 %v1842
      %2289 = vmatmul.f32.gmra.mxu0 %v2268
      %v2290 = vpop.f32.mrf.mxu0
      %v2291 = vadd.f32 0.0, %v2290
      %2292 = vmatmul.f32.gmra.mxu0 %v2271
      %v2293 = vpop.f32.mrf.mxu0
      %v2294 = vadd.f32 0.0, %v2293
      %2295 = vdwg.mxu0
      %v2297 = vsel %vm1220, %v2291, 0
      %v2300 = vsel %vm1220, %v2294, 0
      %2302 = vmatpush.msra.mxu0 0.0
      %2303 = vmatpush.msra.mxu0 0.0
      %2304 = vmatpush.msra.mxu0 0.0
      %2305 = vmatpush.msra.mxu0 0.0
      %2306 = vmatpush.msra.mxu0 0.0
      %2307 = vmatpush.msra.mxu0 0.0
      %2308 = vmatpush.msra.mxu0 0.0
      %2309 = vmatpush.msra.mxu0 0.0
      %2310 = vmatpush.msra.mxu0 0.0
      %2311 = vmatpush.msra.mxu0 0.0
      %2312 = vmatpush.msra.mxu0 0.0
      %2313 = vmatpush.msra.mxu0 0.0
      %2314 = vmatpush.msra.mxu0 0.0
      %2315 = vmatpush.msra.mxu0 0.0
      %2316 = vmatpush.msra.mxu0 %v1799
      %2317 = vmatpush.msra.mxu0 %v1798
      %2318 = vmatmul.f32.gmra.mxu0 %v2297
      %v2319 = vpop.f32.mrf.mxu0
      %v2320 = vadd.f32 0.0, %v2319
      %2321 = vmatmul.f32.gmra.mxu0 %v2300
      %v2322 = vpop.f32.mrf.mxu0
      %v2323 = vadd.f32 0.0, %v2322
      %2324 = vdwg.mxu0
      %v2325 = vadd.f32 %v2265, %v2320
      %v2326 = vadd.f32 %v2266, %v2323
      %v2328 = vsel %vm1220, %v1017, 0
      %v2331 = vsel %vm1220, %v1018, 0
      %2333 = vmatpush.msra.mxu0 0.0
      %2334 = vmatpush.msra.mxu0 0.0
      %2335 = vmatpush.msra.mxu0 0.0
      %2336 = vmatpush.msra.mxu0 0.0
      %2337 = vmatpush.msra.mxu0 0.0
      %2338 = vmatpush.msra.mxu0 0.0
      %2339 = vmatpush.msra.mxu0 0.0
      %2340 = vmatpush.msra.mxu0 0.0
      %2341 = vmatpush.msra.mxu0 0.0
      %2342 = vmatpush.msra.mxu0 0.0
      %2343 = vmatpush.msra.mxu0 0.0
      %2344 = vmatpush.msra.mxu0 0.0
      %2345 = vmatpush.msra.mxu0 0.0
      %2346 = vmatpush.msra.mxu0 0.0
      %2347 = vmatpush.msra.mxu0 %v1843
      %2348 = vmatpush.msra.mxu0 %v1842
      %2349 = vmatmul.f32.gmra.mxu0 %v2328
      %v2350 = vpop.f32.mrf.mxu0
      %v2351 = vadd.f32 0.0, %v2350
      %2352 = vmatmul.f32.gmra.mxu0 %v2331
      %v2353 = vpop.f32.mrf.mxu0
      %v2354 = vadd.f32 0.0, %v2353
      %2355 = vdwg.mxu0
      %v2357 = vsel %vm1220, %v2351, 0
      %v2360 = vsel %vm1220, %v2354, 0
      %2362 = vmatpush.msra.mxu0 0.0
      %2363 = vmatpush.msra.mxu0 0.0
      %2364 = vmatpush.msra.mxu0 0.0
      %2365 = vmatpush.msra.mxu0 0.0
      %2366 = vmatpush.msra.mxu0 0.0
      %2367 = vmatpush.msra.mxu0 0.0
      %2368 = vmatpush.msra.mxu0 0.0
      %2369 = vmatpush.msra.mxu0 0.0
      %2370 = vmatpush.msra.mxu0 0.0
      %2371 = vmatpush.msra.mxu0 0.0
      %2372 = vmatpush.msra.mxu0 0.0
      %2373 = vmatpush.msra.mxu0 0.0
      %2374 = vmatpush.msra.mxu0 0.0
      %2375 = vmatpush.msra.mxu0 0.0
      %2376 = vmatpush.msra.mxu0 %v1801
      %2377 = vmatpush.msra.mxu0 %v1800
      %2378 = vmatmul.f32.gmra.mxu0 %v2357
      %v2379 = vpop.f32.mrf.mxu0
      %v2380 = vadd.f32 0.0, %v2379
      %2381 = vmatmul.f32.gmra.mxu0 %v2360
      %v2382 = vpop.f32.mrf.mxu0
      %v2383 = vadd.f32 0.0, %v2382
      %2384 = vdwg.mxu0
      %v2385 = vadd.f32 %v2325, %v2380
      %v2386 = vadd.f32 %v2326, %v2383
      %v2387 = vmax.f32 %v2385, 0.0
      %v2388 = vmax.f32 %v2386, 0.0
      %v2390 = vperm.slane %v1808, 0
      %v2393 = vsel %vm1220, %v2387, 0
      %v2396 = vsel %vm1220, %v2388, 0
      %2398 = vmatpush.msra.mxu0 0.0
      %2399 = vmatpush.msra.mxu0 0.0
      %2400 = vmatpush.msra.mxu0 0.0
      %2401 = vmatpush.msra.mxu0 0.0
      %2402 = vmatpush.msra.mxu0 0.0
      %2403 = vmatpush.msra.mxu0 0.0
      %2404 = vmatpush.msra.mxu0 0.0
      %2405 = vmatpush.msra.mxu0 0.0
      %2406 = vmatpush.msra.mxu0 0.0
      %2407 = vmatpush.msra.mxu0 0.0
      %2408 = vmatpush.msra.mxu0 0.0
      %2409 = vmatpush.msra.mxu0 0.0
      %2410 = vmatpush.msra.mxu0 0.0
      %2411 = vmatpush.msra.mxu0 0.0
      %2412 = vmatpush.msra.mxu0 %v1806
      %2413 = vmatpush.msra.mxu0 %v1805
      %2414 = vmatmul.f32.gmra.mxu0 %v2393
      %v2415 = vpop.f32.mrf.mxu0
      %v2416 = vadd.f32 %v2390, %v2415
      %2417 = vmatmul.f32.gmra.mxu0 %v2396
      %v2418 = vpop.f32.mrf.mxu0
      %v2419 = vadd.f32 %v2390, %v2418
      %2420 = vdwg.mxu0
      %v2421 = vadd.f32 %v2416, %v1771
      %v2422 = vadd.f32 %v2419, %v1772
      %v2423 = vmax.f32 %v2421, 0.0
      %v2424 = vmax.f32 %v2422, 0.0
      %s2425 = scalar_lea.vmem %s6, 64
      %v2426 = vld [vmem:[%s2425] sm:$0xff]
      %v2427 = vld [vmem:[%s2425 + $0x8] sm:$0xff]
      %v2428 = vld [vmem:[%s2425 + $0x10] sm:$0xff]
      %v2429 = vld [vmem:[%s2425 + $0x18] sm:$0xff]
      %v2430 = vld [vmem:[%s2425 + $0x20] sm:$0xff]
      %v2431 = vld [vmem:[%s2425 + $0x28] sm:$0xff]
      %v2432 = vld [vmem:[%s2425 + $0x30] sm:$0xff]
      %v2433 = vld [vmem:[%s2425 + $0x38] sm:$0xff]
      %s2434 = scalar_lea.vmem %s7, 2
      %v2435 = vld [vmem:[%s2434] sm:$0x1]
      %s2436 = scalar_lea.vmem %s8, 288
      %v2437 = vld [vmem:[%s2436] sm:$0xff]
      %v2438 = vld [vmem:[%s2436 + $0x8] sm:$0xff]
      %v2439 = vld [vmem:[%s2436 + $0x10] sm:$0xff]
      %v2440 = vld [vmem:[%s2436 + $0x18] sm:$0xff]
      %v2441 = vld [vmem:[%s2436 + $0x20] sm:$0xff]
      %v2442 = vld [vmem:[%s2436 + $0x28] sm:$0xff]
      %v2443 = vld [vmem:[%s2436 + $0x30] sm:$0xff]
      %v2444 = vld [vmem:[%s2436 + $0x38] sm:$0xff]
      %v2445 = vld [vmem:[%s2436 + $0x40] sm:$0xff]
      %v2446 = vld [vmem:[%s2436 + $0x48] sm:$0xff]
      %v2447 = vld [vmem:[%s2436 + $0x50] sm:$0xff]
      %v2448 = vld [vmem:[%s2436 + $0x58] sm:$0xff]
      %v2449 = vld [vmem:[%s2436 + $0x60] sm:$0xff]
      %v2450 = vld [vmem:[%s2436 + $0x68] sm:$0xff]
      %v2451 = vld [vmem:[%s2436 + $0x70] sm:$0xff]
      %v2452 = vld [vmem:[%s2436 + $0x78] sm:$0xff]
      %v2453 = vld [vmem:[%s2436 + $0x80] sm:$0xff]
      %v2454 = vld [vmem:[%s2436 + $0x88] sm:$0xff]
      %s2455 = scalar_lea.vmem %s9, 2
      %v2456 = vld [vmem:[%s2455] sm:$0x1]
      %s2457 = scalar_lea.vmem %s10, 32
      %v2458 = vld [vmem:[%s2457] sm:$0xff]
      %v2459 = vld [vmem:[%s2457 + $0x8] sm:$0xff]
      %s2460 = scalar_lea.vmem %s11, 2
      %v2461 = vld [vmem:[%s2460] sm:$0x1]
      %v2463 = vperm.slane %v2435, 0
      %v2466 = vsel %vm1812, %v2423, 0
      %v2469 = vsel %vm1812, %v2424, 0
      %2471 = vmatpush.msra.mxu0 0.0
      %2472 = vmatpush.msra.mxu0 0.0
      %2473 = vmatpush.msra.mxu0 0.0
      %2474 = vmatpush.msra.mxu0 0.0
      %2475 = vmatpush.msra.mxu0 0.0
      %2476 = vmatpush.msra.mxu0 0.0
      %2477 = vmatpush.msra.mxu0 0.0
      %2478 = vmatpush.msra.mxu0 0.0
      %2479 = vmatpush.msra.mxu0 %v2433
      %2480 = vmatpush.msra.mxu0 %v2432
      %2481 = vmatpush.msra.mxu0 %v2431
      %2482 = vmatpush.msra.mxu0 %v2430
      %2483 = vmatpush.msra.mxu0 %v2429
      %2484 = vmatpush.msra.mxu0 %v2428
      %2485 = vmatpush.msra.mxu0 %v2427
      %2486 = vmatpush.msra.mxu0 %v2426
      %2487 = vmatmul.f32.gmra.mxu0 %v2466
      %v2488 = vpop.f32.mrf.mxu0
      %v2489 = vadd.f32 %v2463, %v2488
      %2490 = vmatmul.f32.gmra.mxu0 %v2469
      %v2491 = vpop.f32.mrf.mxu0
      %v2492 = vadd.f32 %v2463, %v2491
      %2493 = vdwg.mxu0
      %v2494 = vmax.f32 %v2489, 0.0
      %v2495 = vmax.f32 %v2492, 0.0
      %2496 = vmatpush.msra.mxu0 0.0
      %2497 = vmatpush.msra.mxu0 0.0
      %2498 = vmatpush.msra.mxu0 0.0
      %2499 = vmatpush.msra.mxu0 0.0
      %2500 = vmatpush.msra.mxu0 0.0
      %2501 = vmatpush.msra.mxu0 0.0
      %2502 = vmatpush.msra.mxu0 0.0
      %2503 = vmatpush.msra.mxu0 0.0
      %2504 = vmatpush.msra.mxu0 0.0
      %2505 = vmatpush.msra.mxu0 0.0
      %2506 = vmatpush.msra.mxu0 0.0
      %2507 = vmatpush.msra.mxu0 0.0
      %2508 = vmatpush.msra.mxu0 0.0
      %2509 = vmatpush.msra.mxu0 0.0
      %2510 = vmatpush.msra.mxu0 %v2495
      %2511 = vmatpush.msra.mxu0 %v2494
      %2512 = vmatmul.f32.gmra.mxu0 %v1845
      %v2513 = vpop.f32.mrf.mxu0
      %v2514 = vadd.f32 0.0, %v2513
      %2515 = vmatmul.f32.gmra.mxu0 %v1848
      %v2516 = vpop.f32.mrf.mxu0
      %v2517 = vadd.f32 0.0, %v2516
      %2518 = vdwg.mxu0
      %v2520 = vsel %vm1220, %v2514, 0
      %v2523 = vsel %vm1220, %v2517, 0
      %2525 = vmatpush.msra.mxu0 0.0
      %2526 = vmatpush.msra.mxu0 0.0
      %2527 = vmatpush.msra.mxu0 0.0
      %2528 = vmatpush.msra.mxu0 0.0
      %2529 = vmatpush.msra.mxu0 0.0
      %2530 = vmatpush.msra.mxu0 0.0
      %2531 = vmatpush.msra.mxu0 0.0
      %2532 = vmatpush.msra.mxu0 0.0
      %2533 = vmatpush.msra.mxu0 0.0
      %2534 = vmatpush.msra.mxu0 0.0
      %2535 = vmatpush.msra.mxu0 0.0
      %2536 = vmatpush.msra.mxu0 0.0
      %2537 = vmatpush.msra.mxu0 0.0
      %2538 = vmatpush.msra.mxu0 0.0
      %2539 = vmatpush.msra.mxu0 %v2438
      %2540 = vmatpush.msra.mxu0 %v2437
      %2541 = vmatmul.f32.gmra.mxu0 %v2520
      %v2542 = vpop.f32.mrf.mxu0
      %v2543 = vadd.f32 0.0, %v2542
      %2544 = vmatmul.f32.gmra.mxu0 %v2523
      %v2545 = vpop.f32.mrf.mxu0
      %v2546 = vadd.f32 0.0, %v2545
      %2547 = vdwg.mxu0
      %v2549 = vperm.slane %v2456, 0
      %v2551 = vadd.f32 %v2549, %v2543
      %v2552 = vadd.f32 %v2549, %v2546
      %2553 = vmatpush.msra.mxu0 0.0
      %2554 = vmatpush.msra.mxu0 0.0
      %2555 = vmatpush.msra.mxu0 0.0
      %2556 = vmatpush.msra.mxu0 0.0
      %2557 = vmatpush.msra.mxu0 0.0
      %2558 = vmatpush.msra.mxu0 0.0
      %2559 = vmatpush.msra.mxu0 0.0
      %2560 = vmatpush.msra.mxu0 0.0
      %2561 = vmatpush.msra.mxu0 0.0
      %2562 = vmatpush.msra.mxu0 0.0
      %2563 = vmatpush.msra.mxu0 0.0
      %2564 = vmatpush.msra.mxu0 0.0
      %2565 = vmatpush.msra.mxu0 0.0
      %2566 = vmatpush.msra.mxu0 0.0
      %2567 = vmatpush.msra.mxu0 %v2495
      %2568 = vmatpush.msra.mxu0 %v2494
      %2569 = vmatmul.f32.gmra.mxu0 %v1908
      %v2570 = vpop.f32.mrf.mxu0
      %v2571 = vadd.f32 0.0, %v2570
      %2572 = vmatmul.f32.gmra.mxu0 %v1911
      %v2573 = vpop.f32.mrf.mxu0
      %v2574 = vadd.f32 0.0, %v2573
      %2575 = vdwg.mxu0
      %v2577 = vsel %vm1220, %v2571, 0
      %v2580 = vsel %vm1220, %v2574, 0
      %2582 = vmatpush.msra.mxu0 0.0
      %2583 = vmatpush.msra.mxu0 0.0
      %2584 = vmatpush.msra.mxu0 0.0
      %2585 = vmatpush.msra.mxu0 0.0
      %2586 = vmatpush.msra.mxu0 0.0
      %2587 = vmatpush.msra.mxu0 0.0
      %2588 = vmatpush.msra.mxu0 0.0
      %2589 = vmatpush.msra.mxu0 0.0
      %2590 = vmatpush.msra.mxu0 0.0
      %2591 = vmatpush.msra.mxu0 0.0
      %2592 = vmatpush.msra.mxu0 0.0
      %2593 = vmatpush.msra.mxu0 0.0
      %2594 = vmatpush.msra.mxu0 0.0
      %2595 = vmatpush.msra.mxu0 0.0
      %2596 = vmatpush.msra.mxu0 %v2440
      %2597 = vmatpush.msra.mxu0 %v2439
      %2598 = vmatmul.f32.gmra.mxu0 %v2577
      %v2599 = vpop.f32.mrf.mxu0
      %v2600 = vadd.f32 0.0, %v2599
      %2601 = vmatmul.f32.gmra.mxu0 %v2580
      %v2602 = vpop.f32.mrf.mxu0
      %v2603 = vadd.f32 0.0, %v2602
      %2604 = vdwg.mxu0
      %v2605 = vadd.f32 %v2551, %v2600
      %v2606 = vadd.f32 %v2552, %v2603
      %2607 = vmatpush.msra.mxu0 0.0
      %2608 = vmatpush.msra.mxu0 0.0
      %2609 = vmatpush.msra.mxu0 0.0
      %2610 = vmatpush.msra.mxu0 0.0
      %2611 = vmatpush.msra.mxu0 0.0
      %2612 = vmatpush.msra.mxu0 0.0
      %2613 = vmatpush.msra.mxu0 0.0
      %2614 = vmatpush.msra.mxu0 0.0
      %2615 = vmatpush.msra.mxu0 0.0
      %2616 = vmatpush.msra.mxu0 0.0
      %2617 = vmatpush.msra.mxu0 0.0
      %2618 = vmatpush.msra.mxu0 0.0
      %2619 = vmatpush.msra.mxu0 0.0
      %2620 = vmatpush.msra.mxu0 0.0
      %2621 = vmatpush.msra.mxu0 %v2495
      %2622 = vmatpush.msra.mxu0 %v2494
      %2623 = vmatmul.f32.gmra.mxu0 %v1968
      %v2624 = vpop.f32.mrf.mxu0
      %v2625 = vadd.f32 0.0, %v2624
      %2626 = vmatmul.f32.gmra.mxu0 %v1971
      %v2627 = vpop.f32.mrf.mxu0
      %v2628 = vadd.f32 0.0, %v2627
      %2629 = vdwg.mxu0
      %v2631 = vsel %vm1220, %v2625, 0
      %v2634 = vsel %vm1220, %v2628, 0
      %2636 = vmatpush.msra.mxu0 0.0
      %2637 = vmatpush.msra.mxu0 0.0
      %2638 = vmatpush.msra.mxu0 0.0
      %2639 = vmatpush.msra.mxu0 0.0
      %2640 = vmatpush.msra.mxu0 0.0
      %2641 = vmatpush.msra.mxu0 0.0
      %2642 = vmatpush.msra.mxu0 0.0
      %2643 = vmatpush.msra.mxu0 0.0
      %2644 = vmatpush.msra.mxu0 0.0
      %2645 = vmatpush.msra.mxu0 0.0
      %2646 = vmatpush.msra.mxu0 0.0
      %2647 = vmatpush.msra.mxu0 0.0
      %2648 = vmatpush.msra.mxu0 0.0
      %2649 = vmatpush.msra.mxu0 0.0
      %2650 = vmatpush.msra.mxu0 %v2442
      %2651 = vmatpush.msra.mxu0 %v2441
      %2652 = vmatmul.f32.gmra.mxu0 %v2631
      %v2653 = vpop.f32.mrf.mxu0
      %v2654 = vadd.f32 0.0, %v2653
      %2655 = vmatmul.f32.gmra.mxu0 %v2634
      %v2656 = vpop.f32.mrf.mxu0
      %v2657 = vadd.f32 0.0, %v2656
      %2658 = vdwg.mxu0
      %v2659 = vadd.f32 %v2605, %v2654
      %v2660 = vadd.f32 %v2606, %v2657
      %2661 = vmatpush.msra.mxu0 0.0
      %2662 = vmatpush.msra.mxu0 0.0
      %2663 = vmatpush.msra.mxu0 0.0
      %2664 = vmatpush.msra.mxu0 0.0
      %2665 = vmatpush.msra.mxu0 0.0
      %2666 = vmatpush.msra.mxu0 0.0
      %2667 = vmatpush.msra.mxu0 0.0
      %2668 = vmatpush.msra.mxu0 0.0
      %2669 = vmatpush.msra.mxu0 0.0
      %2670 = vmatpush.msra.mxu0 0.0
      %2671 = vmatpush.msra.mxu0 0.0
      %2672 = vmatpush.msra.mxu0 0.0
      %2673 = vmatpush.msra.mxu0 0.0
      %2674 = vmatpush.msra.mxu0 0.0
      %2675 = vmatpush.msra.mxu0 %v2495
      %2676 = vmatpush.msra.mxu0 %v2494
      %2677 = vmatmul.f32.gmra.mxu0 %v2028
      %v2678 = vpop.f32.mrf.mxu0
      %v2679 = vadd.f32 0.0, %v2678
      %2680 = vmatmul.f32.gmra.mxu0 %v2031
      %v2681 = vpop.f32.mrf.mxu0
      %v2682 = vadd.f32 0.0, %v2681
      %2683 = vdwg.mxu0
      %v2685 = vsel %vm1220, %v2679, 0
      %v2688 = vsel %vm1220, %v2682, 0
      %2690 = vmatpush.msra.mxu0 0.0
      %2691 = vmatpush.msra.mxu0 0.0
      %2692 = vmatpush.msra.mxu0 0.0
      %2693 = vmatpush.msra.mxu0 0.0
      %2694 = vmatpush.msra.mxu0 0.0
      %2695 = vmatpush.msra.mxu0 0.0
      %2696 = vmatpush.msra.mxu0 0.0
      %2697 = vmatpush.msra.mxu0 0.0
      %2698 = vmatpush.msra.mxu0 0.0
      %2699 = vmatpush.msra.mxu0 0.0
      %2700 = vmatpush.msra.mxu0 0.0
      %2701 = vmatpush.msra.mxu0 0.0
      %2702 = vmatpush.msra.mxu0 0.0
      %2703 = vmatpush.msra.mxu0 0.0
      %2704 = vmatpush.msra.mxu0 %v2444
      %2705 = vmatpush.msra.mxu0 %v2443
      %2706 = vmatmul.f32.gmra.mxu0 %v2685
      %v2707 = vpop.f32.mrf.mxu0
      %v2708 = vadd.f32 0.0, %v2707
      %2709 = vmatmul.f32.gmra.mxu0 %v2688
      %v2710 = vpop.f32.mrf.mxu0
      %v2711 = vadd.f32 0.0, %v2710
      %2712 = vdwg.mxu0
      %v2713 = vadd.f32 %v2659, %v2708
      %v2714 = vadd.f32 %v2660, %v2711
      %2715 = vmatpush.msra.mxu0 0.0
      %2716 = vmatpush.msra.mxu0 0.0
      %2717 = vmatpush.msra.mxu0 0.0
      %2718 = vmatpush.msra.mxu0 0.0
      %2719 = vmatpush.msra.mxu0 0.0
      %2720 = vmatpush.msra.mxu0 0.0
      %2721 = vmatpush.msra.mxu0 0.0
      %2722 = vmatpush.msra.mxu0 0.0
      %2723 = vmatpush.msra.mxu0 0.0
      %2724 = vmatpush.msra.mxu0 0.0
      %2725 = vmatpush.msra.mxu0 0.0
      %2726 = vmatpush.msra.mxu0 0.0
      %2727 = vmatpush.msra.mxu0 0.0
      %2728 = vmatpush.msra.mxu0 0.0
      %2729 = vmatpush.msra.mxu0 %v2495
      %2730 = vmatpush.msra.mxu0 %v2494
      %2731 = vmatmul.f32.gmra.mxu0 %v2088
      %v2732 = vpop.f32.mrf.mxu0
      %v2733 = vadd.f32 0.0, %v2732
      %2734 = vmatmul.f32.gmra.mxu0 %v2091
      %v2735 = vpop.f32.mrf.mxu0
      %v2736 = vadd.f32 0.0, %v2735
      %2737 = vdwg.mxu0
      %v2739 = vsel %vm1220, %v2733, 0
      %v2742 = vsel %vm1220, %v2736, 0
      %2744 = vmatpush.msra.mxu0 0.0
      %2745 = vmatpush.msra.mxu0 0.0
      %2746 = vmatpush.msra.mxu0 0.0
      %2747 = vmatpush.msra.mxu0 0.0
      %2748 = vmatpush.msra.mxu0 0.0
      %2749 = vmatpush.msra.mxu0 0.0
      %2750 = vmatpush.msra.mxu0 0.0
      %2751 = vmatpush.msra.mxu0 0.0
      %2752 = vmatpush.msra.mxu0 0.0
      %2753 = vmatpush.msra.mxu0 0.0
      %2754 = vmatpush.msra.mxu0 0.0
      %2755 = vmatpush.msra.mxu0 0.0
      %2756 = vmatpush.msra.mxu0 0.0
      %2757 = vmatpush.msra.mxu0 0.0
      %2758 = vmatpush.msra.mxu0 %v2446
      %2759 = vmatpush.msra.mxu0 %v2445
      %2760 = vmatmul.f32.gmra.mxu0 %v2739
      %v2761 = vpop.f32.mrf.mxu0
      %v2762 = vadd.f32 0.0, %v2761
      %2763 = vmatmul.f32.gmra.mxu0 %v2742
      %v2764 = vpop.f32.mrf.mxu0
      %v2765 = vadd.f32 0.0, %v2764
      %2766 = vdwg.mxu0
      %v2767 = vadd.f32 %v2713, %v2762
      %v2768 = vadd.f32 %v2714, %v2765
      %2769 = vmatpush.msra.mxu0 0.0
      %2770 = vmatpush.msra.mxu0 0.0
      %2771 = vmatpush.msra.mxu0 0.0
      %2772 = vmatpush.msra.mxu0 0.0
      %2773 = vmatpush.msra.mxu0 0.0
      %2774 = vmatpush.msra.mxu0 0.0
      %2775 = vmatpush.msra.mxu0 0.0
      %2776 = vmatpush.msra.mxu0 0.0
      %2777 = vmatpush.msra.mxu0 0.0
      %2778 = vmatpush.msra.mxu0 0.0
      %2779 = vmatpush.msra.mxu0 0.0
      %2780 = vmatpush.msra.mxu0 0.0
      %2781 = vmatpush.msra.mxu0 0.0
      %2782 = vmatpush.msra.mxu0 0.0
      %2783 = vmatpush.msra.mxu0 %v2495
      %2784 = vmatpush.msra.mxu0 %v2494
      %2785 = vmatmul.f32.gmra.mxu0 %v2148
      %v2786 = vpop.f32.mrf.mxu0
      %v2787 = vadd.f32 0.0, %v2786
      %2788 = vmatmul.f32.gmra.mxu0 %v2151
      %v2789 = vpop.f32.mrf.mxu0
      %v2790 = vadd.f32 0.0, %v2789
      %2791 = vdwg.mxu0
      %v2793 = vsel %vm1220, %v2787, 0
      %v2796 = vsel %vm1220, %v2790, 0
      %2798 = vmatpush.msra.mxu0 0.0
      %2799 = vmatpush.msra.mxu0 0.0
      %2800 = vmatpush.msra.mxu0 0.0
      %2801 = vmatpush.msra.mxu0 0.0
      %2802 = vmatpush.msra.mxu0 0.0
      %2803 = vmatpush.msra.mxu0 0.0
      %2804 = vmatpush.msra.mxu0 0.0
      %2805 = vmatpush.msra.mxu0 0.0
      %2806 = vmatpush.msra.mxu0 0.0
      %2807 = vmatpush.msra.mxu0 0.0
      %2808 = vmatpush.msra.mxu0 0.0
      %2809 = vmatpush.msra.mxu0 0.0
      %2810 = vmatpush.msra.mxu0 0.0
      %2811 = vmatpush.msra.mxu0 0.0
      %2812 = vmatpush.msra.mxu0 %v2448
      %2813 = vmatpush.msra.mxu0 %v2447
      %2814 = vmatmul.f32.gmra.mxu0 %v2793
      %v2815 = vpop.f32.mrf.mxu0
      %v2816 = vadd.f32 0.0, %v2815
      %2817 = vmatmul.f32.gmra.mxu0 %v2796
      %v2818 = vpop.f32.mrf.mxu0
      %v2819 = vadd.f32 0.0, %v2818
      %2820 = vdwg.mxu0
      %v2821 = vadd.f32 %v2767, %v2816
      %v2822 = vadd.f32 %v2768, %v2819
      %2823 = vmatpush.msra.mxu0 0.0
      %2824 = vmatpush.msra.mxu0 0.0
      %2825 = vmatpush.msra.mxu0 0.0
      %2826 = vmatpush.msra.mxu0 0.0
      %2827 = vmatpush.msra.mxu0 0.0
      %2828 = vmatpush.msra.mxu0 0.0
      %2829 = vmatpush.msra.mxu0 0.0
      %2830 = vmatpush.msra.mxu0 0.0
      %2831 = vmatpush.msra.mxu0 0.0
      %2832 = vmatpush.msra.mxu0 0.0
      %2833 = vmatpush.msra.mxu0 0.0
      %2834 = vmatpush.msra.mxu0 0.0
      %2835 = vmatpush.msra.mxu0 0.0
      %2836 = vmatpush.msra.mxu0 0.0
      %2837 = vmatpush.msra.mxu0 %v2495
      %2838 = vmatpush.msra.mxu0 %v2494
      %2839 = vmatmul.f32.gmra.mxu0 %v2208
      %v2840 = vpop.f32.mrf.mxu0
      %v2841 = vadd.f32 0.0, %v2840
      %2842 = vmatmul.f32.gmra.mxu0 %v2211
      %v2843 = vpop.f32.mrf.mxu0
      %v2844 = vadd.f32 0.0, %v2843
      %2845 = vdwg.mxu0
      %v2847 = vsel %vm1220, %v2841, 0
      %v2850 = vsel %vm1220, %v2844, 0
      %2852 = vmatpush.msra.mxu0 0.0
      %2853 = vmatpush.msra.mxu0 0.0
      %2854 = vmatpush.msra.mxu0 0.0
      %2855 = vmatpush.msra.mxu0 0.0
      %2856 = vmatpush.msra.mxu0 0.0
      %2857 = vmatpush.msra.mxu0 0.0
      %2858 = vmatpush.msra.mxu0 0.0
      %2859 = vmatpush.msra.mxu0 0.0
      %2860 = vmatpush.msra.mxu0 0.0
      %2861 = vmatpush.msra.mxu0 0.0
      %2862 = vmatpush.msra.mxu0 0.0
      %2863 = vmatpush.msra.mxu0 0.0
      %2864 = vmatpush.msra.mxu0 0.0
      %2865 = vmatpush.msra.mxu0 0.0
      %2866 = vmatpush.msra.mxu0 %v2450
      %2867 = vmatpush.msra.mxu0 %v2449
      %2868 = vmatmul.f32.gmra.mxu0 %v2847
      %v2869 = vpop.f32.mrf.mxu0
      %v2870 = vadd.f32 0.0, %v2869
      %2871 = vmatmul.f32.gmra.mxu0 %v2850
      %v2872 = vpop.f32.mrf.mxu0
      %v2873 = vadd.f32 0.0, %v2872
      %2874 = vdwg.mxu0
      %v2875 = vadd.f32 %v2821, %v2870
      %v2876 = vadd.f32 %v2822, %v2873
      %2877 = vmatpush.msra.mxu0 0.0
      %2878 = vmatpush.msra.mxu0 0.0
      %2879 = vmatpush.msra.mxu0 0.0
      %2880 = vmatpush.msra.mxu0 0.0
      %2881 = vmatpush.msra.mxu0 0.0
      %2882 = vmatpush.msra.mxu0 0.0
      %2883 = vmatpush.msra.mxu0 0.0
      %2884 = vmatpush.msra.mxu0 0.0
      %2885 = vmatpush.msra.mxu0 0.0
      %2886 = vmatpush.msra.mxu0 0.0
      %2887 = vmatpush.msra.mxu0 0.0
      %2888 = vmatpush.msra.mxu0 0.0
      %2889 = vmatpush.msra.mxu0 0.0
      %2890 = vmatpush.msra.mxu0 0.0
      %2891 = vmatpush.msra.mxu0 %v2495
      %2892 = vmatpush.msra.mxu0 %v2494
      %2893 = vmatmul.f32.gmra.mxu0 %v2268
      %v2894 = vpop.f32.mrf.mxu0
      %v2895 = vadd.f32 0.0, %v2894
      %2896 = vmatmul.f32.gmra.mxu0 %v2271
      %v2897 = vpop.f32.mrf.mxu0
      %v2898 = vadd.f32 0.0, %v2897
      %2899 = vdwg.mxu0
      %v2901 = vsel %vm1220, %v2895, 0
      %v2904 = vsel %vm1220, %v2898, 0
      %2906 = vmatpush.msra.mxu0 0.0
      %2907 = vmatpush.msra.mxu0 0.0
      %2908 = vmatpush.msra.mxu0 0.0
      %2909 = vmatpush.msra.mxu0 0.0
      %2910 = vmatpush.msra.mxu0 0.0
      %2911 = vmatpush.msra.mxu0 0.0
      %2912 = vmatpush.msra.mxu0 0.0
      %2913 = vmatpush.msra.mxu0 0.0
      %2914 = vmatpush.msra.mxu0 0.0
      %2915 = vmatpush.msra.mxu0 0.0
      %2916 = vmatpush.msra.mxu0 0.0
      %2917 = vmatpush.msra.mxu0 0.0
      %2918 = vmatpush.msra.mxu0 0.0
      %2919 = vmatpush.msra.mxu0 0.0
      %2920 = vmatpush.msra.mxu0 %v2452
      %2921 = vmatpush.msra.mxu0 %v2451
      %2922 = vmatmul.f32.gmra.mxu0 %v2901
      %v2923 = vpop.f32.mrf.mxu0
      %v2924 = vadd.f32 0.0, %v2923
      %2925 = vmatmul.f32.gmra.mxu0 %v2904
      %v2926 = vpop.f32.mrf.mxu0
      %v2927 = vadd.f32 0.0, %v2926
      %2928 = vdwg.mxu0
      %v2929 = vadd.f32 %v2875, %v2924
      %v2930 = vadd.f32 %v2876, %v2927
      %2931 = vmatpush.msra.mxu0 0.0
      %2932 = vmatpush.msra.mxu0 0.0
      %2933 = vmatpush.msra.mxu0 0.0
      %2934 = vmatpush.msra.mxu0 0.0
      %2935 = vmatpush.msra.mxu0 0.0
      %2936 = vmatpush.msra.mxu0 0.0
      %2937 = vmatpush.msra.mxu0 0.0
      %2938 = vmatpush.msra.mxu0 0.0
      %2939 = vmatpush.msra.mxu0 0.0
      %2940 = vmatpush.msra.mxu0 0.0
      %2941 = vmatpush.msra.mxu0 0.0
      %2942 = vmatpush.msra.mxu0 0.0
      %2943 = vmatpush.msra.mxu0 0.0
      %2944 = vmatpush.msra.mxu0 0.0
      %2945 = vmatpush.msra.mxu0 %v2495
      %2946 = vmatpush.msra.mxu0 %v2494
      %2947 = vmatmul.f32.gmra.mxu0 %v2328
      %v2948 = vpop.f32.mrf.mxu0
      %v2949 = vadd.f32 0.0, %v2948
      %2950 = vmatmul.f32.gmra.mxu0 %v2331
      %v2951 = vpop.f32.mrf.mxu0
      %v2952 = vadd.f32 0.0, %v2951
      %2953 = vdwg.mxu0
      %v2955 = vsel %vm1220, %v2949, 0
      %v2958 = vsel %vm1220, %v2952, 0
      %2960 = vmatpush.msra.mxu0 0.0
      %2961 = vmatpush.msra.mxu0 0.0
      %2962 = vmatpush.msra.mxu0 0.0
      %2963 = vmatpush.msra.mxu0 0.0
      %2964 = vmatpush.msra.mxu0 0.0
      %2965 = vmatpush.msra.mxu0 0.0
      %2966 = vmatpush.msra.mxu0 0.0
      %2967 = vmatpush.msra.mxu0 0.0
      %2968 = vmatpush.msra.mxu0 0.0
      %2969 = vmatpush.msra.mxu0 0.0
      %2970 = vmatpush.msra.mxu0 0.0
      %2971 = vmatpush.msra.mxu0 0.0
      %2972 = vmatpush.msra.mxu0 0.0
      %2973 = vmatpush.msra.mxu0 0.0
      %2974 = vmatpush.msra.mxu0 %v2454
      %2975 = vmatpush.msra.mxu0 %v2453
      %2976 = vmatmul.f32.gmra.mxu0 %v2955
      %v2977 = vpop.f32.mrf.mxu0
      %v2978 = vadd.f32 0.0, %v2977
      %2979 = vmatmul.f32.gmra.mxu0 %v2958
      %v2980 = vpop.f32.mrf.mxu0
      %v2981 = vadd.f32 0.0, %v2980
      %2982 = vdwg.mxu0
      %v2983 = vadd.f32 %v2929, %v2978
      %v2984 = vadd.f32 %v2930, %v2981
      %v2985 = vmax.f32 %v2983, 0.0
      %v2986 = vmax.f32 %v2984, 0.0
      %v2988 = vperm.slane %v2461, 0
      %v2991 = vsel %vm1220, %v2985, 0
      %v2994 = vsel %vm1220, %v2986, 0
      %2996 = vmatpush.msra.mxu0 0.0
      %2997 = vmatpush.msra.mxu0 0.0
      %2998 = vmatpush.msra.mxu0 0.0
      %2999 = vmatpush.msra.mxu0 0.0
      %3000 = vmatpush.msra.mxu0 0.0
      %3001 = vmatpush.msra.mxu0 0.0
      %3002 = vmatpush.msra.mxu0 0.0
      %3003 = vmatpush.msra.mxu0 0.0
      %3004 = vmatpush.msra.mxu0 0.0
      %3005 = vmatpush.msra.mxu0 0.0
      %3006 = vmatpush.msra.mxu0 0.0
      %3007 = vmatpush.msra.mxu0 0.0
      %3008 = vmatpush.msra.mxu0 0.0
      %3009 = vmatpush.msra.mxu0 0.0
      %3010 = vmatpush.msra.mxu0 %v2459
      %3011 = vmatpush.msra.mxu0 %v2458
      %3012 = vmatmul.f32.gmra.mxu0 %v2991
      %v3013 = vpop.f32.mrf.mxu0
      %v3014 = vadd.f32 %v2988, %v3013
      %3015 = vmatmul.f32.gmra.mxu0 %v2994
      %v3016 = vpop.f32.mrf.mxu0
      %v3017 = vadd.f32 %v2988, %v3016
      %3018 = vdwg.mxu0
      %v3019 = vadd.f32 %v3014, %v2423
      %v3020 = vadd.f32 %v3017, %v2424
      %v3021 = vmax.f32 %v3019, 0.0
      %v3022 = vmax.f32 %v3020, 0.0
      %v3024 = vsel %vm1220, 1.0, 0
      %3026 = vmatpush.msra.mxu0 0.0
      %3027 = vmatpush.msra.mxu0 0.0
      %3028 = vmatpush.msra.mxu0 0.0
      %3029 = vmatpush.msra.mxu0 0.0
      %3030 = vmatpush.msra.mxu0 0.0
      %3031 = vmatpush.msra.mxu0 0.0
      %3032 = vmatpush.msra.mxu0 0.0
      %3033 = vmatpush.msra.mxu0 0.0
      %3034 = vmatpush.msra.mxu0 0.0
      %3035 = vmatpush.msra.mxu0 0.0
      %3036 = vmatpush.msra.mxu0 0.0
      %3037 = vmatpush.msra.mxu0 0.0
      %3038 = vmatpush.msra.mxu0 0.0
      %3039 = vmatpush.msra.mxu0 0.0
      %3040 = vmatpush.msra.mxu0 %v3022
      %3041 = vmatpush.msra.mxu0 %v3021
      %3042 = vmatmul.f32.gmra.mxu0 %v3024
      %v3043 = vpop.f32.mrf.mxu0
      %v3044 = vadd.f32 0.0, %v3043
      %3045 = vdwg.mxu0
      %v3046 = vmul.f32 %v3044, 0.0625
      %v3047 = vld [vmem:[%s14] sm:$0xff]
      %v3048 = vld [vmem:[%s14 + $0x8] sm:$0xff]
      %v3049 = vld [vmem:[%s14 + $0x10] sm:$0xff]
      %v3050 = vld [vmem:[%s14 + $0x18] sm:$0xff]
      %v3051 = vld [vmem:[%s14 + $0x20] sm:$0xff]
      %v3052 = vld [vmem:[%s14 + $0x28] sm:$0xff]
      %v3053 = vld [vmem:[%s14 + $0x30] sm:$0xff]
      %v3054 = vld [vmem:[%s14 + $0x38] sm:$0xff]
      %v3055 = vld [vmem:[%s15] sm:$0x1]
      %v3057 = vsel %vm1812, %v3046, 0
      %3059 = vmatpush.msra.mxu0 0.0
      %3060 = vmatpush.msra.mxu0 0.0
      %3061 = vmatpush.msra.mxu0 0.0
      %3062 = vmatpush.msra.mxu0 0.0
      %3063 = vmatpush.msra.mxu0 0.0
      %3064 = vmatpush.msra.mxu0 0.0
      %3065 = vmatpush.msra.mxu0 0.0
      %3066 = vmatpush.msra.mxu0 0.0
      %3067 = vmatpush.msra.mxu0 %v3054
      %3068 = vmatpush.msra.mxu0 %v3053
      %3069 = vmatpush.msra.mxu0 %v3052
      %3070 = vmatpush.msra.mxu0 %v3051
      %3071 = vmatpush.msra.mxu0 %v3050
      %3072 = vmatpush.msra.mxu0 %v3049
      %3073 = vmatpush.msra.mxu0 %v3048
      %3074 = vmatpush.msra.mxu0 %v3047
      %3075 = vmatmul.f32.gmra.mxu0 %v3057
      %v3076 = vpop.f32.mrf.mxu0
      %v3077 = vadd.f32 %v3055, %v3076
      %3078 = vdwg.mxu0
      %v3079 = vmax.f32 %v3077, 0.0
      %v3080 = vld [vmem:[%s16] sm:$0xff]
      %v3081 = vld [vmem:[%s16 + $0x8] sm:$0xff]
      %v3082 = vld [vmem:[%s16 + $0x10] sm:$0xff]
      %v3083 = vld [vmem:[%s16 + $0x18] sm:$0xff]
      %v3084 = vld [vmem:[%s17] sm:$0x1]
      %v3086 = vperm.slane %v3084, 0
      %v3089 = vsel %vm1063, %v861, 0
      %v3092 = vsel %vm1063, %v862, 0
      %v3095 = vsel %vm1063, %v863, 0
      %v3098 = vsel %vm1063, %v864, 0
      %v3101 = vsel %vm1063, %v865, 0
      %v3104 = vsel %vm1063, %v866, 0
      %v3107 = vsel %vm1063, %v867, 0
      %v3110 = vsel %vm1063, %v868, 0
      %v3113 = vsel %vm1063, %v869, 0
      %v3116 = vsel %vm1063, %v870, 0
      %v3119 = vsel %vm1063, %v871, 0
      %v3122 = vsel %vm1063, %v872, 0
      %v3125 = vsel %vm1063, %v873, 0
      %v3128 = vsel %vm1063, %v874, 0
      %v3131 = vsel %vm1063, %v875, 0
      %v3134 = vsel %vm1063, %v876, 0
      %v3137 = vsel %vm1063, %v877, 0
      %v3140 = vsel %vm1063, %v878, 0
      %v3143 = vsel %vm1063, %v879, 0
      %v3146 = vsel %vm1063, %v880, 0
      %v3149 = vsel %vm1063, %v881, 0
      %v3152 = vsel %vm1063, %v882, 0
      %v3155 = vsel %vm1063, %v883, 0
      %v3158 = vsel %vm1063, %v884, 0
      %v3161 = vsel %vm1063, %v885, 0
      %v3164 = vsel %vm1063, %v886, 0
      %v3167 = vsel %vm1063, %v887, 0
      %v3170 = vsel %vm1063, %v888, 0
      %v3173 = vsel %vm1063, %v889, 0
      %v3176 = vsel %vm1063, %v890, 0
      %v3179 = vsel %vm1063, %v891, 0
      %v3182 = vsel %vm1063, %v892, 0
      %3184 = vmatpush.msra.mxu0 0.0
      %3185 = vmatpush.msra.mxu0 0.0
      %3186 = vmatpush.msra.mxu0 0.0
      %3187 = vmatpush.msra.mxu0 0.0
      %3188 = vmatpush.msra.mxu0 0.0
      %3189 = vmatpush.msra.mxu0 0.0
      %3190 = vmatpush.msra.mxu0 0.0
      %3191 = vmatpush.msra.mxu0 0.0
      %3192 = vmatpush.msra.mxu0 0.0
      %3193 = vmatpush.msra.mxu0 0.0
      %3194 = vmatpush.msra.mxu0 0.0
      %3195 = vmatpush.msra.mxu0 0.0
      %3196 = vmatpush.msra.mxu0 %v3083
      %3197 = vmatpush.msra.mxu0 %v3082
      %3198 = vmatpush.msra.mxu0 %v3081
      %3199 = vmatpush.msra.mxu0 %v3080
      %3200 = vmatmul.f32.gmra.mxu0 %v3089
      %v3201 = vpop.f32.mrf.mxu0
      %v3202 = vadd.f32 %v3086, %v3201
      %3203 = vmatmul.f32.gmra.mxu0 %v3092
      %v3204 = vpop.f32.mrf.mxu0
      %v3205 = vadd.f32 %v3086, %v3204
      %3206 = vmatmul.f32.gmra.mxu0 %v3095
      %v3207 = vpop.f32.mrf.mxu0
      %v3208 = vadd.f32 %v3086, %v3207
      %3209 = vmatmul.f32.gmra.mxu0 %v3098
      %v3210 = vpop.f32.mrf.mxu0
      %v3211 = vadd.f32 %v3086, %v3210
      %3212 = vmatmul.f32.gmra.mxu0 %v3101
      %v3213 = vpop.f32.mrf.mxu0
      %v3214 = vadd.f32 %v3086, %v3213
      %3215 = vmatmul.f32.gmra.mxu0 %v3104
      %v3216 = vpop.f32.mrf.mxu0
      %v3217 = vadd.f32 %v3086, %v3216
      %3218 = vmatmul.f32.gmra.mxu0 %v3107
      %v3219 = vpop.f32.mrf.mxu0
      %v3220 = vadd.f32 %v3086, %v3219
      %3221 = vmatmul.f32.gmra.mxu0 %v3110
      %v3222 = vpop.f32.mrf.mxu0
      %v3223 = vadd.f32 %v3086, %v3222
      %3224 = vmatmul.f32.gmra.mxu0 %v3113
      %v3225 = vpop.f32.mrf.mxu0
      %v3226 = vadd.f32 %v3086, %v3225
      %3227 = vmatmul.f32.gmra.mxu0 %v3116
      %v3228 = vpop.f32.mrf.mxu0
      %v3229 = vadd.f32 %v3086, %v3228
      %3230 = vmatmul.f32.gmra.mxu0 %v3119
      %v3231 = vpop.f32.mrf.mxu0
      %v3232 = vadd.f32 %v3086, %v3231
      %3233 = vmatmul.f32.gmra.mxu0 %v3122
      %v3234 = vpop.f32.mrf.mxu0
      %v3235 = vadd.f32 %v3086, %v3234
      %3236 = vmatmul.f32.gmra.mxu0 %v3125
      %v3237 = vpop.f32.mrf.mxu0
      %v3238 = vadd.f32 %v3086, %v3237
      %3239 = vmatmul.f32.gmra.mxu0 %v3128
      %v3240 = vpop.f32.mrf.mxu0
      %v3241 = vadd.f32 %v3086, %v3240
      %3242 = vmatmul.f32.gmra.mxu0 %v3131
      %v3243 = vpop.f32.mrf.mxu0
      %v3244 = vadd.f32 %v3086, %v3243
      %3245 = vmatmul.f32.gmra.mxu0 %v3134
      %v3246 = vpop.f32.mrf.mxu0
      %v3247 = vadd.f32 %v3086, %v3246
      %3248 = vmatmul.f32.gmra.mxu0 %v3137
      %v3249 = vpop.f32.mrf.mxu0
      %v3250 = vadd.f32 %v3086, %v3249
      %3251 = vmatmul.f32.gmra.mxu0 %v3140
      %v3252 = vpop.f32.mrf.mxu0
      %v3253 = vadd.f32 %v3086, %v3252
      %3254 = vmatmul.f32.gmra.mxu0 %v3143
      %v3255 = vpop.f32.mrf.mxu0
      %v3256 = vadd.f32 %v3086, %v3255
      %3257 = vmatmul.f32.gmra.mxu0 %v3146
      %v3258 = vpop.f32.mrf.mxu0
      %v3259 = vadd.f32 %v3086, %v3258
      %3260 = vmatmul.f32.gmra.mxu0 %v3149
      %v3261 = vpop.f32.mrf.mxu0
      %v3262 = vadd.f32 %v3086, %v3261
      %3263 = vmatmul.f32.gmra.mxu0 %v3152
      %v3264 = vpop.f32.mrf.mxu0
      %v3265 = vadd.f32 %v3086, %v3264
      %3266 = vmatmul.f32.gmra.mxu0 %v3155
      %v3267 = vpop.f32.mrf.mxu0
      %v3268 = vadd.f32 %v3086, %v3267
      %3269 = vmatmul.f32.gmra.mxu0 %v3158
      %v3270 = vpop.f32.mrf.mxu0
      %v3271 = vadd.f32 %v3086, %v3270
      %3272 = vmatmul.f32.gmra.mxu0 %v3161
      %v3273 = vpop.f32.mrf.mxu0
      %v3274 = vadd.f32 %v3086, %v3273
      %3275 = vmatmul.f32.gmra.mxu0 %v3164
      %v3276 = vpop.f32.mrf.mxu0
      %v3277 = vadd.f32 %v3086, %v3276
      %3278 = vmatmul.f32.gmra.mxu0 %v3167
      %v3279 = vpop.f32.mrf.mxu0
      %v3280 = vadd.f32 %v3086, %v3279
      %3281 = vmatmul.f32.gmra.mxu0 %v3170
      %v3282 = vpop.f32.mrf.mxu0
      %v3283 = vadd.f32 %v3086, %v3282
      %3284 = vmatmul.f32.gmra.mxu0 %v3173
      %v3285 = vpop.f32.mrf.mxu0
      %v3286 = vadd.f32 %v3086, %v3285
      %3287 = vmatmul.f32.gmra.mxu0 %v3176
      %v3288 = vpop.f32.mrf.mxu0
      %v3289 = vadd.f32 %v3086, %v3288
      %3290 = vmatmul.f32.gmra.mxu0 %v3179
      %v3291 = vpop.f32.mrf.mxu0
      %v3292 = vadd.f32 %v3086, %v3291
      %3293 = vmatmul.f32.gmra.mxu0 %v3182
      %v3294 = vpop.f32.mrf.mxu0
      %v3295 = vadd.f32 %v3086, %v3294
      %3296 = vdwg.mxu0
      %v3297 = vld [vmem:[%s18] sm:$0xff]
      %v3298 = vld [vmem:[%s18 + $0x8] sm:$0xff]
      %v3300 = vsel %vm1220, %v3202, 0
      %v3303 = vsel %vm1220, %v3205, 0
      %v3306 = vsel %vm1220, %v3208, 0
      %v3309 = vsel %vm1220, %v3211, 0
      %v3312 = vsel %vm1220, %v3214, 0
      %v3315 = vsel %vm1220, %v3217, 0
      %v3318 = vsel %vm1220, %v3220, 0
      %v3321 = vsel %vm1220, %v3223, 0
      %v3324 = vsel %vm1220, %v3226, 0
      %v3327 = vsel %vm1220, %v3229, 0
      %v3330 = vsel %vm1220, %v3232, 0
      %v3333 = vsel %vm1220, %v3235, 0
      %v3336 = vsel %vm1220, %v3238, 0
      %v3339 = vsel %vm1220, %v3241, 0
      %v3342 = vsel %vm1220, %v3244, 0
      %v3345 = vsel %vm1220, %v3247, 0
      %v3348 = vsel %vm1220, %v3250, 0
      %v3351 = vsel %vm1220, %v3253, 0
      %v3354 = vsel %vm1220, %v3256, 0
      %v3357 = vsel %vm1220, %v3259, 0
      %v3360 = vsel %vm1220, %v3262, 0
      %v3363 = vsel %vm1220, %v3265, 0
      %v3366 = vsel %vm1220, %v3268, 0
      %v3369 = vsel %vm1220, %v3271, 0
      %v3372 = vsel %vm1220, %v3274, 0
      %v3375 = vsel %vm1220, %v3277, 0
      %v3378 = vsel %vm1220, %v3280, 0
      %v3381 = vsel %vm1220, %v3283, 0
      %v3384 = vsel %vm1220, %v3286, 0
      %v3387 = vsel %vm1220, %v3289, 0
      %v3390 = vsel %vm1220, %v3292, 0
      %v3393 = vsel %vm1220, %v3295, 0
      %3395 = vmatpush.msra.mxu0 0.0
      %3396 = vmatpush.msra.mxu0 0.0
      %3397 = vmatpush.msra.mxu0 0.0
      %3398 = vmatpush.msra.mxu0 0.0
      %3399 = vmatpush.msra.mxu0 0.0
      %3400 = vmatpush.msra.mxu0 0.0
      %3401 = vmatpush.msra.mxu0 0.0
      %3402 = vmatpush.msra.mxu0 0.0
      %3403 = vmatpush.msra.mxu0 0.0
      %3404 = vmatpush.msra.mxu0 0.0
      %3405 = vmatpush.msra.mxu0 0.0
      %3406 = vmatpush.msra.mxu0 0.0
      %3407 = vmatpush.msra.mxu0 0.0
      %3408 = vmatpush.msra.mxu0 0.0
      %3409 = vmatpush.msra.mxu0 %v3298
      %3410 = vmatpush.msra.mxu0 %v3297
      %3411 = vmatmul.f32.gmra.mxu0 %v3300
      %v3412 = vpop.f32.mrf.mxu0
      %v3413 = vadd.f32 0.0, %v3412
      %3414 = vmatmul.f32.gmra.mxu0 %v3303
      %v3415 = vpop.f32.mrf.mxu0
      %v3416 = vadd.f32 0.0, %v3415
      %3417 = vmatmul.f32.gmra.mxu0 %v3306
      %v3418 = vpop.f32.mrf.mxu0
      %v3419 = vadd.f32 0.0, %v3418
      %3420 = vmatmul.f32.gmra.mxu0 %v3309
      %v3421 = vpop.f32.mrf.mxu0
      %v3422 = vadd.f32 0.0, %v3421
      %3423 = vmatmul.f32.gmra.mxu0 %v3312
      %v3424 = vpop.f32.mrf.mxu0
      %v3425 = vadd.f32 0.0, %v3424
      %3426 = vmatmul.f32.gmra.mxu0 %v3315
      %v3427 = vpop.f32.mrf.mxu0
      %v3428 = vadd.f32 0.0, %v3427
      %3429 = vmatmul.f32.gmra.mxu0 %v3318
      %v3430 = vpop.f32.mrf.mxu0
      %v3431 = vadd.f32 0.0, %v3430
      %3432 = vmatmul.f32.gmra.mxu0 %v3321
      %v3433 = vpop.f32.mrf.mxu0
      %v3434 = vadd.f32 0.0, %v3433
      %3435 = vmatmul.f32.gmra.mxu0 %v3324
      %v3436 = vpop.f32.mrf.mxu0
      %v3437 = vadd.f32 0.0, %v3436
      %3438 = vmatmul.f32.gmra.mxu0 %v3327
      %v3439 = vpop.f32.mrf.mxu0
      %v3440 = vadd.f32 0.0, %v3439
      %3441 = vmatmul.f32.gmra.mxu0 %v3330
      %v3442 = vpop.f32.mrf.mxu0
      %v3443 = vadd.f32 0.0, %v3442
      %3444 = vmatmul.f32.gmra.mxu0 %v3333
      %v3445 = vpop.f32.mrf.mxu0
      %v3446 = vadd.f32 0.0, %v3445
      %3447 = vmatmul.f32.gmra.mxu0 %v3336
      %v3448 = vpop.f32.mrf.mxu0
      %v3449 = vadd.f32 0.0, %v3448
      %3450 = vmatmul.f32.gmra.mxu0 %v3339
      %v3451 = vpop.f32.mrf.mxu0
      %v3452 = vadd.f32 0.0, %v3451
      %3453 = vmatmul.f32.gmra.mxu0 %v3342
      %v3454 = vpop.f32.mrf.mxu0
      %v3455 = vadd.f32 0.0, %v3454
      %3456 = vmatmul.f32.gmra.mxu0 %v3345
      %v3457 = vpop.f32.mrf.mxu0
      %v3458 = vadd.f32 0.0, %v3457
      %3459 = vmatmul.f32.gmra.mxu0 %v3348
      %v3460 = vpop.f32.mrf.mxu0
      %v3461 = vadd.f32 0.0, %v3460
      %3462 = vmatmul.f32.gmra.mxu0 %v3351
      %v3463 = vpop.f32.mrf.mxu0
      %v3464 = vadd.f32 0.0, %v3463
      %3465 = vmatmul.f32.gmra.mxu0 %v3354
      %v3466 = vpop.f32.mrf.mxu0
      %v3467 = vadd.f32 0.0, %v3466
      %3468 = vmatmul.f32.gmra.mxu0 %v3357
      %v3469 = vpop.f32.mrf.mxu0
      %v3470 = vadd.f32 0.0, %v3469
      %3471 = vmatmul.f32.gmra.mxu0 %v3360
      %v3472 = vpop.f32.mrf.mxu0
      %v3473 = vadd.f32 0.0, %v3472
      %3474 = vmatmul.f32.gmra.mxu0 %v3363
      %v3475 = vpop.f32.mrf.mxu0
      %v3476 = vadd.f32 0.0, %v3475
      %3477 = vmatmul.f32.gmra.mxu0 %v3366
      %v3478 = vpop.f32.mrf.mxu0
      %v3479 = vadd.f32 0.0, %v3478
      %3480 = vmatmul.f32.gmra.mxu0 %v3369
      %v3481 = vpop.f32.mrf.mxu0
      %v3482 = vadd.f32 0.0, %v3481
      %3483 = vmatmul.f32.gmra.mxu0 %v3372
      %v3484 = vpop.f32.mrf.mxu0
      %v3485 = vadd.f32 0.0, %v3484
      %3486 = vmatmul.f32.gmra.mxu0 %v3375
      %v3487 = vpop.f32.mrf.mxu0
      %v3488 = vadd.f32 0.0, %v3487
      %3489 = vmatmul.f32.gmra.mxu0 %v3378
      %v3490 = vpop.f32.mrf.mxu0
      %v3491 = vadd.f32 0.0, %v3490
      %3492 = vmatmul.f32.gmra.mxu0 %v3381
      %v3493 = vpop.f32.mrf.mxu0
      %v3494 = vadd.f32 0.0, %v3493
      %3495 = vmatmul.f32.gmra.mxu0 %v3384
      %v3496 = vpop.f32.mrf.mxu0
      %v3497 = vadd.f32 0.0, %v3496
      %3498 = vmatmul.f32.gmra.mxu0 %v3387
      %v3499 = vpop.f32.mrf.mxu0
      %v3500 = vadd.f32 0.0, %v3499
      %3501 = vmatmul.f32.gmra.mxu0 %v3390
      %v3502 = vpop.f32.mrf.mxu0
      %v3503 = vadd.f32 0.0, %v3502
      %3504 = vmatmul.f32.gmra.mxu0 %v3393
      %v3505 = vpop.f32.mrf.mxu0
      %v3506 = vadd.f32 0.0, %v3505
      %3507 = vdwg.mxu0
      %v3508 = vadd.f32 %v3202, %v3413
      %v3509 = vadd.f32 %v3205, %v3416
      %v3510 = vadd.f32 %v3208, %v3419
      %v3511 = vadd.f32 %v3211, %v3422
      %v3512 = vadd.f32 %v3214, %v3425
      %v3513 = vadd.f32 %v3217, %v3428
      %v3514 = vadd.f32 %v3220, %v3431
      %v3515 = vadd.f32 %v3223, %v3434
      %v3516 = vadd.f32 %v3226, %v3437
      %v3517 = vadd.f32 %v3229, %v3440
      %v3518 = vadd.f32 %v3232, %v3443
      %v3519 = vadd.f32 %v3235, %v3446
      %v3520 = vadd.f32 %v3238, %v3449
      %v3521 = vadd.f32 %v3241, %v3452
      %v3522 = vadd.f32 %v3244, %v3455
      %v3523 = vadd.f32 %v3247, %v3458
      %v3524 = vadd.f32 %v3250, %v3461
      %v3525 = vadd.f32 %v3253, %v3464
      %v3526 = vadd.f32 %v3256, %v3467
      %v3527 = vadd.f32 %v3259, %v3470
      %v3528 = vadd.f32 %v3262, %v3473
      %v3529 = vadd.f32 %v3265, %v3476
      %v3530 = vadd.f32 %v3268, %v3479
      %v3531 = vadd.f32 %v3271, %v3482
      %v3532 = vadd.f32 %v3274, %v3485
      %v3533 = vadd.f32 %v3277, %v3488
      %v3534 = vadd.f32 %v3280, %v3491
      %v3535 = vadd.f32 %v3283, %v3494
      %v3536 = vadd.f32 %v3286, %v3497
      %v3537 = vadd.f32 %v3289, %v3500
      %v3538 = vadd.f32 %v3292, %v3503
      %v3539 = vadd.f32 %v3295, %v3506
      %v3540 = vld [vmem:[%s19] sm:$0x1]
      %v3542 = vperm.slane %v3540, 0
      %v3544 = vadd.f32 %v3508, %v3542
      %v3545 = vadd.f32 %v3509, %v3542
      %v3546 = vadd.f32 %v3510, %v3542
      %v3547 = vadd.f32 %v3511, %v3542
      %v3548 = vadd.f32 %v3512, %v3542
      %v3549 = vadd.f32 %v3513, %v3542
      %v3550 = vadd.f32 %v3514, %v3542
      %v3551 = vadd.f32 %v3515, %v3542
      %v3552 = vadd.f32 %v3516, %v3542
      %v3553 = vadd.f32 %v3517, %v3542
      %v3554 = vadd.f32 %v3518, %v3542
      %v3555 = vadd.f32 %v3519, %v3542
      %v3556 = vadd.f32 %v3520, %v3542
      %v3557 = vadd.f32 %v3521, %v3542
      %v3558 = vadd.f32 %v3522, %v3542
      %v3559 = vadd.f32 %v3523, %v3542
      %v3560 = vadd.f32 %v3524, %v3542
      %v3561 = vadd.f32 %v3525, %v3542
      %v3562 = vadd.f32 %v3526, %v3542
      %v3563 = vadd.f32 %v3527, %v3542
      %v3564 = vadd.f32 %v3528, %v3542
      %v3565 = vadd.f32 %v3529, %v3542
      %v3566 = vadd.f32 %v3530, %v3542
      %v3567 = vadd.f32 %v3531, %v3542
      %v3568 = vadd.f32 %v3532, %v3542
      %v3569 = vadd.f32 %v3533, %v3542
      %v3570 = vadd.f32 %v3534, %v3542
      %v3571 = vadd.f32 %v3535, %v3542
      %v3572 = vadd.f32 %v3536, %v3542
      %v3573 = vadd.f32 %v3537, %v3542
      %v3574 = vadd.f32 %v3538, %v3542
      %v3575 = vadd.f32 %v3539, %v3542
      %v3576 = vmax.f32 %v3544, 0.0
      %v3577 = vmax.f32 %v3545, 0.0
      %v3578 = vmax.f32 %v3546, 0.0
      %v3579 = vmax.f32 %v3547, 0.0
      %v3580 = vmax.f32 %v3548, 0.0
      %v3581 = vmax.f32 %v3549, 0.0
      %v3582 = vmax.f32 %v3550, 0.0
      %v3583 = vmax.f32 %v3551, 0.0
      %v3584 = vmax.f32 %v3552, 0.0
      %v3585 = vmax.f32 %v3553, 0.0
      %v3586 = vmax.f32 %v3554, 0.0
      %v3587 = vmax.f32 %v3555, 0.0
      %v3588 = vmax.f32 %v3556, 0.0
      %v3589 = vmax.f32 %v3557, 0.0
      %v3590 = vmax.f32 %v3558, 0.0
      %v3591 = vmax.f32 %v3559, 0.0
      %v3592 = vmax.f32 %v3560, 0.0
      %v3593 = vmax.f32 %v3561, 0.0
      %v3594 = vmax.f32 %v3562, 0.0
      %v3595 = vmax.f32 %v3563, 0.0
      %v3596 = vmax.f32 %v3564, 0.0
      %v3597 = vmax.f32 %v3565, 0.0
      %v3598 = vmax.f32 %v3566, 0.0
      %v3599 = vmax.f32 %v3567, 0.0
      %v3600 = vmax.f32 %v3568, 0.0
      %v3601 = vmax.f32 %v3569, 0.0
      %v3602 = vmax.f32 %v3570, 0.0
      %v3603 = vmax.f32 %v3571, 0.0
      %v3604 = vmax.f32 %v3572, 0.0
      %v3605 = vmax.f32 %v3573, 0.0
      %v3606 = vmax.f32 %v3574, 0.0
      %v3607 = vmax.f32 %v3575, 0.0
      %v3608 = vld [vmem:[%s20] sm:$0xff]
      %v3609 = vld [vmem:[%s20 + $0x8] sm:$0xff]
      %v3610 = vld [vmem:[%s20 + $0x10] sm:$0xff]
      %v3611 = vld [vmem:[%s20 + $0x18] sm:$0xff]
      %v3612 = vld [vmem:[%s21] sm:$0x1]
      %v3614 = vperm.slane %v3612, 0
      %3616 = vmatpush.msra.mxu0 0.0
      %3617 = vmatpush.msra.mxu0 0.0
      %3618 = vmatpush.msra.mxu0 0.0
      %3619 = vmatpush.msra.mxu0 0.0
      %3620 = vmatpush.msra.mxu0 0.0
      %3621 = vmatpush.msra.mxu0 0.0
      %3622 = vmatpush.msra.mxu0 0.0
      %3623 = vmatpush.msra.mxu0 0.0
      %3624 = vmatpush.msra.mxu0 0.0
      %3625 = vmatpush.msra.mxu0 0.0
      %3626 = vmatpush.msra.mxu0 0.0
      %3627 = vmatpush.msra.mxu0 0.0
      %3628 = vmatpush.msra.mxu0 %v3611
      %3629 = vmatpush.msra.mxu0 %v3610
      %3630 = vmatpush.msra.mxu0 %v3609
      %3631 = vmatpush.msra.mxu0 %v3608
      %3632 = vmatmul.f32.gmra.mxu0 %v3089
      %v3633 = vpop.f32.mrf.mxu0
      %v3634 = vadd.f32 %v3614, %v3633
      %3635 = vmatmul.f32.gmra.mxu0 %v3092
      %v3636 = vpop.f32.mrf.mxu0
      %v3637 = vadd.f32 %v3614, %v3636
      %3638 = vmatmul.f32.gmra.mxu0 %v3095
      %v3639 = vpop.f32.mrf.mxu0
      %v3640 = vadd.f32 %v3614, %v3639
      %3641 = vmatmul.f32.gmra.mxu0 %v3098
      %v3642 = vpop.f32.mrf.mxu0
      %v3643 = vadd.f32 %v3614, %v3642
      %3644 = vmatmul.f32.gmra.mxu0 %v3101
      %v3645 = vpop.f32.mrf.mxu0
      %v3646 = vadd.f32 %v3614, %v3645
      %3647 = vmatmul.f32.gmra.mxu0 %v3104
      %v3648 = vpop.f32.mrf.mxu0
      %v3649 = vadd.f32 %v3614, %v3648
      %3650 = vmatmul.f32.gmra.mxu0 %v3107
      %v3651 = vpop.f32.mrf.mxu0
      %v3652 = vadd.f32 %v3614, %v3651
      %3653 = vmatmul.f32.gmra.mxu0 %v3110
      %v3654 = vpop.f32.mrf.mxu0
      %v3655 = vadd.f32 %v3614, %v3654
      %3656 = vmatmul.f32.gmra.mxu0 %v3113
      %v3657 = vpop.f32.mrf.mxu0
      %v3658 = vadd.f32 %v3614, %v3657
      %3659 = vmatmul.f32.gmra.mxu0 %v3116
      %v3660 = vpop.f32.mrf.mxu0
      %v3661 = vadd.f32 %v3614, %v3660
      %3662 = vmatmul.f32.gmra.mxu0 %v3119
      %v3663 = vpop.f32.mrf.mxu0
      %v3664 = vadd.f32 %v3614, %v3663
      %3665 = vmatmul.f32.gmra.mxu0 %v3122
      %v3666 = vpop.f32.mrf.mxu0
      %v3667 = vadd.f32 %v3614, %v3666
      %3668 = vmatmul.f32.gmra.mxu0 %v3125
      %v3669 = vpop.f32.mrf.mxu0
      %v3670 = vadd.f32 %v3614, %v3669
      %3671 = vmatmul.f32.gmra.mxu0 %v3128
      %v3672 = vpop.f32.mrf.mxu0
      %v3673 = vadd.f32 %v3614, %v3672
      %3674 = vmatmul.f32.gmra.mxu0 %v3131
      %v3675 = vpop.f32.mrf.mxu0
      %v3676 = vadd.f32 %v3614, %v3675
      %3677 = vmatmul.f32.gmra.mxu0 %v3134
      %v3678 = vpop.f32.mrf.mxu0
      %v3679 = vadd.f32 %v3614, %v3678
      %3680 = vmatmul.f32.gmra.mxu0 %v3137
      %v3681 = vpop.f32.mrf.mxu0
      %v3682 = vadd.f32 %v3614, %v3681
      %3683 = vmatmul.f32.gmra.mxu0 %v3140
      %v3684 = vpop.f32.mrf.mxu0
      %v3685 = vadd.f32 %v3614, %v3684
      %3686 = vmatmul.f32.gmra.mxu0 %v3143
      %v3687 = vpop.f32.mrf.mxu0
      %v3688 = vadd.f32 %v3614, %v3687
      %3689 = vmatmul.f32.gmra.mxu0 %v3146
      %v3690 = vpop.f32.mrf.mxu0
      %v3691 = vadd.f32 %v3614, %v3690
      %3692 = vmatmul.f32.gmra.mxu0 %v3149
      %v3693 = vpop.f32.mrf.mxu0
      %v3694 = vadd.f32 %v3614, %v3693
      %3695 = vmatmul.f32.gmra.mxu0 %v3152
      %v3696 = vpop.f32.mrf.mxu0
      %v3697 = vadd.f32 %v3614, %v3696
      %3698 = vmatmul.f32.gmra.mxu0 %v3155
      %v3699 = vpop.f32.mrf.mxu0
      %v3700 = vadd.f32 %v3614, %v3699
      %3701 = vmatmul.f32.gmra.mxu0 %v3158
      %v3702 = vpop.f32.mrf.mxu0
      %v3703 = vadd.f32 %v3614, %v3702
      %3704 = vmatmul.f32.gmra.mxu0 %v3161
      %v3705 = vpop.f32.mrf.mxu0
      %v3706 = vadd.f32 %v3614, %v3705
      %3707 = vmatmul.f32.gmra.mxu0 %v3164
      %v3708 = vpop.f32.mrf.mxu0
      %v3709 = vadd.f32 %v3614, %v3708
      %3710 = vmatmul.f32.gmra.mxu0 %v3167
      %v3711 = vpop.f32.mrf.mxu0
      %v3712 = vadd.f32 %v3614, %v3711
      %3713 = vmatmul.f32.gmra.mxu0 %v3170
      %v3714 = vpop.f32.mrf.mxu0
      %v3715 = vadd.f32 %v3614, %v3714
      %3716 = vmatmul.f32.gmra.mxu0 %v3173
      %v3717 = vpop.f32.mrf.mxu0
      %v3718 = vadd.f32 %v3614, %v3717
      %3719 = vmatmul.f32.gmra.mxu0 %v3176
      %v3720 = vpop.f32.mrf.mxu0
      %v3721 = vadd.f32 %v3614, %v3720
      %3722 = vmatmul.f32.gmra.mxu0 %v3179
      %v3723 = vpop.f32.mrf.mxu0
      %v3724 = vadd.f32 %v3614, %v3723
      %3725 = vmatmul.f32.gmra.mxu0 %v3182
      %v3726 = vpop.f32.mrf.mxu0
      %v3727 = vadd.f32 %v3614, %v3726
      %3728 = vdwg.mxu0
      %v3729 = vld [vmem:[%s22] sm:$0xff]
      %v3730 = vld [vmem:[%s22 + $0x8] sm:$0xff]
      %v3732 = vsel %vm1220, %v3634, 0
      %v3735 = vsel %vm1220, %v3637, 0
      %v3738 = vsel %vm1220, %v3640, 0
      %v3741 = vsel %vm1220, %v3643, 0
      %v3744 = vsel %vm1220, %v3646, 0
      %v3747 = vsel %vm1220, %v3649, 0
      %v3750 = vsel %vm1220, %v3652, 0
      %v3753 = vsel %vm1220, %v3655, 0
      %v3756 = vsel %vm1220, %v3658, 0
      %v3759 = vsel %vm1220, %v3661, 0
      %v3762 = vsel %vm1220, %v3664, 0
      %v3765 = vsel %vm1220, %v3667, 0
      %v3768 = vsel %vm1220, %v3670, 0
      %v3771 = vsel %vm1220, %v3673, 0
      %v3774 = vsel %vm1220, %v3676, 0
      %v3777 = vsel %vm1220, %v3679, 0
      %v3780 = vsel %vm1220, %v3682, 0
      %v3783 = vsel %vm1220, %v3685, 0
      %v3786 = vsel %vm1220, %v3688, 0
      %v3789 = vsel %vm1220, %v3691, 0
      %v3792 = vsel %vm1220, %v3694, 0
      %v3795 = vsel %vm1220, %v3697, 0
      %v3798 = vsel %vm1220, %v3700, 0
      %v3801 = vsel %vm1220, %v3703, 0
      %v3804 = vsel %vm1220, %v3706, 0
      %v3807 = vsel %vm1220, %v3709, 0
      %v3810 = vsel %vm1220, %v3712, 0
      %v3813 = vsel %vm1220, %v3715, 0
      %v3816 = vsel %vm1220, %v3718, 0
      %v3819 = vsel %vm1220, %v3721, 0
      %v3822 = vsel %vm1220, %v3724, 0
      %v3825 = vsel %vm1220, %v3727, 0
      %3827 = vmatpush.msra.mxu0 0.0
      %3828 = vmatpush.msra.mxu0 0.0
      %3829 = vmatpush.msra.mxu0 0.0
      %3830 = vmatpush.msra.mxu0 0.0
      %3831 = vmatpush.msra.mxu0 0.0
      %3832 = vmatpush.msra.mxu0 0.0
      %3833 = vmatpush.msra.mxu0 0.0
      %3834 = vmatpush.msra.mxu0 0.0
      %3835 = vmatpush.msra.mxu0 0.0
      %3836 = vmatpush.msra.mxu0 0.0
      %3837 = vmatpush.msra.mxu0 0.0
      %3838 = vmatpush.msra.mxu0 0.0
      %3839 = vmatpush.msra.mxu0 0.0
      %3840 = vmatpush.msra.mxu0 0.0
      %3841 = vmatpush.msra.mxu0 %v3730
      %3842 = vmatpush.msra.mxu0 %v3729
      %3843 = vmatmul.f32.gmra.mxu0 %v3732
      %v3844 = vpop.f32.mrf.mxu0
      %v3845 = vadd.f32 0.0, %v3844
      %3846 = vmatmul.f32.gmra.mxu0 %v3735
      %v3847 = vpop.f32.mrf.mxu0
      %v3848 = vadd.f32 0.0, %v3847
      %3849 = vmatmul.f32.gmra.mxu0 %v3738
      %v3850 = vpop.f32.mrf.mxu0
      %v3851 = vadd.f32 0.0, %v3850
      %3852 = vmatmul.f32.gmra.mxu0 %v3741
      %v3853 = vpop.f32.mrf.mxu0
      %v3854 = vadd.f32 0.0, %v3853
      %3855 = vmatmul.f32.gmra.mxu0 %v3744
      %v3856 = vpop.f32.mrf.mxu0
      %v3857 = vadd.f32 0.0, %v3856
      %3858 = vmatmul.f32.gmra.mxu0 %v3747
      %v3859 = vpop.f32.mrf.mxu0
      %v3860 = vadd.f32 0.0, %v3859
      %3861 = vmatmul.f32.gmra.mxu0 %v3750
      %v3862 = vpop.f32.mrf.mxu0
      %v3863 = vadd.f32 0.0, %v3862
      %3864 = vmatmul.f32.gmra.mxu0 %v3753
      %v3865 = vpop.f32.mrf.mxu0
      %v3866 = vadd.f32 0.0, %v3865
      %3867 = vmatmul.f32.gmra.mxu0 %v3756
      %v3868 = vpop.f32.mrf.mxu0
      %v3869 = vadd.f32 0.0, %v3868
      %3870 = vmatmul.f32.gmra.mxu0 %v3759
      %v3871 = vpop.f32.mrf.mxu0
      %v3872 = vadd.f32 0.0, %v3871
      %3873 = vmatmul.f32.gmra.mxu0 %v3762
      %v3874 = vpop.f32.mrf.mxu0
      %v3875 = vadd.f32 0.0, %v3874
      %3876 = vmatmul.f32.gmra.mxu0 %v3765
      %v3877 = vpop.f32.mrf.mxu0
      %v3878 = vadd.f32 0.0, %v3877
      %3879 = vmatmul.f32.gmra.mxu0 %v3768
      %v3880 = vpop.f32.mrf.mxu0
      %v3881 = vadd.f32 0.0, %v3880
      %3882 = vmatmul.f32.gmra.mxu0 %v3771
      %v3883 = vpop.f32.mrf.mxu0
      %v3884 = vadd.f32 0.0, %v3883
      %3885 = vmatmul.f32.gmra.mxu0 %v3774
      %v3886 = vpop.f32.mrf.mxu0
      %v3887 = vadd.f32 0.0, %v3886
      %3888 = vmatmul.f32.gmra.mxu0 %v3777
      %v3889 = vpop.f32.mrf.mxu0
      %v3890 = vadd.f32 0.0, %v3889
      %3891 = vmatmul.f32.gmra.mxu0 %v3780
      %v3892 = vpop.f32.mrf.mxu0
      %v3893 = vadd.f32 0.0, %v3892
      %3894 = vmatmul.f32.gmra.mxu0 %v3783
      %v3895 = vpop.f32.mrf.mxu0
      %v3896 = vadd.f32 0.0, %v3895
      %3897 = vmatmul.f32.gmra.mxu0 %v3786
      %v3898 = vpop.f32.mrf.mxu0
      %v3899 = vadd.f32 0.0, %v3898
      %3900 = vmatmul.f32.gmra.mxu0 %v3789
      %v3901 = vpop.f32.mrf.mxu0
      %v3902 = vadd.f32 0.0, %v3901
      %3903 = vmatmul.f32.gmra.mxu0 %v3792
      %v3904 = vpop.f32.mrf.mxu0
      %v3905 = vadd.f32 0.0, %v3904
      %3906 = vmatmul.f32.gmra.mxu0 %v3795
      %v3907 = vpop.f32.mrf.mxu0
      %v3908 = vadd.f32 0.0, %v3907
      %3909 = vmatmul.f32.gmra.mxu0 %v3798
      %v3910 = vpop.f32.mrf.mxu0
      %v3911 = vadd.f32 0.0, %v3910
      %3912 = vmatmul.f32.gmra.mxu0 %v3801
      %v3913 = vpop.f32.mrf.mxu0
      %v3914 = vadd.f32 0.0, %v3913
      %3915 = vmatmul.f32.gmra.mxu0 %v3804
      %v3916 = vpop.f32.mrf.mxu0
      %v3917 = vadd.f32 0.0, %v3916
      %3918 = vmatmul.f32.gmra.mxu0 %v3807
      %v3919 = vpop.f32.mrf.mxu0
      %v3920 = vadd.f32 0.0, %v3919
      %3921 = vmatmul.f32.gmra.mxu0 %v3810
      %v3922 = vpop.f32.mrf.mxu0
      %v3923 = vadd.f32 0.0, %v3922
      %3924 = vmatmul.f32.gmra.mxu0 %v3813
      %v3925 = vpop.f32.mrf.mxu0
      %v3926 = vadd.f32 0.0, %v3925
      %3927 = vmatmul.f32.gmra.mxu0 %v3816
      %v3928 = vpop.f32.mrf.mxu0
      %v3929 = vadd.f32 0.0, %v3928
      %3930 = vmatmul.f32.gmra.mxu0 %v3819
      %v3931 = vpop.f32.mrf.mxu0
      %v3932 = vadd.f32 0.0, %v3931
      %3933 = vmatmul.f32.gmra.mxu0 %v3822
      %v3934 = vpop.f32.mrf.mxu0
      %v3935 = vadd.f32 0.0, %v3934
      %3936 = vmatmul.f32.gmra.mxu0 %v3825
      %v3937 = vpop.f32.mrf.mxu0
      %v3938 = vadd.f32 0.0, %v3937
      %3939 = vdwg.mxu0
      %v3940 = vadd.f32 %v3634, %v3845
      %v3941 = vadd.f32 %v3637, %v3848
      %v3942 = vadd.f32 %v3640, %v3851
      %v3943 = vadd.f32 %v3643, %v3854
      %v3944 = vadd.f32 %v3646, %v3857
      %v3945 = vadd.f32 %v3649, %v3860
      %v3946 = vadd.f32 %v3652, %v3863
      %v3947 = vadd.f32 %v3655, %v3866
      %v3948 = vadd.f32 %v3658, %v3869
      %v3949 = vadd.f32 %v3661, %v3872
      %v3950 = vadd.f32 %v3664, %v3875
      %v3951 = vadd.f32 %v3667, %v3878
      %v3952 = vadd.f32 %v3670, %v3881
      %v3953 = vadd.f32 %v3673, %v3884
      %v3954 = vadd.f32 %v3676, %v3887
      %v3955 = vadd.f32 %v3679, %v3890
      %v3956 = vadd.f32 %v3682, %v3893
      %v3957 = vadd.f32 %v3685, %v3896
      %v3958 = vadd.f32 %v3688, %v3899
      %v3959 = vadd.f32 %v3691, %v3902
      %v3960 = vadd.f32 %v3694, %v3905
      %v3961 = vadd.f32 %v3697, %v3908
      %v3962 = vadd.f32 %v3700, %v3911
      %v3963 = vadd.f32 %v3703, %v3914
      %v3964 = vadd.f32 %v3706, %v3917
      %v3965 = vadd.f32 %v3709, %v3920
      %v3966 = vadd.f32 %v3712, %v3923
      %v3967 = vadd.f32 %v3715, %v3926
      %v3968 = vadd.f32 %v3718, %v3929
      %v3969 = vadd.f32 %v3721, %v3932
      %v3970 = vadd.f32 %v3724, %v3935
      %v3971 = vadd.f32 %v3727, %v3938
      %v3972 = vld [vmem:[%s23] sm:$0x1]
      %v3974 = vperm.slane %v3972, 0
      %v3976 = vadd.f32 %v3940, %v3974
      %v3977 = vadd.f32 %v3941, %v3974
      %v3978 = vadd.f32 %v3942, %v3974
      %v3979 = vadd.f32 %v3943, %v3974
      %v3980 = vadd.f32 %v3944, %v3974
      %v3981 = vadd.f32 %v3945, %v3974
      %v3982 = vadd.f32 %v3946, %v3974
      %v3983 = vadd.f32 %v3947, %v3974
      %v3984 = vadd.f32 %v3948, %v3974
      %v3985 = vadd.f32 %v3949, %v3974
      %v3986 = vadd.f32 %v3950, %v3974
      %v3987 = vadd.f32 %v3951, %v3974
      %v3988 = vadd.f32 %v3952, %v3974
      %v3989 = vadd.f32 %v3953, %v3974
      %v3990 = vadd.f32 %v3954, %v3974
      %v3991 = vadd.f32 %v3955, %v3974
      %v3992 = vadd.f32 %v3956, %v3974
      %v3993 = vadd.f32 %v3957, %v3974
      %v3994 = vadd.f32 %v3958, %v3974
      %v3995 = vadd.f32 %v3959, %v3974
      %v3996 = vadd.f32 %v3960, %v3974
      %v3997 = vadd.f32 %v3961, %v3974
      %v3998 = vadd.f32 %v3962, %v3974
      %v3999 = vadd.f32 %v3963, %v3974
      %v4000 = vadd.f32 %v3964, %v3974
      %v4001 = vadd.f32 %v3965, %v3974
      %v4002 = vadd.f32 %v3966, %v3974
      %v4003 = vadd.f32 %v3967, %v3974
      %v4004 = vadd.f32 %v3968, %v3974
      %v4005 = vadd.f32 %v3969, %v3974
      %v4006 = vadd.f32 %v3970, %v3974
      %v4007 = vadd.f32 %v3971, %v3974
      %v4008 = vmax.f32 %v3976, 0.0
      %v4009 = vmax.f32 %v3977, 0.0
      %v4010 = vmax.f32 %v3978, 0.0
      %v4011 = vmax.f32 %v3979, 0.0
      %v4012 = vmax.f32 %v3980, 0.0
      %v4013 = vmax.f32 %v3981, 0.0
      %v4014 = vmax.f32 %v3982, 0.0
      %v4015 = vmax.f32 %v3983, 0.0
      %v4016 = vmax.f32 %v3984, 0.0
      %v4017 = vmax.f32 %v3985, 0.0
      %v4018 = vmax.f32 %v3986, 0.0
      %v4019 = vmax.f32 %v3987, 0.0
      %v4020 = vmax.f32 %v3988, 0.0
      %v4021 = vmax.f32 %v3989, 0.0
      %v4022 = vmax.f32 %v3990, 0.0
      %v4023 = vmax.f32 %v3991, 0.0
      %v4024 = vmax.f32 %v3992, 0.0
      %v4025 = vmax.f32 %v3993, 0.0
      %v4026 = vmax.f32 %v3994, 0.0
      %v4027 = vmax.f32 %v3995, 0.0
      %v4028 = vmax.f32 %v3996, 0.0
      %v4029 = vmax.f32 %v3997, 0.0
      %v4030 = vmax.f32 %v3998, 0.0
      %v4031 = vmax.f32 %v3999, 0.0
      %v4032 = vmax.f32 %v4000, 0.0
      %v4033 = vmax.f32 %v4001, 0.0
      %v4034 = vmax.f32 %v4002, 0.0
      %v4035 = vmax.f32 %v4003, 0.0
      %v4036 = vmax.f32 %v4004, 0.0
      %v4037 = vmax.f32 %v4005, 0.0
      %v4038 = vmax.f32 %v4006, 0.0
      %v4039 = vmax.f32 %v4007, 0.0
      %v4040 = vld [vmem:[%s24] sm:$0xff]
      %v4041 = vld [vmem:[%s24 + $0x8] sm:$0xff]
      %v4043 = vsel %vm1220, %v4008, 0
      %v4046 = vsel %vm1220, %v4009, 0
      %v4049 = vsel %vm1220, %v4010, 0
      %v4052 = vsel %vm1220, %v4011, 0
      %v4055 = vsel %vm1220, %v4012, 0
      %v4058 = vsel %vm1220, %v4013, 0
      %v4061 = vsel %vm1220, %v4014, 0
      %v4064 = vsel %vm1220, %v4015, 0
      %v4067 = vsel %vm1220, %v4016, 0
      %v4070 = vsel %vm1220, %v4017, 0
      %v4073 = vsel %vm1220, %v4018, 0
      %v4076 = vsel %vm1220, %v4019, 0
      %v4079 = vsel %vm1220, %v4020, 0
      %v4082 = vsel %vm1220, %v4021, 0
      %v4085 = vsel %vm1220, %v4022, 0
      %v4088 = vsel %vm1220, %v4023, 0
      %v4091 = vsel %vm1220, %v4024, 0
      %v4094 = vsel %vm1220, %v4025, 0
      %v4097 = vsel %vm1220, %v4026, 0
      %v4100 = vsel %vm1220, %v4027, 0
      %v4103 = vsel %vm1220, %v4028, 0
      %v4106 = vsel %vm1220, %v4029, 0
      %v4109 = vsel %vm1220, %v4030, 0
      %v4112 = vsel %vm1220, %v4031, 0
      %v4115 = vsel %vm1220, %v4032, 0
      %v4118 = vsel %vm1220, %v4033, 0
      %v4121 = vsel %vm1220, %v4034, 0
      %v4124 = vsel %vm1220, %v4035, 0
      %v4127 = vsel %vm1220, %v4036, 0
      %v4130 = vsel %vm1220, %v4037, 0
      %v4133 = vsel %vm1220, %v4038, 0
      %v4136 = vsel %vm1220, %v4039, 0
      %4138 = vmatpush.msra.mxu0 0.0
      %4139 = vmatpush.msra.mxu0 0.0
      %4140 = vmatpush.msra.mxu0 0.0
      %4141 = vmatpush.msra.mxu0 0.0
      %4142 = vmatpush.msra.mxu0 0.0
      %4143 = vmatpush.msra.mxu0 0.0
      %4144 = vmatpush.msra.mxu0 0.0
      %4145 = vmatpush.msra.mxu0 0.0
      %4146 = vmatpush.msra.mxu0 0.0
      %4147 = vmatpush.msra.mxu0 0.0
      %4148 = vmatpush.msra.mxu0 0.0
      %4149 = vmatpush.msra.mxu0 0.0
      %4150 = vmatpush.msra.mxu0 0.0
      %4151 = vmatpush.msra.mxu0 0.0
      %4152 = vmatpush.msra.mxu0 %v4041
      %4153 = vmatpush.msra.mxu0 %v4040
      %4154 = vmatmul.f32.gmra.mxu0 %v4043
      %v4155 = vpop.f32.mrf.mxu0
      %v4156 = vadd.f32 0.0, %v4155
      %4157 = vmatmul.f32.gmra.mxu0 %v4046
      %v4158 = vpop.f32.mrf.mxu0
      %v4159 = vadd.f32 0.0, %v4158
      %4160 = vmatmul.f32.gmra.mxu0 %v4049
      %v4161 = vpop.f32.mrf.mxu0
      %v4162 = vadd.f32 0.0, %v4161
      %4163 = vmatmul.f32.gmra.mxu0 %v4052
      %v4164 = vpop.f32.mrf.mxu0
      %v4165 = vadd.f32 0.0, %v4164
      %4166 = vmatmul.f32.gmra.mxu0 %v4055
      %v4167 = vpop.f32.mrf.mxu0
      %v4168 = vadd.f32 0.0, %v4167
      %4169 = vmatmul.f32.gmra.mxu0 %v4058
      %v4170 = vpop.f32.mrf.mxu0
      %v4171 = vadd.f32 0.0, %v4170
      %4172 = vmatmul.f32.gmra.mxu0 %v4061
      %v4173 = vpop.f32.mrf.mxu0
      %v4174 = vadd.f32 0.0, %v4173
      %4175 = vmatmul.f32.gmra.mxu0 %v4064
      %v4176 = vpop.f32.mrf.mxu0
      %v4177 = vadd.f32 0.0, %v4176
      %4178 = vmatmul.f32.gmra.mxu0 %v4067
      %v4179 = vpop.f32.mrf.mxu0
      %v4180 = vadd.f32 0.0, %v4179
      %4181 = vmatmul.f32.gmra.mxu0 %v4070
      %v4182 = vpop.f32.mrf.mxu0
      %v4183 = vadd.f32 0.0, %v4182
      %4184 = vmatmul.f32.gmra.mxu0 %v4073
      %v4185 = vpop.f32.mrf.mxu0
      %v4186 = vadd.f32 0.0, %v4185
      %4187 = vmatmul.f32.gmra.mxu0 %v4076
      %v4188 = vpop.f32.mrf.mxu0
      %v4189 = vadd.f32 0.0, %v4188
      %4190 = vmatmul.f32.gmra.mxu0 %v4079
      %v4191 = vpop.f32.mrf.mxu0
      %v4192 = vadd.f32 0.0, %v4191
      %4193 = vmatmul.f32.gmra.mxu0 %v4082
      %v4194 = vpop.f32.mrf.mxu0
      %v4195 = vadd.f32 0.0, %v4194
      %4196 = vmatmul.f32.gmra.mxu0 %v4085
      %v4197 = vpop.f32.mrf.mxu0
      %v4198 = vadd.f32 0.0, %v4197
      %4199 = vmatmul.f32.gmra.mxu0 %v4088
      %v4200 = vpop.f32.mrf.mxu0
      %v4201 = vadd.f32 0.0, %v4200
      %4202 = vmatmul.f32.gmra.mxu0 %v4091
      %v4203 = vpop.f32.mrf.mxu0
      %v4204 = vadd.f32 0.0, %v4203
      %4205 = vmatmul.f32.gmra.mxu0 %v4094
      %v4206 = vpop.f32.mrf.mxu0
      %v4207 = vadd.f32 0.0, %v4206
      %4208 = vmatmul.f32.gmra.mxu0 %v4097
      %v4209 = vpop.f32.mrf.mxu0
      %v4210 = vadd.f32 0.0, %v4209
      %4211 = vmatmul.f32.gmra.mxu0 %v4100
      %v4212 = vpop.f32.mrf.mxu0
      %v4213 = vadd.f32 0.0, %v4212
      %4214 = vmatmul.f32.gmra.mxu0 %v4103
      %v4215 = vpop.f32.mrf.mxu0
      %v4216 = vadd.f32 0.0, %v4215
      %4217 = vmatmul.f32.gmra.mxu0 %v4106
      %v4218 = vpop.f32.mrf.mxu0
      %v4219 = vadd.f32 0.0, %v4218
      %4220 = vmatmul.f32.gmra.mxu0 %v4109
      %v4221 = vpop.f32.mrf.mxu0
      %v4222 = vadd.f32 0.0, %v4221
      %4223 = vmatmul.f32.gmra.mxu0 %v4112
      %v4224 = vpop.f32.mrf.mxu0
      %v4225 = vadd.f32 0.0, %v4224
      %4226 = vmatmul.f32.gmra.mxu0 %v4115
      %v4227 = vpop.f32.mrf.mxu0
      %v4228 = vadd.f32 0.0, %v4227
      %4229 = vmatmul.f32.gmra.mxu0 %v4118
      %v4230 = vpop.f32.mrf.mxu0
      %v4231 = vadd.f32 0.0, %v4230
      %4232 = vmatmul.f32.gmra.mxu0 %v4121
      %v4233 = vpop.f32.mrf.mxu0
      %v4234 = vadd.f32 0.0, %v4233
      %4235 = vmatmul.f32.gmra.mxu0 %v4124
      %v4236 = vpop.f32.mrf.mxu0
      %v4237 = vadd.f32 0.0, %v4236
      %4238 = vmatmul.f32.gmra.mxu0 %v4127
      %v4239 = vpop.f32.mrf.mxu0
      %v4240 = vadd.f32 0.0, %v4239
      %4241 = vmatmul.f32.gmra.mxu0 %v4130
      %v4242 = vpop.f32.mrf.mxu0
      %v4243 = vadd.f32 0.0, %v4242
      %4244 = vmatmul.f32.gmra.mxu0 %v4133
      %v4245 = vpop.f32.mrf.mxu0
      %v4246 = vadd.f32 0.0, %v4245
      %4247 = vmatmul.f32.gmra.mxu0 %v4136
      %v4248 = vpop.f32.mrf.mxu0
      %v4249 = vadd.f32 0.0, %v4248
      %4250 = vdwg.mxu0
      %v4252 = vsel %vm1220, %v3079, 0
      %v4255 = vsel %vm1220, %v3576, 0
      %v4258 = vsel %vm1220, %v3577, 0
      %v4261 = vsel %vm1220, %v3578, 0
      %v4264 = vsel %vm1220, %v3579, 0
      %v4267 = vsel %vm1220, %v3580, 0
      %v4270 = vsel %vm1220, %v3581, 0
      %v4273 = vsel %vm1220, %v3582, 0
      %v4276 = vsel %vm1220, %v3583, 0
      %v4279 = vsel %vm1220, %v3584, 0
      %v4282 = vsel %vm1220, %v3585, 0
      %v4285 = vsel %vm1220, %v3586, 0
      %v4288 = vsel %vm1220, %v3587, 0
      %v4291 = vsel %vm1220, %v3588, 0
      %v4294 = vsel %vm1220, %v3589, 0
      %v4297 = vsel %vm1220, %v3590, 0
      %v4300 = vsel %vm1220, %v3591, 0
      %v4303 = vsel %vm1220, %v3592, 0
      %v4306 = vsel %vm1220, %v3593, 0
      %v4309 = vsel %vm1220, %v3594, 0
      %v4312 = vsel %vm1220, %v3595, 0
      %v4315 = vsel %vm1220, %v3596, 0
      %v4318 = vsel %vm1220, %v3597, 0
      %v4321 = vsel %vm1220, %v3598, 0
      %v4324 = vsel %vm1220, %v3599, 0
      %v4327 = vsel %vm1220, %v3600, 0
      %v4330 = vsel %vm1220, %v3601, 0
      %v4333 = vsel %vm1220, %v3602, 0
      %v4336 = vsel %vm1220, %v3603, 0
      %v4339 = vsel %vm1220, %v3604, 0
      %v4342 = vsel %vm1220, %v3605, 0
      %v4345 = vsel %vm1220, %v3606, 0
      %v4348 = vsel %vm1220, %v3607, 0
      %4350 = vmatpush.xpose.msra.mxu0 %v4300
      %4351 = vmatpush.xpose.msra.mxu0 %v4297
      %4352 = vmatpush.xpose.msra.mxu0 %v4294
      %4353 = vmatpush.xpose.msra.mxu0 %v4291
      %4354 = vmatpush.xpose.msra.mxu0 %v4288
      %4355 = vmatpush.xpose.msra.mxu0 %v4285
      %4356 = vmatpush.xpose.msra.mxu0 %v4282
      %4357 = vmatpush.xpose.msra.mxu0 %v4279
      %4358 = vmatpush.xpose.msra.mxu0 %v4276
      %4359 = vmatpush.xpose.msra.mxu0 %v4273
      %4360 = vmatpush.xpose.msra.mxu0 %v4270
      %4361 = vmatpush.xpose.msra.mxu0 %v4267
      %4362 = vmatpush.xpose.msra.mxu0 %v4264
      %4363 = vmatpush.xpose.msra.mxu0 %v4261
      %4364 = vmatpush.xpose.msra.mxu0 %v4258
      %4365 = vmatpush.xpose.msra.mxu0 %v4255
      %4366 = vmatmul.f32.gmra.mxu0 %v4252
      %v4367 = vpop.f32.mrf.mxu0
      %v4368 = vadd.f32 0.0, %v4367
      %4369 = vdwg.mxu0
      %4370 = vmatpush.xpose.msra.mxu0 %v4348
      %4371 = vmatpush.xpose.msra.mxu0 %v4345
      %4372 = vmatpush.xpose.msra.mxu0 %v4342
      %4373 = vmatpush.xpose.msra.mxu0 %v4339
      %4374 = vmatpush.xpose.msra.mxu0 %v4336
      %4375 = vmatpush.xpose.msra.mxu0 %v4333
      %4376 = vmatpush.xpose.msra.mxu0 %v4330
      %4377 = vmatpush.xpose.msra.mxu0 %v4327
      %4378 = vmatpush.xpose.msra.mxu0 %v4324
      %4379 = vmatpush.xpose.msra.mxu0 %v4321
      %4380 = vmatpush.xpose.msra.mxu0 %v4318
      %4381 = vmatpush.xpose.msra.mxu0 %v4315
      %4382 = vmatpush.xpose.msra.mxu0 %v4312
      %4383 = vmatpush.xpose.msra.mxu0 %v4309
      %4384 = vmatpush.xpose.msra.mxu0 %v4306
      %4385 = vmatpush.xpose.msra.mxu0 %v4303
      %4386 = vmatmul.f32.gmra.mxu0 %v4252
      %v4387 = vpop.f32.mrf.mxu0
      %v4388 = vadd.f32 0.0, %v4387
      %4389 = vdwg.mxu0
      %v4390 = vmul.f32 %v4368, 0.0625
      %v4391 = vmul.f32 %v4388, 0.0625
      %v4392 = vsel %vm1028, %v4390, -inf
      %v4393 = vsel %vm1028, %v4391, -inf
      %v4394 = vmax.f32 %v4392, %v4393
      %4395 = vmax.xlane.f32.xlu0 %v4394
      %v4396 = vpop.xlane.xlu0 %4395
      %v4397 = vsub.f32 %v4390, %v4396
      %v4398 = vsub.f32 %v4391, %v4396
      %v4399 = vmul.f32 %v4397, 1.442695
      %v4400 = vpow.pop %v4399
      %v4401 = vmul.f32 %v4398, 1.442695
      %v4402 = vpow.pop %v4401
      %v4403 = vsel %vm1028, %v4400, 0.0
      %v4404 = vsel %vm1028, %v4402, 0.0
      %v4405 = vadd.f32 %v4403, %v4404
      %4406 = vadd.xlane.f32.xlu0 %v4405
      %v4407 = vpop.xlane.xlu0 %4406
      %v4408 = vrcp.pop %v4407
      %v4409 = vmul.f32 %v4407, %v4408
      %v4410 = vsub.f32 1.0, %v4409
      %v4411 = vmul.f32 %v4408, %v4410
      %v4412 = vadd.f32 %v4408, %v4411
      %vm4413 = vweird.f32 %v4407
      %vm4414 = vweird.f32 %v4408
      %vm4415 = vmor %vm4413, %vm4414
      %v4416 = vsel %vm4415, %v4408, %v4412
      %v4417 = vand.u32 2147483647, %v4407
      %vm4418 = vcmp.eq.f32.partialorder %v4417, 8.507059e+37
      %v4419 = vand.u32 %v4407, 2147483648
      %v4420 = vor.u32 1.1754944e-38, %v4419
      %v4421 = vsel %vm4418, %v4420, %v4416
      %v4422 = vmul.f32 %v4400, %v4421
      %v4423 = vmul.f32 %v4402, %v4421
      %4424 = vmatpush.msra.mxu0 %v4201
      %4425 = vmatpush.msra.mxu0 %v4198
      %4426 = vmatpush.msra.mxu0 %v4195
      %4427 = vmatpush.msra.mxu0 %v4192
      %4428 = vmatpush.msra.mxu0 %v4189
      %4429 = vmatpush.msra.mxu0 %v4186
      %4430 = vmatpush.msra.mxu0 %v4183
      %4431 = vmatpush.msra.mxu0 %v4180
      %4432 = vmatpush.msra.mxu0 %v4177
      %4433 = vmatpush.msra.mxu0 %v4174
      %4434 = vmatpush.msra.mxu0 %v4171
      %4435 = vmatpush.msra.mxu0 %v4168
      %4436 = vmatpush.msra.mxu0 %v4165
      %4437 = vmatpush.msra.mxu0 %v4162
      %4438 = vmatpush.msra.mxu0 %v4159
      %4439 = vmatpush.msra.mxu0 %v4156
      %4440 = vmatmul.f32.gmra.mxu0 %v4422
      %v4441 = vpop.f32.mrf.mxu0
      %v4442 = vadd.f32 0.0, %v4441
      %4443 = vdwg.mxu0
      %4444 = vmatpush.msra.mxu0 %v4249
      %4445 = vmatpush.msra.mxu0 %v4246
      %4446 = vmatpush.msra.mxu0 %v4243
      %4447 = vmatpush.msra.mxu0 %v4240
      %4448 = vmatpush.msra.mxu0 %v4237
      %4449 = vmatpush.msra.mxu0 %v4234
      %4450 = vmatpush.msra.mxu0 %v4231
      %4451 = vmatpush.msra.mxu0 %v4228
      %4452 = vmatpush.msra.mxu0 %v4225
      %4453 = vmatpush.msra.mxu0 %v4222
      %4454 = vmatpush.msra.mxu0 %v4219
      %4455 = vmatpush.msra.mxu0 %v4216
      %4456 = vmatpush.msra.mxu0 %v4213
      %4457 = vmatpush.msra.mxu0 %v4210
      %4458 = vmatpush.msra.mxu0 %v4207
      %4459 = vmatpush.msra.mxu0 %v4204
      %4460 = vmatmul.f32.gmra.mxu0 %v4423
      %v4461 = vpop.f32.mrf.mxu0
      %v4462 = vadd.f32 %v4442, %v4461
      %4463 = vdwg.mxu0
      %v4464 = vmul.f32 %v4462, 0.00390625
      %v4465 = vld [vmem:[%s25] sm:$0x1]
      %v4466 = vadd.f32 %v4464, %v4465
      %vm4467 = vcmask 516096
      %4468 = vst.msk [vmem:[%s853] sm:$0x1] %vm4467, %v3046
      %v4471 = vrot.slane %v4423, 7
      %v4472 = vsel %vm1028, %v4422, %v4471
      %v4474 = vlaneseq
      %vm4475 = vcmp.ge.s32.totalorder %v4474, 0
      %vm4476 = vcmp.lt.s32.totalorder %v4474, 256
      %vm4477 = vmand %vm4475, %vm4476
      %4478 = vst.msk [vmem:[%s857] sm:$0x3] %vm4477, %v4472
      %4480 = vrot.lane.b32.xlu0 %v4466, 64
      %v4481 = vpop.permute.xlu0 %4480
      %v4483 = vsel %vm1812, %v3046, %v4481
      %vm4484 = vcmask 778240
      %4485 = vst.msk [vmem:[%s860] sm:$0x1] %vm4484, %v4483
      %p4486 = scmp.lt.s32.totalorder %s40, 2
      %s4487 = scalar_select %p4486, %s40, 2
      %s4488 = scalar_lea.vmem %s26, %s4487
      %p4489 = scmp.lt.s32.totalorder %s40, 2
      %s4490 = scalar_select %p4489, %s40, 2
      %s4491 = smul.addr %s4490, 2
      %s4492 = scalar_lea.vmem %s27, %s4491
      %p4493 = scmp.lt.s32.totalorder %s40, 2
      %s4494 = scalar_select %p4493, %s40, 2
      %s4495 = scalar_lea.vmem %s28, %s4494
      // Predicated region
      $region125: #{_lambda_.1} parent=123 // pred_check
        %p4496 = pneg %p609
      $region126: #{_lambda_.1} parent=123 // pred_check_branch
        %4498 = sbr.rel (%p4496) target = $region128
      $region127: #{_lambda_.1} parent=123 // pred_region
        _
      $region128: #{_lambda_.1} parent=123 // pred_fallthru
        _
      // Predicated region
      $region129: #{_lambda_.1} parent=123 // pred_check
        %p4499 = pneg %p635
      $region130: #{_lambda_.1} parent=123 // pred_check_branch
        %4501 = sbr.rel (%p4499) target = $region132
      $region131: #{_lambda_.1} parent=123 // pred_region
        _
      $region132: #{_lambda_.1} parent=123 // pred_fallthru
        _
      // Predicated region
      $region133: #{_lambda_.1} parent=123 // pred_check
        %p4502 = pneg %p661
      $region134: #{_lambda_.1} parent=123 // pred_check_branch
        %4504 = sbr.rel (%p4502) target = $region136
      $region135: #{_lambda_.1} parent=123 // pred_region
        _
      $region136: #{_lambda_.1} parent=123 // pred_fallthru
        _
    $region124: #{_lambda_.1} parent=5 // pred_fallthru
      _
    %p4505 = scmp.le.s32.totalorder 2, %s35
    // Predicated region
    $region137: #{_lambda_.1} parent=5 // pred_check
      %p4506 = pneg %p4505
    $region138: #{_lambda_.1} parent=5 // pred_check_branch
      %4508 = sbr.rel (%p4506) target = $region140
    $region139: #{_lambda_.1} parent=5 // pred_region
      %s4509 = ssub.s32 %s35, 2
      // Predicated region
      $region141: #{_lambda_.1} parent=139 // pred_check
        %p4510 = pneg %p615
      $region142: #{_lambda_.1} parent=139 // pred_check_branch
        %4512 = sbr.rel (%p4510) target = $region144
      $region143: #{_lambda_.1} parent=139 // pred_region
        %p4513 = scmp.lt.s32.totalorder %s41, 2
        %s4514 = scalar_select %p4513, %s41, 2
        %s4515 = scalar_lea.vmem %s26, %s4514
      $region144: #{_lambda_.1} parent=139 // pred_fallthru
        _
      // Predicated region
      $region145: #{_lambda_.1} parent=139 // pred_check
        %p4516 = pneg %p641
      $region146: #{_lambda_.1} parent=139 // pred_check_branch
        %4518 = sbr.rel (%p4516) target = $region148
      $region147: #{_lambda_.1} parent=139 // pred_region
        %p4519 = scmp.lt.s32.totalorder %s41, 2
        %s4520 = scalar_select %p4519, %s41, 2
        %s4521 = smul.addr %s4520, 2
        %s4522 = scalar_lea.vmem %s27, %s4521
      $region148: #{_lambda_.1} parent=139 // pred_fallthru
        _
      // Predicated region
      $region149: #{_lambda_.1} parent=139 // pred_check
        %p4523 = pneg %p667
      $region150: #{_lambda_.1} parent=139 // pred_check_branch
        %4525 = sbr.rel (%p4523) target = $region152
      $region151: #{_lambda_.1} parent=139 // pred_region
        %p4526 = scmp.lt.s32.totalorder %s41, 2
        %s4527 = scalar_select %p4526, %s41, 2
        %s4528 = scalar_lea.vmem %s28, %s4527
      $region152: #{_lambda_.1} parent=139 // pred_fallthru
        _
    $region140: #{_lambda_.1} parent=5 // pred_fallthru
      _
  $region6: #{_lambda_.1} parent=0 // loop_footer
    %s39 = sadd.s32 1, %s35
  $region7: #{_lambda_.1} parent=0 // loop_footer_branch
    %34 = sbr.rel target = $region3
  $region8: #{_lambda_.1} parent=0 // loop_exit
    _

</llo_original>
